<compile_context>
chip_gen: v5e
topology: v5e:2x2
jax: 0.10.0
libtpu: 0.0.40
codegen_flags: <defaults>
</compile_context>

<pallas_src>
import jax
import jax.numpy as jnp
from jax.experimental import pallas as pl
from jax.experimental.pallas import tpu as pltpu


def lstm_recurrence_kernel(gx_ref, whh_ref, h_out_ref, h_sc, c_sc):
    """One time-chunk of the LSTM recurrence.

    gx_ref   : (tc, B, 4H) f32  — precomputed x @ W_ih^T + (b_ih + b_hh).
    whh_ref  : (H, 4H)     bf16 — recurrent weight (PyTorch W_hh transposed).
    h_out_ref: (B, H)      f32  — final hidden state h_T (written on last step).
    h_sc,c_sc: (B, H)      f32  — VMEM scratch carrying state across grid steps.
    """
    tc, B, G = gx_ref.shape
    H = G // 4

    @pl.when(pl.program_id(0) == 0)
    def _init():
        h_sc[...] = jnp.zeros_like(h_sc)
        c_sc[...] = jnp.zeros_like(c_sc)

    w_hh = whh_ref[...]  # constant index_map -> loaded once, resident in VMEM

    def step(t, carry):
        h, c = carry
        # Single small recurrent matmul on the serial path: bf16 MXU, f32 acc.
        gates = gx_ref[t] + jnp.dot(h.astype(w_hh.dtype), w_hh,
                                    preferred_element_type=jnp.float32)
        # PyTorch gate order: input, forget, cell(g), output — lane-aligned
        # slices because H is a multiple of 128.
        i_g = jax.nn.sigmoid(gates[:, 0 * H:1 * H])
        f_g = jax.nn.sigmoid(gates[:, 1 * H:2 * H])
        g_g = jnp.tanh(gates[:, 2 * H:3 * H])
        o_g = jax.nn.sigmoid(gates[:, 3 * H:4 * H])
        c_new = f_g * c + i_g * g_g
        h_new = o_g * jnp.tanh(c_new)
        return h_new, c_new

    # Short fixed trip-count -> unrolled for LLO scheduler visibility.
    h, c = jax.lax.fori_loop(0, tc, step, (h_sc[...], c_sc[...]), unroll=True)
    h_sc[...] = h
    c_sc[...] = c

    @pl.when(pl.program_id(0) == pl.num_programs(0) - 1)
    def _finalize():
        h_out_ref[...] = h_sc[...]


def _pick_time_chunk(T):
    # Largest chunk (<= 32, to keep the unrolled body small) dividing T.
    for c in (32, 16, 8, 4, 2, 1):
        if T % c == 0:
            return c
    return 1


def rnn_forward(x_ids, params):
    """x_ids: (B, T) int32 token ids. Returns (1, B, 1) f32 (matches torch)."""
    emb = params["embed"]                        # (V, E) f32, row 0 (pad) = 0
    # Gather directly TIME-MAJOR: (T, B, E). No extra (B,T,E) transpose copy.
    x_tbe = jnp.take(emb, x_ids.T, axis=0)
    T, B, E = x_tbe.shape
    H = params["whh_T"].shape[0]

    # Hoisted input projection: one MXU-friendly (T*B, E) x (E, 4H) GEMM,
    # bf16 inputs / f32 accumulation, bias folded in here (not re-broadcast
    # per timestep inside the serial recurrence).
    x_flat = x_tbe.reshape(T * B, E).astype(jnp.bfloat16)
    gates_x = (jnp.dot(x_flat, params["wih_T"],
                       preferred_element_type=jnp.float32)
               + params["bias"]).reshape(T, B, 4 * H)

    tc = _pick_time_chunk(T)
    num_chunks = T // tc

    h_final = pl.pallas_call(
        lstm_recurrence_kernel,
        out_shape=jax.ShapeDtypeStruct((B, H), jnp.float32),
        grid_spec=pltpu.PrefetchScalarGridSpec(
            num_scalar_prefetch=0,
            grid=(num_chunks,),
            in_specs=[
                # Stream gate inputs one time-chunk at a time (double-buffered).
                pl.BlockSpec((tc, B, 4 * H), lambda t: (t, 0, 0)),
                # Recurrent weight: constant block index -> fetched once.
                pl.BlockSpec((H, 4 * H), lambda t: (0, 0)),
            ],
            # Output block index constant across the (sequential) time axis.
            out_specs=pl.BlockSpec((B, H), lambda t: (0, 0)),
            scratch_shapes=[
                pltpu.VMEM((B, H), jnp.float32),   # h state
                pltpu.VMEM((B, H), jnp.float32),   # c state
            ],
        ),
        compiler_params=pltpu.CompilerParams(
            dimension_semantics=("arbitrary",),
        ),
    )(gates_x, params["whh_T"])

    # torch: h_t is (1, B, H); lin(h_t) + sigmoid -> (1, B, 1).
    # Tiny (H, 1) linear stays in XLA so the kernel output remains lane-dense.
    logits = jnp.dot(h_final, params["wlin_T"]) + params["blin"]
    return jax.nn.sigmoid(logits).reshape(1, B, 1)


def init_params(key, vocab_size, embed_size, hid_size):
    k_emb, k_wih, k_whh, k_bih, k_bhh, k_wl, k_bl = jax.random.split(key, 7)
    scale = 0.1
    embed = scale * jax.random.normal(k_emb, (vocab_size, embed_size),
                                      jnp.float32)
    embed = embed.at[0].set(0.0)                        # padding_idx=0
    w_ih = scale * jax.random.normal(k_wih, (4 * hid_size, embed_size),
                                     jnp.float32)       # torch layout (4H, E)
    w_hh = scale * jax.random.normal(k_whh, (4 * hid_size, hid_size),
                                     jnp.float32)       # torch layout (4H, H)
    b_ih = scale * jax.random.normal(k_bih, (4 * hid_size,), jnp.float32)
    b_hh = scale * jax.random.normal(k_bhh, (4 * hid_size,), jnp.float32)
    w_lin = scale * jax.random.normal(k_wl, (1, hid_size), jnp.float32)
    b_lin = scale * jax.random.normal(k_bl, (1,), jnp.float32)
    return {
        "embed": embed,                                 # f32 (gather source)
        "wih_T": w_ih.T.astype(jnp.bfloat16),           # (E, 4H)  MXU input
        "whh_T": w_hh.T.astype(jnp.bfloat16),           # (H, 4H)  MXU input
        "bias": (b_ih + b_hh).reshape(1, 4 * hid_size), # f32, folded into GEMM
        "wlin_T": w_lin.T,                              # (H, 1)   f32
        "blin": b_lin.reshape(1, 1),                    # (1, 1)   f32
    }


if __name__ == "__main__":
    # Small shapes consistent with the module; hid_size matches the module's
    # default (256, a multiple of 128 so gate slices are lane-aligned).
    vocab_size, embed_size, batch, seq, hid = 50, 64, 8, 8, 256
    key = jax.random.PRNGKey(0)
    k_params, k_ids = jax.random.split(key)
    params = init_params(k_params, vocab_size, embed_size, hid)
    x_ids = jax.random.randint(k_ids, (batch, seq), 0, vocab_size,
                               dtype=jnp.int32)

    fwd = jax.jit(rnn_forward)
    out = jax.block_until_ready(fwd(x_ids, params))
    assert out.shape == (1, batch, 1)
    assert bool(jnp.all((out >= 0.0) & (out <= 1.0)))
    print("KERNEL_OK")
</pallas_src>

<mosaic_0001>
module attributes {stable_mosaic.version = 11 : i64} {
  func.func @lstm_recurrence_kernel(%arg0: i32, %arg1: memref<8x8x1024xf32, #tpu.memory_space<vmem>>, %arg2: memref<256x1024xbf16, #tpu.memory_space<vmem>>, %arg3: memref<8x256xf32, #tpu.memory_space<vmem>>, %arg4: memref<8x256xf32, #tpu.memory_space<vmem>>, %arg5: memref<8x256xf32, #tpu.memory_space<vmem>>) attributes {dimension_semantics = [#tpu.dimension_semantics<arbitrary>], iteration_bounds = array<i64: 1>, scalar_prefetch = 0 : i64, scratch_operands = 2 : i64, tpu.core_type = #tpu.core_type<tc>, window_params = [{transform_indices = @transform_0, window_bounds = array<i64: 8, 8, 1024>}, {pipeline_mode = #tpu.pipeline_mode<synchronous>, transform_indices = @transform_1, window_bounds = array<i64: 256, 1024>}, {pipeline_mode = #tpu.pipeline_mode<synchronous>, transform_indices = @transform_2, window_bounds = array<i64: 8, 256>}]} {
    %c0_i32 = arith.constant 0 : i32
    %0 = arith.cmpi eq, %arg0, %c0_i32 : i32
    %1 = arith.extui %0 : i1 to i32
    %c0_i32_0 = arith.constant 0 : i32
    %2 = arith.cmpi ne, %1, %c0_i32_0 : i32
    scf.if %2 {
      %cst_60 = arith.constant 0.000000e+00 : f32
      %259 = vector.broadcast %cst_60 : f32 to vector<8x256xf32>
      %c0_61 = arith.constant 0 : index
      %c0_62 = arith.constant 0 : index
      %260 = vector.load %arg4[%c0_61, %c0_62] : memref<8x256xf32, #tpu.memory_space<vmem>>, vector<8x256xf32>
      tpu.vector_store %arg4[%c0_61, %c0_62], %259 {strides = array<i32>} : memref<8x256xf32, #tpu.memory_space<vmem>>, vector<8x256xf32>,
      %cst_63 = arith.constant 0.000000e+00 : f32
      %261 = vector.broadcast %cst_63 : f32 to vector<8x256xf32>
      %c0_64 = arith.constant 0 : index
      %c0_65 = arith.constant 0 : index
      %262 = vector.load %arg5[%c0_64, %c0_65] : memref<8x256xf32, #tpu.memory_space<vmem>>, vector<8x256xf32>
      tpu.vector_store %arg5[%c0_64, %c0_65], %261 {strides = array<i32>} : memref<8x256xf32, #tpu.memory_space<vmem>>, vector<8x256xf32>,
    } else {
    }
    %c0 = arith.constant 0 : index
    %c0_1 = arith.constant 0 : index
    %3 = vector.load %arg2[%c0, %c0_1] : memref<256x1024xbf16, #tpu.memory_space<vmem>>, vector<256x1024xbf16>
    %c0_2 = arith.constant 0 : index
    %c0_3 = arith.constant 0 : index
    %4 = vector.load %arg4[%c0_2, %c0_3] : memref<8x256xf32, #tpu.memory_space<vmem>>, vector<8x256xf32>
    %c0_4 = arith.constant 0 : index
    %c0_5 = arith.constant 0 : index
    %5 = vector.load %arg5[%c0_4, %c0_5] : memref<8x256xf32, #tpu.memory_space<vmem>>, vector<8x256xf32>
    %c0_i32_6 = arith.constant 0 : i32
    %6 = arith.index_cast %c0_i32_6 : i32 to index
    %c0_7 = arith.constant 0 : index
    %c0_8 = arith.constant 0 : index
    %7 = vector.load %arg1[%6, %c0_7, %c0_8] : memref<8x8x1024xf32, #tpu.memory_space<vmem>>, vector<1x8x1024xf32>
    %8 = vector.shape_cast %7 : vector<1x8x1024xf32> to vector<8x1024xf32>
    %9 = arith.truncf %4 : vector<8x256xf32> to vector<8x256xbf16>
    %cst = arith.constant dense<0.000000e+00> : vector<8x1024xf32>
    %10 = tpu.matmul %9, %3, %cst {dimension_numbers = #tpu.dot_dimension_numbers<[1], [0], [0], [1], [0, 0, 1, 1], [], []>} : vector<8x256xbf16>, vector<256x1024xbf16>, vector<8x1024xf32> -> vector<8x1024xf32>
    %11 = arith.addf %8, %10 : vector<8x1024xf32>
    %12 = vector.extract_strided_slice %11 {offsets = [0, 0], sizes = [8, 256], strides = [1, 1]} : vector<8x1024xf32> to vector<8x256xf32>
    %13 = arith.negf %12 : vector<8x256xf32>
    %14 = math.exp %13 : vector<8x256xf32>
    %cst_9 = arith.constant 1.000000e+00 : f32
    %15 = vector.broadcast %cst_9 : f32 to vector<8x256xf32>
    %16 = arith.addf %15, %14 : vector<8x256xf32>
    %17 = arith.divf %15, %16 : vector<8x256xf32>
    %18 = vector.extract_strided_slice %11 {offsets = [0, 256], sizes = [8, 256], strides = [1, 1]} : vector<8x1024xf32> to vector<8x256xf32>
    %19 = arith.negf %18 : vector<8x256xf32>
    %20 = math.exp %19 : vector<8x256xf32>
    %cst_10 = arith.constant 1.000000e+00 : f32
    %21 = vector.broadcast %cst_10 : f32 to vector<8x256xf32>
    %22 = arith.addf %21, %20 : vector<8x256xf32>
    %23 = arith.divf %21, %22 : vector<8x256xf32>
    %24 = vector.extract_strided_slice %11 {offsets = [0, 512], sizes = [8, 256], strides = [1, 1]} : vector<8x1024xf32> to vector<8x256xf32>
    %25 = math.tanh %24 : vector<8x256xf32>
    %26 = vector.extract_strided_slice %11 {offsets = [0, 768], sizes = [8, 256], strides = [1, 1]} : vector<8x1024xf32> to vector<8x256xf32>
    %27 = arith.negf %26 : vector<8x256xf32>
    %28 = math.exp %27 : vector<8x256xf32>
    %cst_11 = arith.constant 1.000000e+00 : f32
    %29 = vector.broadcast %cst_11 : f32 to vector<8x256xf32>
    %30 = arith.addf %29, %28 : vector<8x256xf32>
    %31 = arith.divf %29, %30 : vector<8x256xf32>
    %32 = arith.mulf %23, %5 : vector<8x256xf32>
    %33 = arith.mulf %17, %25 : vector<8x256xf32>
    %34 = arith.addf %32, %33 : vector<8x256xf32>
    %35 = math.tanh %34 : vector<8x256xf32>
    %36 = arith.mulf %31, %35 : vector<8x256xf32>
    %c1_i32 = arith.constant 1 : i32
    %37 = arith.index_cast %c1_i32 : i32 to index
    %c0_12 = arith.constant 0 : index
    %c0_13 = arith.constant 0 : index
    %38 = vector.load %arg1[%37, %c0_12, %c0_13] : memref<8x8x1024xf32, #tpu.memory_space<vmem>>, vector<1x8x1024xf32>
    %39 = vector.shape_cast %38 : vector<1x8x1024xf32> to vector<8x1024xf32>
    %40 = arith.truncf %36 : vector<8x256xf32> to vector<8x256xbf16>
    %cst_14 = arith.constant dense<0.000000e+00> : vector<8x1024xf32>
    %41 = tpu.matmul %40, %3, %cst_14 {dimension_numbers = #tpu.dot_dimension_numbers<[1], [0], [0], [1], [0, 0, 1, 1], [], []>} : vector<8x256xbf16>, vector<256x1024xbf16>, vector<8x1024xf32> -> vector<8x1024xf32>
    %42 = arith.addf %39, %41 : vector<8x1024xf32>
    %43 = vector.extract_strided_slice %42 {offsets = [0, 0], sizes = [8, 256], strides = [1, 1]} : vector<8x1024xf32> to vector<8x256xf32>
    %44 = arith.negf %43 : vector<8x256xf32>
    %45 = math.exp %44 : vector<8x256xf32>
    %cst_15 = arith.constant 1.000000e+00 : f32
    %46 = vector.broadcast %cst_15 : f32 to vector<8x256xf32>
    %47 = arith.addf %46, %45 : vector<8x256xf32>
    %48 = arith.divf %46, %47 : vector<8x256xf32>
    %49 = vector.extract_strided_slice %42 {offsets = [0, 256], sizes = [8, 256], strides = [1, 1]} : vector<8x1024xf32> to vector<8x256xf32>
    %50 = arith.negf %49 : vector<8x256xf32>
    %51 = math.exp %50 : vector<8x256xf32>
    %cst_16 = arith.constant 1.000000e+00 : f32
    %52 = vector.broadcast %cst_16 : f32 to vector<8x256xf32>
    %53 = arith.addf %52, %51 : vector<8x256xf32>
    %54 = arith.divf %52, %53 : vector<8x256xf32>
    %55 = vector.extract_strided_slice %42 {offsets = [0, 512], sizes = [8, 256], strides = [1, 1]} : vector<8x1024xf32> to vector<8x256xf32>
    %56 = math.tanh %55 : vector<8x256xf32>
    %57 = vector.extract_strided_slice %42 {offsets = [0, 768], sizes = [8, 256], strides = [1, 1]} : vector<8x1024xf32> to vector<8x256xf32>
    %58 = arith.negf %57 : vector<8x256xf32>
    %59 = math.exp %58 : vector<8x256xf32>
    %cst_17 = arith.constant 1.000000e+00 : f32
    %60 = vector.broadcast %cst_17 : f32 to vector<8x256xf32>
    %61 = arith.addf %60, %59 : vector<8x256xf32>
    %62 = arith.divf %60, %61 : vector<8x256xf32>
    %63 = arith.mulf %54, %34 : vector<8x256xf32>
    %64 = arith.mulf %48, %56 : vector<8x256xf32>
    %65 = arith.addf %63, %64 : vector<8x256xf32>
    %66 = math.tanh %65 : vector<8x256xf32>
    %67 = arith.mulf %62, %66 : vector<8x256xf32>
    %c2_i32 = arith.constant 2 : i32
    %68 = arith.index_cast %c2_i32 : i32 to index
    %c0_18 = arith.constant 0 : index
    %c0_19 = arith.constant 0 : index
    %69 = vector.load %arg1[%68, %c0_18, %c0_19] : memref<8x8x1024xf32, #tpu.memory_space<vmem>>, vector<1x8x1024xf32>
    %70 = vector.shape_cast %69 : vector<1x8x1024xf32> to vector<8x1024xf32>
    %71 = arith.truncf %67 : vector<8x256xf32> to vector<8x256xbf16>
    %cst_20 = arith.constant dense<0.000000e+00> : vector<8x1024xf32>
    %72 = tpu.matmul %71, %3, %cst_20 {dimension_numbers = #tpu.dot_dimension_numbers<[1], [0], [0], [1], [0, 0, 1, 1], [], []>} : vector<8x256xbf16>, vector<256x1024xbf16>, vector<8x1024xf32> -> vector<8x1024xf32>
    %73 = arith.addf %70, %72 : vector<8x1024xf32>
    %74 = vector.extract_strided_slice %73 {offsets = [0, 0], sizes = [8, 256], strides = [1, 1]} : vector<8x1024xf32> to vector<8x256xf32>
    %75 = arith.negf %74 : vector<8x256xf32>
    %76 = math.exp %75 : vector<8x256xf32>
    %cst_21 = arith.constant 1.000000e+00 : f32
    %77 = vector.broadcast %cst_21 : f32 to vector<8x256xf32>
    %78 = arith.addf %77, %76 : vector<8x256xf32>
    %79 = arith.divf %77, %78 : vector<8x256xf32>
    %80 = vector.extract_strided_slice %73 {offsets = [0, 256], sizes = [8, 256], strides = [1, 1]} : vector<8x1024xf32> to vector<8x256xf32>
    %81 = arith.negf %80 : vector<8x256xf32>
    %82 = math.exp %81 : vector<8x256xf32>
    %cst_22 = arith.constant 1.000000e+00 : f32
    %83 = vector.broadcast %cst_22 : f32 to vector<8x256xf32>
    %84 = arith.addf %83, %82 : vector<8x256xf32>
    %85 = arith.divf %83, %84 : vector<8x256xf32>
    %86 = vector.extract_strided_slice %73 {offsets = [0, 512], sizes = [8, 256], strides = [1, 1]} : vector<8x1024xf32> to vector<8x256xf32>
    %87 = math.tanh %86 : vector<8x256xf32>
    %88 = vector.extract_strided_slice %73 {offsets = [0, 768], sizes = [8, 256], strides = [1, 1]} : vector<8x1024xf32> to vector<8x256xf32>
    %89 = arith.negf %88 : vector<8x256xf32>
    %90 = math.exp %89 : vector<8x256xf32>
    %cst_23 = arith.constant 1.000000e+00 : f32
    %91 = vector.broadcast %cst_23 : f32 to vector<8x256xf32>
    %92 = arith.addf %91, %90 : vector<8x256xf32>
    %93 = arith.divf %91, %92 : vector<8x256xf32>
    %94 = arith.mulf %85, %65 : vector<8x256xf32>
    %95 = arith.mulf %79, %87 : vector<8x256xf32>
    %96 = arith.addf %94, %95 : vector<8x256xf32>
    %97 = math.tanh %96 : vector<8x256xf32>
    %98 = arith.mulf %93, %97 : vector<8x256xf32>
    %c3_i32 = arith.constant 3 : i32
    %99 = arith.index_cast %c3_i32 : i32 to index
    %c0_24 = arith.constant 0 : index
    %c0_25 = arith.constant 0 : index
    %100 = vector.load %arg1[%99, %c0_24, %c0_25] : memref<8x8x1024xf32, #tpu.memory_space<vmem>>, vector<1x8x1024xf32>
    %101 = vector.shape_cast %100 : vector<1x8x1024xf32> to vector<8x1024xf32>
    %102 = arith.truncf %98 : vector<8x256xf32> to vector<8x256xbf16>
    %cst_26 = arith.constant dense<0.000000e+00> : vector<8x1024xf32>
    %103 = tpu.matmul %102, %3, %cst_26 {dimension_numbers = #tpu.dot_dimension_numbers<[1], [0], [0], [1], [0, 0, 1, 1], [], []>} : vector<8x256xbf16>, vector<256x1024xbf16>, vector<8x1024xf32> -> vector<8x1024xf32>
    %104 = arith.addf %101, %103 : vector<8x1024xf32>
    %105 = vector.extract_strided_slice %104 {offsets = [0, 0], sizes = [8, 256], strides = [1, 1]} : vector<8x1024xf32> to vector<8x256xf32>
    %106 = arith.negf %105 : vector<8x256xf32>
    %107 = math.exp %106 : vector<8x256xf32>
    %cst_27 = arith.constant 1.000000e+00 : f32
    %108 = vector.broadcast %cst_27 : f32 to vector<8x256xf32>
    %109 = arith.addf %108, %107 : vector<8x256xf32>
    %110 = arith.divf %108, %109 : vector<8x256xf32>
    %111 = vector.extract_strided_slice %104 {offsets = [0, 256], sizes = [8, 256], strides = [1, 1]} : vector<8x1024xf32> to vector<8x256xf32>
    %112 = arith.negf %111 : vector<8x256xf32>
    %113 = math.exp %112 : vector<8x256xf32>
    %cst_28 = arith.constant 1.000000e+00 : f32
    %114 = vector.broadcast %cst_28 : f32 to vector<8x256xf32>
    %115 = arith.addf %114, %113 : vector<8x256xf32>
    %116 = arith.divf %114, %115 : vector<8x256xf32>
    %117 = vector.extract_strided_slice %104 {offsets = [0, 512], sizes = [8, 256], strides = [1, 1]} : vector<8x1024xf32> to vector<8x256xf32>
    %118 = math.tanh %117 : vector<8x256xf32>
    %119 = vector.extract_strided_slice %104 {offsets = [0, 768], sizes = [8, 256], strides = [1, 1]} : vector<8x1024xf32> to vector<8x256xf32>
    %120 = arith.negf %119 : vector<8x256xf32>
    %121 = math.exp %120 : vector<8x256xf32>
    %cst_29 = arith.constant 1.000000e+00 : f32
    %122 = vector.broadcast %cst_29 : f32 to vector<8x256xf32>
    %123 = arith.addf %122, %121 : vector<8x256xf32>
    %124 = arith.divf %122, %123 : vector<8x256xf32>
    %125 = arith.mulf %116, %96 : vector<8x256xf32>
    %126 = arith.mulf %110, %118 : vector<8x256xf32>
    %127 = arith.addf %125, %126 : vector<8x256xf32>
    %128 = math.tanh %127 : vector<8x256xf32>
    %129 = arith.mulf %124, %128 : vector<8x256xf32>
    %c4_i32 = arith.constant 4 : i32
    %130 = arith.index_cast %c4_i32 : i32 to index
    %c0_30 = arith.constant 0 : index
    %c0_31 = arith.constant 0 : index
    %131 = vector.load %arg1[%130, %c0_30, %c0_31] : memref<8x8x1024xf32, #tpu.memory_space<vmem>>, vector<1x8x1024xf32>
    %132 = vector.shape_cast %131 : vector<1x8x1024xf32> to vector<8x1024xf32>
    %133 = arith.truncf %129 : vector<8x256xf32> to vector<8x256xbf16>
    %cst_32 = arith.constant dense<0.000000e+00> : vector<8x1024xf32>
    %134 = tpu.matmul %133, %3, %cst_32 {dimension_numbers = #tpu.dot_dimension_numbers<[1], [0], [0], [1], [0, 0, 1, 1], [], []>} : vector<8x256xbf16>, vector<256x1024xbf16>, vector<8x1024xf32> -> vector<8x1024xf32>
    %135 = arith.addf %132, %134 : vector<8x1024xf32>
    %136 = vector.extract_strided_slice %135 {offsets = [0, 0], sizes = [8, 256], strides = [1, 1]} : vector<8x1024xf32> to vector<8x256xf32>
    %137 = arith.negf %136 : vector<8x256xf32>
    %138 = math.exp %137 : vector<8x256xf32>
    %cst_33 = arith.constant 1.000000e+00 : f32
    %139 = vector.broadcast %cst_33 : f32 to vector<8x256xf32>
    %140 = arith.addf %139, %138 : vector<8x256xf32>
    %141 = arith.divf %139, %140 : vector<8x256xf32>
    %142 = vector.extract_strided_slice %135 {offsets = [0, 256], sizes = [8, 256], strides = [1, 1]} : vector<8x1024xf32> to vector<8x256xf32>
    %143 = arith.negf %142 : vector<8x256xf32>
    %144 = math.exp %143 : vector<8x256xf32>
    %cst_34 = arith.constant 1.000000e+00 : f32
    %145 = vector.broadcast %cst_34 : f32 to vector<8x256xf32>
    %146 = arith.addf %145, %144 : vector<8x256xf32>
    %147 = arith.divf %145, %146 : vector<8x256xf32>
    %148 = vector.extract_strided_slice %135 {offsets = [0, 512], sizes = [8, 256], strides = [1, 1]} : vector<8x1024xf32> to vector<8x256xf32>
    %149 = math.tanh %148 : vector<8x256xf32>
    %150 = vector.extract_strided_slice %135 {offsets = [0, 768], sizes = [8, 256], strides = [1, 1]} : vector<8x1024xf32> to vector<8x256xf32>
    %151 = arith.negf %150 : vector<8x256xf32>
    %152 = math.exp %151 : vector<8x256xf32>
    %cst_35 = arith.constant 1.000000e+00 : f32
    %153 = vector.broadcast %cst_35 : f32 to vector<8x256xf32>
    %154 = arith.addf %153, %152 : vector<8x256xf32>
    %155 = arith.divf %153, %154 : vector<8x256xf32>
    %156 = arith.mulf %147, %127 : vector<8x256xf32>
    %157 = arith.mulf %141, %149 : vector<8x256xf32>
    %158 = arith.addf %156, %157 : vector<8x256xf32>
    %159 = math.tanh %158 : vector<8x256xf32>
    %160 = arith.mulf %155, %159 : vector<8x256xf32>
    %c5_i32 = arith.constant 5 : i32
    %161 = arith.index_cast %c5_i32 : i32 to index
    %c0_36 = arith.constant 0 : index
    %c0_37 = arith.constant 0 : index
    %162 = vector.load %arg1[%161, %c0_36, %c0_37] : memref<8x8x1024xf32, #tpu.memory_space<vmem>>, vector<1x8x1024xf32>
    %163 = vector.shape_cast %162 : vector<1x8x1024xf32> to vector<8x1024xf32>
    %164 = arith.truncf %160 : vector<8x256xf32> to vector<8x256xbf16>
    %cst_38 = arith.constant dense<0.000000e+00> : vector<8x1024xf32>
    %165 = tpu.matmul %164, %3, %cst_38 {dimension_numbers = #tpu.dot_dimension_numbers<[1], [0], [0], [1], [0, 0, 1, 1], [], []>} : vector<8x256xbf16>, vector<256x1024xbf16>, vector<8x1024xf32> -> vector<8x1024xf32>
    %166 = arith.addf %163, %165 : vector<8x1024xf32>
    %167 = vector.extract_strided_slice %166 {offsets = [0, 0], sizes = [8, 256], strides = [1, 1]} : vector<8x1024xf32> to vector<8x256xf32>
    %168 = arith.negf %167 : vector<8x256xf32>
    %169 = math.exp %168 : vector<8x256xf32>
    %cst_39 = arith.constant 1.000000e+00 : f32
    %170 = vector.broadcast %cst_39 : f32 to vector<8x256xf32>
    %171 = arith.addf %170, %169 : vector<8x256xf32>
    %172 = arith.divf %170, %171 : vector<8x256xf32>
    %173 = vector.extract_strided_slice %166 {offsets = [0, 256], sizes = [8, 256], strides = [1, 1]} : vector<8x1024xf32> to vector<8x256xf32>
    %174 = arith.negf %173 : vector<8x256xf32>
    %175 = math.exp %174 : vector<8x256xf32>
    %cst_40 = arith.constant 1.000000e+00 : f32
    %176 = vector.broadcast %cst_40 : f32 to vector<8x256xf32>
    %177 = arith.addf %176, %175 : vector<8x256xf32>
    %178 = arith.divf %176, %177 : vector<8x256xf32>
    %179 = vector.extract_strided_slice %166 {offsets = [0, 512], sizes = [8, 256], strides = [1, 1]} : vector<8x1024xf32> to vector<8x256xf32>
    %180 = math.tanh %179 : vector<8x256xf32>
    %181 = vector.extract_strided_slice %166 {offsets = [0, 768], sizes = [8, 256], strides = [1, 1]} : vector<8x1024xf32> to vector<8x256xf32>
    %182 = arith.negf %181 : vector<8x256xf32>
    %183 = math.exp %182 : vector<8x256xf32>
    %cst_41 = arith.constant 1.000000e+00 : f32
    %184 = vector.broadcast %cst_41 : f32 to vector<8x256xf32>
    %185 = arith.addf %184, %183 : vector<8x256xf32>
    %186 = arith.divf %184, %185 : vector<8x256xf32>
    %187 = arith.mulf %178, %158 : vector<8x256xf32>
    %188 = arith.mulf %172, %180 : vector<8x256xf32>
    %189 = arith.addf %187, %188 : vector<8x256xf32>
    %190 = math.tanh %189 : vector<8x256xf32>
    %191 = arith.mulf %186, %190 : vector<8x256xf32>
    %c6_i32 = arith.constant 6 : i32
    %192 = arith.index_cast %c6_i32 : i32 to index
    %c0_42 = arith.constant 0 : index
    %c0_43 = arith.constant 0 : index
    %193 = vector.load %arg1[%192, %c0_42, %c0_43] : memref<8x8x1024xf32, #tpu.memory_space<vmem>>, vector<1x8x1024xf32>
    %194 = vector.shape_cast %193 : vector<1x8x1024xf32> to vector<8x1024xf32>
    %195 = arith.truncf %191 : vector<8x256xf32> to vector<8x256xbf16>
    %cst_44 = arith.constant dense<0.000000e+00> : vector<8x1024xf32>
    %196 = tpu.matmul %195, %3, %cst_44 {dimension_numbers = #tpu.dot_dimension_numbers<[1], [0], [0], [1], [0, 0, 1, 1], [], []>} : vector<8x256xbf16>, vector<256x1024xbf16>, vector<8x1024xf32> -> vector<8x1024xf32>
    %197 = arith.addf %194, %196 : vector<8x1024xf32>
    %198 = vector.extract_strided_slice %197 {offsets = [0, 0], sizes = [8, 256], strides = [1, 1]} : vector<8x1024xf32> to vector<8x256xf32>
    %199 = arith.negf %198 : vector<8x256xf32>
    %200 = math.exp %199 : vector<8x256xf32>
    %cst_45 = arith.constant 1.000000e+00 : f32
    %201 = vector.broadcast %cst_45 : f32 to vector<8x256xf32>
    %202 = arith.addf %201, %200 : vector<8x256xf32>
    %203 = arith.divf %201, %202 : vector<8x256xf32>
    %204 = vector.extract_strided_slice %197 {offsets = [0, 256], sizes = [8, 256], strides = [1, 1]} : vector<8x1024xf32> to vector<8x256xf32>
    %205 = arith.negf %204 : vector<8x256xf32>
    %206 = math.exp %205 : vector<8x256xf32>
    %cst_46 = arith.constant 1.000000e+00 : f32
    %207 = vector.broadcast %cst_46 : f32 to vector<8x256xf32>
    %208 = arith.addf %207, %206 : vector<8x256xf32>
    %209 = arith.divf %207, %208 : vector<8x256xf32>
    %210 = vector.extract_strided_slice %197 {offsets = [0, 512], sizes = [8, 256], strides = [1, 1]} : vector<8x1024xf32> to vector<8x256xf32>
    %211 = math.tanh %210 : vector<8x256xf32>
    %212 = vector.extract_strided_slice %197 {offsets = [0, 768], sizes = [8, 256], strides = [1, 1]} : vector<8x1024xf32> to vector<8x256xf32>
    %213 = arith.negf %212 : vector<8x256xf32>
    %214 = math.exp %213 : vector<8x256xf32>
    %cst_47 = arith.constant 1.000000e+00 : f32
    %215 = vector.broadcast %cst_47 : f32 to vector<8x256xf32>
    %216 = arith.addf %215, %214 : vector<8x256xf32>
    %217 = arith.divf %215, %216 : vector<8x256xf32>
    %218 = arith.mulf %209, %189 : vector<8x256xf32>
    %219 = arith.mulf %203, %211 : vector<8x256xf32>
    %220 = arith.addf %218, %219 : vector<8x256xf32>
    %221 = math.tanh %220 : vector<8x256xf32>
    %222 = arith.mulf %217, %221 : vector<8x256xf32>
    %c7_i32 = arith.constant 7 : i32
    %223 = arith.index_cast %c7_i32 : i32 to index
    %c0_48 = arith.constant 0 : index
    %c0_49 = arith.constant 0 : index
    %224 = vector.load %arg1[%223, %c0_48, %c0_49] : memref<8x8x1024xf32, #tpu.memory_space<vmem>>, vector<1x8x1024xf32>
    %225 = vector.shape_cast %224 : vector<1x8x1024xf32> to vector<8x1024xf32>
    %226 = arith.truncf %222 : vector<8x256xf32> to vector<8x256xbf16>
    %cst_50 = arith.constant dense<0.000000e+00> : vector<8x1024xf32>
    %227 = tpu.matmul %226, %3, %cst_50 {dimension_numbers = #tpu.dot_dimension_numbers<[1], [0], [0], [1], [0, 0, 1, 1], [], []>} : vector<8x256xbf16>, vector<256x1024xbf16>, vector<8x1024xf32> -> vector<8x1024xf32>
    %228 = arith.addf %225, %227 : vector<8x1024xf32>
    %229 = vector.extract_strided_slice %228 {offsets = [0, 0], sizes = [8, 256], strides = [1, 1]} : vector<8x1024xf32> to vector<8x256xf32>
    %230 = arith.negf %229 : vector<8x256xf32>
    %231 = math.exp %230 : vector<8x256xf32>
    %cst_51 = arith.constant 1.000000e+00 : f32
    %232 = vector.broadcast %cst_51 : f32 to vector<8x256xf32>
    %233 = arith.addf %232, %231 : vector<8x256xf32>
    %234 = arith.divf %232, %233 : vector<8x256xf32>
    %235 = vector.extract_strided_slice %228 {offsets = [0, 256], sizes = [8, 256], strides = [1, 1]} : vector<8x1024xf32> to vector<8x256xf32>
    %236 = arith.negf %235 : vector<8x256xf32>
    %237 = math.exp %236 : vector<8x256xf32>
    %cst_52 = arith.constant 1.000000e+00 : f32
    %238 = vector.broadcast %cst_52 : f32 to vector<8x256xf32>
    %239 = arith.addf %238, %237 : vector<8x256xf32>
    %240 = arith.divf %238, %239 : vector<8x256xf32>
    %241 = vector.extract_strided_slice %228 {offsets = [0, 512], sizes = [8, 256], strides = [1, 1]} : vector<8x1024xf32> to vector<8x256xf32>
    %242 = math.tanh %241 : vector<8x256xf32>
    %243 = vector.extract_strided_slice %228 {offsets = [0, 768], sizes = [8, 256], strides = [1, 1]} : vector<8x1024xf32> to vector<8x256xf32>
    %244 = arith.negf %243 : vector<8x256xf32>
    %245 = math.exp %244 : vector<8x256xf32>
    %cst_53 = arith.constant 1.000000e+00 : f32
    %246 = vector.broadcast %cst_53 : f32 to vector<8x256xf32>
    %247 = arith.addf %246, %245 : vector<8x256xf32>
    %248 = arith.divf %246, %247 : vector<8x256xf32>
    %249 = arith.mulf %240, %220 : vector<8x256xf32>
    %250 = arith.mulf %234, %242 : vector<8x256xf32>
    %251 = arith.addf %249, %250 : vector<8x256xf32>
    %252 = math.tanh %251 : vector<8x256xf32>
    %253 = arith.mulf %248, %252 : vector<8x256xf32>
    %c8_i32 = arith.constant 8 : i32
    %c0_54 = arith.constant 0 : index
    %c0_55 = arith.constant 0 : index
    %254 = vector.load %arg4[%c0_54, %c0_55] : memref<8x256xf32, #tpu.memory_space<vmem>>, vector<8x256xf32>
    tpu.vector_store %arg4[%c0_54, %c0_55], %253 {strides = array<i32>} : memref<8x256xf32, #tpu.memory_space<vmem>>, vector<8x256xf32>,
    %c0_56 = arith.constant 0 : index
    %c0_57 = arith.constant 0 : index
    %255 = vector.load %arg5[%c0_56, %c0_57] : memref<8x256xf32, #tpu.memory_space<vmem>>, vector<8x256xf32>
    tpu.vector_store %arg5[%c0_56, %c0_57], %251 {strides = array<i32>} : memref<8x256xf32, #tpu.memory_space<vmem>>, vector<8x256xf32>,
    %c0_i32_58 = arith.constant 0 : i32
    %256 = arith.cmpi eq, %arg0, %c0_i32_58 : i32
    %257 = arith.extui %256 : i1 to i32
    %c0_i32_59 = arith.constant 0 : i32
    %258 = arith.cmpi ne, %257, %c0_i32_59 : i32
    scf.if %258 {
      %c0_60 = arith.constant 0 : index
      %c0_61 = arith.constant 0 : index
      %259 = vector.load %arg4[%c0_60, %c0_61] : memref<8x256xf32, #tpu.memory_space<vmem>>, vector<8x256xf32>
      %c0_62 = arith.constant 0 : index
      %c0_63 = arith.constant 0 : index
      %260 = vector.load %arg3[%c0_62, %c0_63] : memref<8x256xf32, #tpu.memory_space<vmem>>, vector<8x256xf32>
      tpu.vector_store %arg3[%c0_62, %c0_63], %259 {strides = array<i32>} : memref<8x256xf32, #tpu.memory_space<vmem>>, vector<8x256xf32>,
    } else {
    }
    return
  }
  func.func @transform_0(%arg0: i32) -> (i32, i32, i32) {
    %c0_i32 = arith.constant 0 : i32
    %c0_i32_0 = arith.constant 0 : i32
    %c0_i32_1 = arith.constant 0 : i32
    return %arg0, %c0_i32, %c0_i32_0 : i32, i32, i32
  }
  func.func @transform_1(%arg0: i32) -> (i32, i32) {
    %c0_i32 = arith.constant 0 : i32
    %c0_i32_0 = arith.constant 0 : i32
    %c0_i32_1 = arith.constant 0 : i32
    return %c0_i32, %c0_i32_0 : i32, i32
  }
  func.func @transform_2(%arg0: i32) -> (i32, i32) {
    %c0_i32 = arith.constant 0 : i32
    %c0_i32_0 = arith.constant 0 : i32
    %c0_i32_1 = arith.constant 0 : i32
    return %c0_i32, %c0_i32_0 : i32, i32
  }
}

</mosaic_0001>

<llo_original>
// kernel: rnn_forward.1
$region0: #{rnn_forward.1}
  #allocation0 [shape = 'u32[]', space=smem, size = 0x4, offset = 0x4, fixed_abs, tag = 'smem constant byte address 0x4 - core index']
  #allocation1 [shape = 'u32[72,128]{1,0:T(1,128)}', space=vmem, size = 0x9000, scoped, tag = 'internal scratch']
  #allocation2 [shape = 'f32[8,256]{1,0:T(8,128)}', space=vmem, size = 0x2000, scoped, tag = 'scratch operand']
  #allocation3 [shape = 'f32[8,256]{1,0:T(8,128)}', space=vmem, size = 0x2000, scoped, tag = 'scratch operand']
  %s0 = inlined_call_operand.vmem [shape: f32[8,8,1024], index: 0, kind: input, shape index: {}]
  %s1 = inlined_call_operand.hbm [shape: bf16[256,1024], index: 1, kind: input, shape index: {}]
  %s2 = inlined_call_operand.vmem [shape: f32[8,256], index: 2, kind: output, shape index: {}]
  %s3 = sld [smem:[#allocation0]]
  $region30: #{rnn_forward.1} parent=0
    _
  %s5 = ssub.s32 1, %s3
  %s6 = scalar_select 0, %s5, %s3
  $region1: #{rnn_forward.1} parent=0
    #allocation4 [shape = 'u8[524288]{0}', space=vmem, size = 0x80000, scoped, tag = 'input window, operand 1, single buffered']
    #allocation5 [shape = 's32[1]{0}', space=sflag, size = 0x4, scoped, tag = 'scoped memory for rnn_forward.1']
    %7 = vsyncpa [#allocation5], 0
    // Predicated region
    $region2: #{rnn_forward.1} parent=1 // pred_check
      _
    $region3: #{rnn_forward.1} parent=1 // pred_check_branch
      %9 = sbr.rel (0) target = $region5
    $region4: #{rnn_forward.1} parent=1 // pred_region
      _
    $region5: #{rnn_forward.1} parent=1 // pred_fallthru
      _
    // Predicated region
    $region6: #{rnn_forward.1} parent=1 // pred_check
      _
    $region7: #{rnn_forward.1} parent=1 // pred_check_branch
      %11 = sbr.rel (0) target = $region9
    $region8: #{rnn_forward.1} parent=1 // pred_region
      %13 = vsyncadd [#allocation5], 0
      %s14 = sshll.u32 %s1, 4
      %s15 = int_to_ptr.hbm [resolvable:$true] %s14
      %s16 = sshll.u32 [#allocation4], 4
      %s17 = int_to_ptr.vmem [resolvable:$true] %s16
      %22 = dma.hbm_to_vmem [thread:$0]  %s15, 16384, %s17, [#allocation5], 512, 512, 32
    $region9: #{rnn_forward.1} parent=1 // pred_fallthru
      _
    // Predicated region
    $region10: #{rnn_forward.1} parent=1 // pred_check
      _
    $region11: #{rnn_forward.1} parent=1 // pred_check_branch
      %24 = sbr.rel (0) target = $region13
    $region12: #{rnn_forward.1} parent=1 // pred_region
      %26 = dma.done [#allocation5], 16384
    $region13: #{rnn_forward.1} parent=1 // pred_fallthru
      _
    %p27 = scmp.eq.s32.totalorder 0, 0
    // Predicated region
    $region14: #{rnn_forward.1} parent=1 // pred_check
      %p28 = pneg %p27
    $region15: #{rnn_forward.1} parent=1 // pred_check_branch
      %30 = sbr.rel (%p28) target = $region17
    $region16: #{rnn_forward.1} parent=1 // pred_region
      %31 = vst [vmem:[#allocation2] sm:$0xff] 0.0
      %32 = vst [vmem:[#allocation2 + $0x8] sm:$0xff] 0.0
      %33 = vst [vmem:[#allocation3] sm:$0xff] 0.0
      %34 = vst [vmem:[#allocation3 + $0x8] sm:$0xff] 0.0
    $region17: #{rnn_forward.1} parent=1 // pred_fallthru
      _
    %v35 = vld [vmem:[#allocation4] sm:$0xff]
    %v36 = vld [vmem:[#allocation4 + $0x8] sm:$0xff]
    %v37 = vld [vmem:[#allocation4 + $0x10] sm:$0xff]
    %v38 = vld [vmem:[#allocation4 + $0x18] sm:$0xff]
    %v39 = vld [vmem:[#allocation4 + $0x20] sm:$0xff]
    %v40 = vld [vmem:[#allocation4 + $0x28] sm:$0xff]
    %v41 = vld [vmem:[#allocation4 + $0x30] sm:$0xff]
    %v42 = vld [vmem:[#allocation4 + $0x38] sm:$0xff]
    %v43 = vld [vmem:[#allocation4 + $0x40] sm:$0xff]
    %v44 = vld [vmem:[#allocation4 + $0x48] sm:$0xff]
    %v45 = vld [vmem:[#allocation4 + $0x50] sm:$0xff]
    %v46 = vld [vmem:[#allocation4 + $0x58] sm:$0xff]
    %v47 = vld [vmem:[#allocation4 + $0x60] sm:$0xff]
    %v48 = vld [vmem:[#allocation4 + $0x68] sm:$0xff]
    %v49 = vld [vmem:[#allocation4 + $0x70] sm:$0xff]
    %v50 = vld [vmem:[#allocation4 + $0x78] sm:$0xff]
    %v51 = vld [vmem:[#allocation4 + $0x80] sm:$0xff]
    %v52 = vld [vmem:[#allocation4 + $0x88] sm:$0xff]
    %v53 = vld [vmem:[#allocation4 + $0x90] sm:$0xff]
    %v54 = vld [vmem:[#allocation4 + $0x98] sm:$0xff]
    %v55 = vld [vmem:[#allocation4 + $0xa0] sm:$0xff]
    %v56 = vld [vmem:[#allocation4 + $0xa8] sm:$0xff]
    %v57 = vld [vmem:[#allocation4 + $0xb0] sm:$0xff]
    %v58 = vld [vmem:[#allocation4 + $0xb8] sm:$0xff]
    %v59 = vld [vmem:[#allocation4 + $0xc0] sm:$0xff]
    %v60 = vld [vmem:[#allocation4 + $0xc8] sm:$0xff]
    %v61 = vld [vmem:[#allocation4 + $0xd0] sm:$0xff]
    %v62 = vld [vmem:[#allocation4 + $0xd8] sm:$0xff]
    %v63 = vld [vmem:[#allocation4 + $0xe0] sm:$0xff]
    %v64 = vld [vmem:[#allocation4 + $0xe8] sm:$0xff]
    %v65 = vld [vmem:[#allocation4 + $0xf0] sm:$0xff]
    %v66 = vld [vmem:[#allocation4 + $0xf8] sm:$0xff]
    %v67 = vld [vmem:[#allocation4 + $0x100] sm:$0xff]
    %v68 = vld [vmem:[#allocation4 + $0x108] sm:$0xff]
    %v69 = vld [vmem:[#allocation4 + $0x110] sm:$0xff]
    %v70 = vld [vmem:[#allocation4 + $0x118] sm:$0xff]
    %v71 = vld [vmem:[#allocation4 + $0x120] sm:$0xff]
    %v72 = vld [vmem:[#allocation4 + $0x128] sm:$0xff]
    %v73 = vld [vmem:[#allocation4 + $0x130] sm:$0xff]
    %v74 = vld [vmem:[#allocation4 + $0x138] sm:$0xff]
    %v75 = vld [vmem:[#allocation4 + $0x140] sm:$0xff]
    %v76 = vld [vmem:[#allocation4 + $0x148] sm:$0xff]
    %v77 = vld [vmem:[#allocation4 + $0x150] sm:$0xff]
    %v78 = vld [vmem:[#allocation4 + $0x158] sm:$0xff]
    %v79 = vld [vmem:[#allocation4 + $0x160] sm:$0xff]
    %v80 = vld [vmem:[#allocation4 + $0x168] sm:$0xff]
    %v81 = vld [vmem:[#allocation4 + $0x170] sm:$0xff]
    %v82 = vld [vmem:[#allocation4 + $0x178] sm:$0xff]
    %v83 = vld [vmem:[#allocation4 + $0x180] sm:$0xff]
    %v84 = vld [vmem:[#allocation4 + $0x188] sm:$0xff]
    %v85 = vld [vmem:[#allocation4 + $0x190] sm:$0xff]
    %v86 = vld [vmem:[#allocation4 + $0x198] sm:$0xff]
    %v87 = vld [vmem:[#allocation4 + $0x1a0] sm:$0xff]
    %v88 = vld [vmem:[#allocation4 + $0x1a8] sm:$0xff]
    %v89 = vld [vmem:[#allocation4 + $0x1b0] sm:$0xff]
    %v90 = vld [vmem:[#allocation4 + $0x1b8] sm:$0xff]
    %v91 = vld [vmem:[#allocation4 + $0x1c0] sm:$0xff]
    %v92 = vld [vmem:[#allocation4 + $0x1c8] sm:$0xff]
    %v93 = vld [vmem:[#allocation4 + $0x1d0] sm:$0xff]
    %v94 = vld [vmem:[#allocation4 + $0x1d8] sm:$0xff]
    %v95 = vld [vmem:[#allocation4 + $0x1e0] sm:$0xff]
    %v96 = vld [vmem:[#allocation4 + $0x1e8] sm:$0xff]
    %v97 = vld [vmem:[#allocation4 + $0x1f0] sm:$0xff]
    %v98 = vld [vmem:[#allocation4 + $0x1f8] sm:$0xff]
    %v99 = vld [vmem:[#allocation4 + $0x200] sm:$0xff]
    %v100 = vld [vmem:[#allocation4 + $0x208] sm:$0xff]
    %v101 = vld [vmem:[#allocation4 + $0x210] sm:$0xff]
    %v102 = vld [vmem:[#allocation4 + $0x218] sm:$0xff]
    %v103 = vld [vmem:[#allocation4 + $0x220] sm:$0xff]
    %v104 = vld [vmem:[#allocation4 + $0x228] sm:$0xff]
    %v105 = vld [vmem:[#allocation4 + $0x230] sm:$0xff]
    %v106 = vld [vmem:[#allocation4 + $0x238] sm:$0xff]
    %v107 = vld [vmem:[#allocation4 + $0x240] sm:$0xff]
    %v108 = vld [vmem:[#allocation4 + $0x248] sm:$0xff]
    %v109 = vld [vmem:[#allocation4 + $0x250] sm:$0xff]
    %v110 = vld [vmem:[#allocation4 + $0x258] sm:$0xff]
    %v111 = vld [vmem:[#allocation4 + $0x260] sm:$0xff]
    %v112 = vld [vmem:[#allocation4 + $0x268] sm:$0xff]
    %v113 = vld [vmem:[#allocation4 + $0x270] sm:$0xff]
    %v114 = vld [vmem:[#allocation4 + $0x278] sm:$0xff]
    %v115 = vld [vmem:[#allocation4 + $0x280] sm:$0xff]
    %v116 = vld [vmem:[#allocation4 + $0x288] sm:$0xff]
    %v117 = vld [vmem:[#allocation4 + $0x290] sm:$0xff]
    %v118 = vld [vmem:[#allocation4 + $0x298] sm:$0xff]
    %v119 = vld [vmem:[#allocation4 + $0x2a0] sm:$0xff]
    %v120 = vld [vmem:[#allocation4 + $0x2a8] sm:$0xff]
    %v121 = vld [vmem:[#allocation4 + $0x2b0] sm:$0xff]
    %v122 = vld [vmem:[#allocation4 + $0x2b8] sm:$0xff]
    %v123 = vld [vmem:[#allocation4 + $0x2c0] sm:$0xff]
    %v124 = vld [vmem:[#allocation4 + $0x2c8] sm:$0xff]
    %v125 = vld [vmem:[#allocation4 + $0x2d0] sm:$0xff]
    %v126 = vld [vmem:[#allocation4 + $0x2d8] sm:$0xff]
    %v127 = vld [vmem:[#allocation4 + $0x2e0] sm:$0xff]
    %v128 = vld [vmem:[#allocation4 + $0x2e8] sm:$0xff]
    %v129 = vld [vmem:[#allocation4 + $0x2f0] sm:$0xff]
    %v130 = vld [vmem:[#allocation4 + $0x2f8] sm:$0xff]
    %v131 = vld [vmem:[#allocation4 + $0x300] sm:$0xff]
    %v132 = vld [vmem:[#allocation4 + $0x308] sm:$0xff]
    %v133 = vld [vmem:[#allocation4 + $0x310] sm:$0xff]
    %v134 = vld [vmem:[#allocation4 + $0x318] sm:$0xff]
    %v135 = vld [vmem:[#allocation4 + $0x320] sm:$0xff]
    %v136 = vld [vmem:[#allocation4 + $0x328] sm:$0xff]
    %v137 = vld [vmem:[#allocation4 + $0x330] sm:$0xff]
    %v138 = vld [vmem:[#allocation4 + $0x338] sm:$0xff]
    %v139 = vld [vmem:[#allocation4 + $0x340] sm:$0xff]
    %v140 = vld [vmem:[#allocation4 + $0x348] sm:$0xff]
    %v141 = vld [vmem:[#allocation4 + $0x350] sm:$0xff]
    %v142 = vld [vmem:[#allocation4 + $0x358] sm:$0xff]
    %v143 = vld [vmem:[#allocation4 + $0x360] sm:$0xff]
    %v144 = vld [vmem:[#allocation4 + $0x368] sm:$0xff]
    %v145 = vld [vmem:[#allocation4 + $0x370] sm:$0xff]
    %v146 = vld [vmem:[#allocation4 + $0x378] sm:$0xff]
    %v147 = vld [vmem:[#allocation4 + $0x380] sm:$0xff]
    %v148 = vld [vmem:[#allocation4 + $0x388] sm:$0xff]
    %v149 = vld [vmem:[#allocation4 + $0x390] sm:$0xff]
    %v150 = vld [vmem:[#allocation4 + $0x398] sm:$0xff]
    %v151 = vld [vmem:[#allocation4 + $0x3a0] sm:$0xff]
    %v152 = vld [vmem:[#allocation4 + $0x3a8] sm:$0xff]
    %v153 = vld [vmem:[#allocation4 + $0x3b0] sm:$0xff]
    %v154 = vld [vmem:[#allocation4 + $0x3b8] sm:$0xff]
    %v155 = vld [vmem:[#allocation4 + $0x3c0] sm:$0xff]
    %v156 = vld [vmem:[#allocation4 + $0x3c8] sm:$0xff]
    %v157 = vld [vmem:[#allocation4 + $0x3d0] sm:$0xff]
    %v158 = vld [vmem:[#allocation4 + $0x3d8] sm:$0xff]
    %v159 = vld [vmem:[#allocation4 + $0x3e0] sm:$0xff]
    %v160 = vld [vmem:[#allocation4 + $0x3e8] sm:$0xff]
    %v161 = vld [vmem:[#allocation4 + $0x3f0] sm:$0xff]
    %v162 = vld [vmem:[#allocation4 + $0x3f8] sm:$0xff]
    %v163 = vld [vmem:[#allocation2] sm:$0xff]
    %v164 = vld [vmem:[#allocation2 + $0x8] sm:$0xff]
    %v165 = vld [vmem:[#allocation3] sm:$0xff]
    %v166 = vld [vmem:[#allocation3 + $0x8] sm:$0xff]
    %v167 = vld [vmem:[%s0] sm:$0xff]
    %v168 = vld [vmem:[%s0 + $0x8] sm:$0xff]
    %v169 = vld [vmem:[%s0 + $0x10] sm:$0xff]
    %v170 = vld [vmem:[%s0 + $0x18] sm:$0xff]
    %v171 = vld [vmem:[%s0 + $0x20] sm:$0xff]
    %v172 = vld [vmem:[%s0 + $0x28] sm:$0xff]
    %v173 = vld [vmem:[%s0 + $0x30] sm:$0xff]
    %v174 = vld [vmem:[%s0 + $0x38] sm:$0xff]
    %v175 = vpack.c.bf16 %v163, %v163
    %v176 = vpack.c.bf16 %v164, %v164
    %v305 = vunpack.c.l.b16 %v35
    %v306 = vunpack.c.h.b16 %v35
    %v307 = vunpack.c.l.b16 %v36
    %v308 = vunpack.c.h.b16 %v36
    %v309 = vunpack.c.l.b16 %v37
    %v310 = vunpack.c.h.b16 %v37
    %v311 = vunpack.c.l.b16 %v38
    %v312 = vunpack.c.h.b16 %v38
    %v313 = vunpack.c.l.b16 %v39
    %v314 = vunpack.c.h.b16 %v39
    %v315 = vunpack.c.l.b16 %v40
    %v316 = vunpack.c.h.b16 %v40
    %v317 = vunpack.c.l.b16 %v41
    %v318 = vunpack.c.h.b16 %v41
    %v319 = vunpack.c.l.b16 %v42
    %v320 = vunpack.c.h.b16 %v42
    %v321 = vunpack.c.l.b16 %v43
    %v322 = vunpack.c.h.b16 %v43
    %v323 = vunpack.c.l.b16 %v44
    %v324 = vunpack.c.h.b16 %v44
    %v325 = vunpack.c.l.b16 %v45
    %v326 = vunpack.c.h.b16 %v45
    %v327 = vunpack.c.l.b16 %v46
    %v328 = vunpack.c.h.b16 %v46
    %v329 = vunpack.c.l.b16 %v47
    %v330 = vunpack.c.h.b16 %v47
    %v331 = vunpack.c.l.b16 %v48
    %v332 = vunpack.c.h.b16 %v48
    %v333 = vunpack.c.l.b16 %v49
    %v334 = vunpack.c.h.b16 %v49
    %v335 = vunpack.c.l.b16 %v50
    %v336 = vunpack.c.h.b16 %v50
    %v337 = vunpack.c.l.b16 %v51
    %v338 = vunpack.c.h.b16 %v51
    %v339 = vunpack.c.l.b16 %v52
    %v340 = vunpack.c.h.b16 %v52
    %v341 = vunpack.c.l.b16 %v53
    %v342 = vunpack.c.h.b16 %v53
    %v343 = vunpack.c.l.b16 %v54
    %v344 = vunpack.c.h.b16 %v54
    %v345 = vunpack.c.l.b16 %v55
    %v346 = vunpack.c.h.b16 %v55
    %v347 = vunpack.c.l.b16 %v56
    %v348 = vunpack.c.h.b16 %v56
    %v349 = vunpack.c.l.b16 %v57
    %v350 = vunpack.c.h.b16 %v57
    %v351 = vunpack.c.l.b16 %v58
    %v352 = vunpack.c.h.b16 %v58
    %v353 = vunpack.c.l.b16 %v59
    %v354 = vunpack.c.h.b16 %v59
    %v355 = vunpack.c.l.b16 %v60
    %v356 = vunpack.c.h.b16 %v60
    %v357 = vunpack.c.l.b16 %v61
    %v358 = vunpack.c.h.b16 %v61
    %v359 = vunpack.c.l.b16 %v62
    %v360 = vunpack.c.h.b16 %v62
    %v361 = vunpack.c.l.b16 %v63
    %v362 = vunpack.c.h.b16 %v63
    %v363 = vunpack.c.l.b16 %v64
    %v364 = vunpack.c.h.b16 %v64
    %v365 = vunpack.c.l.b16 %v65
    %v366 = vunpack.c.h.b16 %v65
    %v367 = vunpack.c.l.b16 %v66
    %v368 = vunpack.c.h.b16 %v66
    %v369 = vunpack.c.l.b16 %v67
    %v370 = vunpack.c.h.b16 %v67
    %v371 = vunpack.c.l.b16 %v68
    %v372 = vunpack.c.h.b16 %v68
    %v373 = vunpack.c.l.b16 %v69
    %v374 = vunpack.c.h.b16 %v69
    %v375 = vunpack.c.l.b16 %v70
    %v376 = vunpack.c.h.b16 %v70
    %v377 = vunpack.c.l.b16 %v71
    %v378 = vunpack.c.h.b16 %v71
    %v379 = vunpack.c.l.b16 %v72
    %v380 = vunpack.c.h.b16 %v72
    %v381 = vunpack.c.l.b16 %v73
    %v382 = vunpack.c.h.b16 %v73
    %v383 = vunpack.c.l.b16 %v74
    %v384 = vunpack.c.h.b16 %v74
    %v385 = vunpack.c.l.b16 %v75
    %v386 = vunpack.c.h.b16 %v75
    %v387 = vunpack.c.l.b16 %v76
    %v388 = vunpack.c.h.b16 %v76
    %v389 = vunpack.c.l.b16 %v77
    %v390 = vunpack.c.h.b16 %v77
    %v391 = vunpack.c.l.b16 %v78
    %v392 = vunpack.c.h.b16 %v78
    %v393 = vunpack.c.l.b16 %v79
    %v394 = vunpack.c.h.b16 %v79
    %v395 = vunpack.c.l.b16 %v80
    %v396 = vunpack.c.h.b16 %v80
    %v397 = vunpack.c.l.b16 %v81
    %v398 = vunpack.c.h.b16 %v81
    %v399 = vunpack.c.l.b16 %v82
    %v400 = vunpack.c.h.b16 %v82
    %v401 = vunpack.c.l.b16 %v83
    %v402 = vunpack.c.h.b16 %v83
    %v403 = vunpack.c.l.b16 %v84
    %v404 = vunpack.c.h.b16 %v84
    %v405 = vunpack.c.l.b16 %v85
    %v406 = vunpack.c.h.b16 %v85
    %v407 = vunpack.c.l.b16 %v86
    %v408 = vunpack.c.h.b16 %v86
    %v409 = vunpack.c.l.b16 %v87
    %v410 = vunpack.c.h.b16 %v87
    %v411 = vunpack.c.l.b16 %v88
    %v412 = vunpack.c.h.b16 %v88
    %v413 = vunpack.c.l.b16 %v89
    %v414 = vunpack.c.h.b16 %v89
    %v415 = vunpack.c.l.b16 %v90
    %v416 = vunpack.c.h.b16 %v90
    %v417 = vunpack.c.l.b16 %v91
    %v418 = vunpack.c.h.b16 %v91
    %v419 = vunpack.c.l.b16 %v92
    %v420 = vunpack.c.h.b16 %v92
    %v421 = vunpack.c.l.b16 %v93
    %v422 = vunpack.c.h.b16 %v93
    %v423 = vunpack.c.l.b16 %v94
    %v424 = vunpack.c.h.b16 %v94
    %v425 = vunpack.c.l.b16 %v95
    %v426 = vunpack.c.h.b16 %v95
    %v427 = vunpack.c.l.b16 %v96
    %v428 = vunpack.c.h.b16 %v96
    %v429 = vunpack.c.l.b16 %v97
    %v430 = vunpack.c.h.b16 %v97
    %v431 = vunpack.c.l.b16 %v98
    %v432 = vunpack.c.h.b16 %v98
    %v433 = vunpack.c.l.b16 %v99
    %v434 = vunpack.c.h.b16 %v99
    %v435 = vunpack.c.l.b16 %v100
    %v436 = vunpack.c.h.b16 %v100
    %v437 = vunpack.c.l.b16 %v101
    %v438 = vunpack.c.h.b16 %v101
    %v439 = vunpack.c.l.b16 %v102
    %v440 = vunpack.c.h.b16 %v102
    %v441 = vunpack.c.l.b16 %v103
    %v442 = vunpack.c.h.b16 %v103
    %v443 = vunpack.c.l.b16 %v104
    %v444 = vunpack.c.h.b16 %v104
    %v445 = vunpack.c.l.b16 %v105
    %v446 = vunpack.c.h.b16 %v105
    %v447 = vunpack.c.l.b16 %v106
    %v448 = vunpack.c.h.b16 %v106
    %v449 = vunpack.c.l.b16 %v107
    %v450 = vunpack.c.h.b16 %v107
    %v451 = vunpack.c.l.b16 %v108
    %v452 = vunpack.c.h.b16 %v108
    %v453 = vunpack.c.l.b16 %v109
    %v454 = vunpack.c.h.b16 %v109
    %v455 = vunpack.c.l.b16 %v110
    %v456 = vunpack.c.h.b16 %v110
    %v457 = vunpack.c.l.b16 %v111
    %v458 = vunpack.c.h.b16 %v111
    %v459 = vunpack.c.l.b16 %v112
    %v460 = vunpack.c.h.b16 %v112
    %v461 = vunpack.c.l.b16 %v113
    %v462 = vunpack.c.h.b16 %v113
    %v463 = vunpack.c.l.b16 %v114
    %v464 = vunpack.c.h.b16 %v114
    %v465 = vunpack.c.l.b16 %v115
    %v466 = vunpack.c.h.b16 %v115
    %v467 = vunpack.c.l.b16 %v116
    %v468 = vunpack.c.h.b16 %v116
    %v469 = vunpack.c.l.b16 %v117
    %v470 = vunpack.c.h.b16 %v117
    %v471 = vunpack.c.l.b16 %v118
    %v472 = vunpack.c.h.b16 %v118
    %v473 = vunpack.c.l.b16 %v119
    %v474 = vunpack.c.h.b16 %v119
    %v475 = vunpack.c.l.b16 %v120
    %v476 = vunpack.c.h.b16 %v120
    %v477 = vunpack.c.l.b16 %v121
    %v478 = vunpack.c.h.b16 %v121
    %v479 = vunpack.c.l.b16 %v122
    %v480 = vunpack.c.h.b16 %v122
    %v481 = vunpack.c.l.b16 %v123
    %v482 = vunpack.c.h.b16 %v123
    %v483 = vunpack.c.l.b16 %v124
    %v484 = vunpack.c.h.b16 %v124
    %v485 = vunpack.c.l.b16 %v125
    %v486 = vunpack.c.h.b16 %v125
    %v487 = vunpack.c.l.b16 %v126
    %v488 = vunpack.c.h.b16 %v126
    %v489 = vunpack.c.l.b16 %v127
    %v490 = vunpack.c.h.b16 %v127
    %v491 = vunpack.c.l.b16 %v128
    %v492 = vunpack.c.h.b16 %v128
    %v493 = vunpack.c.l.b16 %v129
    %v494 = vunpack.c.h.b16 %v129
    %v495 = vunpack.c.l.b16 %v130
    %v496 = vunpack.c.h.b16 %v130
    %v497 = vunpack.c.l.b16 %v131
    %v498 = vunpack.c.h.b16 %v131
    %v499 = vunpack.c.l.b16 %v132
    %v500 = vunpack.c.h.b16 %v132
    %v501 = vunpack.c.l.b16 %v133
    %v502 = vunpack.c.h.b16 %v133
    %v503 = vunpack.c.l.b16 %v134
    %v504 = vunpack.c.h.b16 %v134
    %v505 = vunpack.c.l.b16 %v135
    %v506 = vunpack.c.h.b16 %v135
    %v507 = vunpack.c.l.b16 %v136
    %v508 = vunpack.c.h.b16 %v136
    %v509 = vunpack.c.l.b16 %v137
    %v510 = vunpack.c.h.b16 %v137
    %v511 = vunpack.c.l.b16 %v138
    %v512 = vunpack.c.h.b16 %v138
    %v513 = vunpack.c.l.b16 %v139
    %v514 = vunpack.c.h.b16 %v139
    %v515 = vunpack.c.l.b16 %v140
    %v516 = vunpack.c.h.b16 %v140
    %v517 = vunpack.c.l.b16 %v141
    %v518 = vunpack.c.h.b16 %v141
    %v519 = vunpack.c.l.b16 %v142
    %v520 = vunpack.c.h.b16 %v142
    %v521 = vunpack.c.l.b16 %v143
    %v522 = vunpack.c.h.b16 %v143
    %v523 = vunpack.c.l.b16 %v144
    %v524 = vunpack.c.h.b16 %v144
    %v525 = vunpack.c.l.b16 %v145
    %v526 = vunpack.c.h.b16 %v145
    %v527 = vunpack.c.l.b16 %v146
    %v528 = vunpack.c.h.b16 %v146
    %v529 = vunpack.c.l.b16 %v147
    %v530 = vunpack.c.h.b16 %v147
    %v531 = vunpack.c.l.b16 %v148
    %v532 = vunpack.c.h.b16 %v148
    %v533 = vunpack.c.l.b16 %v149
    %v534 = vunpack.c.h.b16 %v149
    %v535 = vunpack.c.l.b16 %v150
    %v536 = vunpack.c.h.b16 %v150
    %v537 = vunpack.c.l.b16 %v151
    %v538 = vunpack.c.h.b16 %v151
    %v539 = vunpack.c.l.b16 %v152
    %v540 = vunpack.c.h.b16 %v152
    %v541 = vunpack.c.l.b16 %v153
    %v542 = vunpack.c.h.b16 %v153
    %v543 = vunpack.c.l.b16 %v154
    %v544 = vunpack.c.h.b16 %v154
    %v545 = vunpack.c.l.b16 %v155
    %v546 = vunpack.c.h.b16 %v155
    %v547 = vunpack.c.l.b16 %v156
    %v548 = vunpack.c.h.b16 %v156
    %v549 = vunpack.c.l.b16 %v157
    %v550 = vunpack.c.h.b16 %v157
    %v551 = vunpack.c.l.b16 %v158
    %v552 = vunpack.c.h.b16 %v158
    %v553 = vunpack.c.l.b16 %v159
    %v554 = vunpack.c.h.b16 %v159
    %v555 = vunpack.c.l.b16 %v160
    %v556 = vunpack.c.h.b16 %v160
    %v557 = vunpack.c.l.b16 %v161
    %v558 = vunpack.c.h.b16 %v161
    %v559 = vunpack.c.l.b16 %v162
    %v560 = vunpack.c.h.b16 %v162
    %v561 = vpack.c.b16 %v313, %v305
    %v562 = vpack.c.b16 %v314, %v306
    %v563 = vpack.c.b16 %v315, %v307
    %v564 = vpack.c.b16 %v316, %v308
    %v565 = vpack.c.b16 %v317, %v309
    %v566 = vpack.c.b16 %v318, %v310
    %v567 = vpack.c.b16 %v319, %v311
    %v568 = vpack.c.b16 %v320, %v312
    %v569 = vpack.c.b16 %v329, %v321
    %v570 = vpack.c.b16 %v330, %v322
    %v571 = vpack.c.b16 %v331, %v323
    %v572 = vpack.c.b16 %v332, %v324
    %v573 = vpack.c.b16 %v333, %v325
    %v574 = vpack.c.b16 %v334, %v326
    %v575 = vpack.c.b16 %v335, %v327
    %v576 = vpack.c.b16 %v336, %v328
    %v577 = vpack.c.b16 %v345, %v337
    %v578 = vpack.c.b16 %v346, %v338
    %v579 = vpack.c.b16 %v347, %v339
    %v580 = vpack.c.b16 %v348, %v340
    %v581 = vpack.c.b16 %v349, %v341
    %v582 = vpack.c.b16 %v350, %v342
    %v583 = vpack.c.b16 %v351, %v343
    %v584 = vpack.c.b16 %v352, %v344
    %v585 = vpack.c.b16 %v361, %v353
    %v586 = vpack.c.b16 %v362, %v354
    %v587 = vpack.c.b16 %v363, %v355
    %v588 = vpack.c.b16 %v364, %v356
    %v589 = vpack.c.b16 %v365, %v357
    %v590 = vpack.c.b16 %v366, %v358
    %v591 = vpack.c.b16 %v367, %v359
    %v592 = vpack.c.b16 %v368, %v360
    %v593 = vpack.c.b16 %v377, %v369
    %v594 = vpack.c.b16 %v378, %v370
    %v595 = vpack.c.b16 %v379, %v371
    %v596 = vpack.c.b16 %v380, %v372
    %v597 = vpack.c.b16 %v381, %v373
    %v598 = vpack.c.b16 %v382, %v374
    %v599 = vpack.c.b16 %v383, %v375
    %v600 = vpack.c.b16 %v384, %v376
    %v601 = vpack.c.b16 %v393, %v385
    %v602 = vpack.c.b16 %v394, %v386
    %v603 = vpack.c.b16 %v395, %v387
    %v604 = vpack.c.b16 %v396, %v388
    %v605 = vpack.c.b16 %v397, %v389
    %v606 = vpack.c.b16 %v398, %v390
    %v607 = vpack.c.b16 %v399, %v391
    %v608 = vpack.c.b16 %v400, %v392
    %v609 = vpack.c.b16 %v409, %v401
    %v610 = vpack.c.b16 %v410, %v402
    %v611 = vpack.c.b16 %v411, %v403
    %v612 = vpack.c.b16 %v412, %v404
    %v613 = vpack.c.b16 %v413, %v405
    %v614 = vpack.c.b16 %v414, %v406
    %v615 = vpack.c.b16 %v415, %v407
    %v616 = vpack.c.b16 %v416, %v408
    %v617 = vpack.c.b16 %v425, %v417
    %v618 = vpack.c.b16 %v426, %v418
    %v619 = vpack.c.b16 %v427, %v419
    %v620 = vpack.c.b16 %v428, %v420
    %v621 = vpack.c.b16 %v429, %v421
    %v622 = vpack.c.b16 %v430, %v422
    %v623 = vpack.c.b16 %v431, %v423
    %v624 = vpack.c.b16 %v432, %v424
    %v625 = vpack.c.b16 %v441, %v433
    %v626 = vpack.c.b16 %v442, %v434
    %v627 = vpack.c.b16 %v443, %v435
    %v628 = vpack.c.b16 %v444, %v436
    %v629 = vpack.c.b16 %v445, %v437
    %v630 = vpack.c.b16 %v446, %v438
    %v631 = vpack.c.b16 %v447, %v439
    %v632 = vpack.c.b16 %v448, %v440
    %v633 = vpack.c.b16 %v457, %v449
    %v634 = vpack.c.b16 %v458, %v450
    %v635 = vpack.c.b16 %v459, %v451
    %v636 = vpack.c.b16 %v460, %v452
    %v637 = vpack.c.b16 %v461, %v453
    %v638 = vpack.c.b16 %v462, %v454
    %v639 = vpack.c.b16 %v463, %v455
    %v640 = vpack.c.b16 %v464, %v456
    %v641 = vpack.c.b16 %v473, %v465
    %v642 = vpack.c.b16 %v474, %v466
    %v643 = vpack.c.b16 %v475, %v467
    %v644 = vpack.c.b16 %v476, %v468
    %v645 = vpack.c.b16 %v477, %v469
    %v646 = vpack.c.b16 %v478, %v470
    %v647 = vpack.c.b16 %v479, %v471
    %v648 = vpack.c.b16 %v480, %v472
    %v649 = vpack.c.b16 %v489, %v481
    %v650 = vpack.c.b16 %v490, %v482
    %v651 = vpack.c.b16 %v491, %v483
    %v652 = vpack.c.b16 %v492, %v484
    %v653 = vpack.c.b16 %v493, %v485
    %v654 = vpack.c.b16 %v494, %v486
    %v655 = vpack.c.b16 %v495, %v487
    %v656 = vpack.c.b16 %v496, %v488
    %v657 = vpack.c.b16 %v505, %v497
    %v658 = vpack.c.b16 %v506, %v498
    %v659 = vpack.c.b16 %v507, %v499
    %v660 = vpack.c.b16 %v508, %v500
    %v661 = vpack.c.b16 %v509, %v501
    %v662 = vpack.c.b16 %v510, %v502
    %v663 = vpack.c.b16 %v511, %v503
    %v664 = vpack.c.b16 %v512, %v504
    %v665 = vpack.c.b16 %v521, %v513
    %v666 = vpack.c.b16 %v522, %v514
    %v667 = vpack.c.b16 %v523, %v515
    %v668 = vpack.c.b16 %v524, %v516
    %v669 = vpack.c.b16 %v525, %v517
    %v670 = vpack.c.b16 %v526, %v518
    %v671 = vpack.c.b16 %v527, %v519
    %v672 = vpack.c.b16 %v528, %v520
    %v673 = vpack.c.b16 %v537, %v529
    %v674 = vpack.c.b16 %v538, %v530
    %v675 = vpack.c.b16 %v539, %v531
    %v676 = vpack.c.b16 %v540, %v532
    %v677 = vpack.c.b16 %v541, %v533
    %v678 = vpack.c.b16 %v542, %v534
    %v679 = vpack.c.b16 %v543, %v535
    %v680 = vpack.c.b16 %v544, %v536
    %v681 = vpack.c.b16 %v553, %v545
    %v682 = vpack.c.b16 %v554, %v546
    %v683 = vpack.c.b16 %v555, %v547
    %v684 = vpack.c.b16 %v556, %v548
    %v685 = vpack.c.b16 %v557, %v549
    %v686 = vpack.c.b16 %v558, %v550
    %v687 = vpack.c.b16 %v559, %v551
    %v688 = vpack.c.b16 %v560, %v552
    %817 = vmatpush.bf16.msra.mxu0 %v617
    %818 = vmatpush.bf16.msra.mxu0 %v609
    %819 = vmatpush.bf16.msra.mxu0 %v601
    %820 = vmatpush.bf16.msra.mxu0 %v593
    %821 = vmatpush.bf16.msra.mxu0 %v585
    %822 = vmatpush.bf16.msra.mxu0 %v577
    %823 = vmatpush.bf16.msra.mxu0 %v569
    %824 = vmatpush.bf16.msra.mxu0 %v561
    %825 = vmatmul.bf16.gmra.mxu0 %v175
    %v826 = vpop.f32.mrf.mxu0
    %v827 = vadd.f32 0.0, %v826
    %v828 = vpop.f32.mrf.mxu0
    %829 = vdwg.mxu0
    %830 = vmatpush.bf16.msra.mxu0 %v681
    %831 = vmatpush.bf16.msra.mxu0 %v673
    %832 = vmatpush.bf16.msra.mxu0 %v665
    %833 = vmatpush.bf16.msra.mxu0 %v657
    %834 = vmatpush.bf16.msra.mxu0 %v649
    %835 = vmatpush.bf16.msra.mxu0 %v641
    %836 = vmatpush.bf16.msra.mxu0 %v633
    %837 = vmatpush.bf16.msra.mxu0 %v625
    %838 = vmatmul.bf16.gmra.mxu0 %v176
    %v839 = vpop.f32.mrf.mxu0
    %v840 = vadd.f32 %v827, %v839
    %v841 = vpop.f32.mrf.mxu0
    %842 = vdwg.mxu0
    %843 = vmatpush.bf16.msra.mxu0 %v618
    %844 = vmatpush.bf16.msra.mxu0 %v610
    %845 = vmatpush.bf16.msra.mxu0 %v602
    %846 = vmatpush.bf16.msra.mxu0 %v594
    %847 = vmatpush.bf16.msra.mxu0 %v586
    %848 = vmatpush.bf16.msra.mxu0 %v578
    %849 = vmatpush.bf16.msra.mxu0 %v570
    %850 = vmatpush.bf16.msra.mxu0 %v562
    %851 = vmatmul.bf16.gmra.mxu0 %v175
    %v852 = vpop.f32.mrf.mxu0
    %v853 = vadd.f32 0.0, %v852
    %v854 = vpop.f32.mrf.mxu0
    %855 = vdwg.mxu0
    %856 = vmatpush.bf16.msra.mxu0 %v682
    %857 = vmatpush.bf16.msra.mxu0 %v674
    %858 = vmatpush.bf16.msra.mxu0 %v666
    %859 = vmatpush.bf16.msra.mxu0 %v658
    %860 = vmatpush.bf16.msra.mxu0 %v650
    %861 = vmatpush.bf16.msra.mxu0 %v642
    %862 = vmatpush.bf16.msra.mxu0 %v634
    %863 = vmatpush.bf16.msra.mxu0 %v626
    %864 = vmatmul.bf16.gmra.mxu0 %v176
    %v865 = vpop.f32.mrf.mxu0
    %v866 = vadd.f32 %v853, %v865
    %v867 = vpop.f32.mrf.mxu0
    %868 = vdwg.mxu0
    %869 = vmatpush.bf16.msra.mxu0 %v619
    %870 = vmatpush.bf16.msra.mxu0 %v611
    %871 = vmatpush.bf16.msra.mxu0 %v603
    %872 = vmatpush.bf16.msra.mxu0 %v595
    %873 = vmatpush.bf16.msra.mxu0 %v587
    %874 = vmatpush.bf16.msra.mxu0 %v579
    %875 = vmatpush.bf16.msra.mxu0 %v571
    %876 = vmatpush.bf16.msra.mxu0 %v563
    %877 = vmatmul.bf16.gmra.mxu0 %v175
    %v878 = vpop.f32.mrf.mxu0
    %v879 = vadd.f32 0.0, %v878
    %v880 = vpop.f32.mrf.mxu0
    %881 = vdwg.mxu0
    %882 = vmatpush.bf16.msra.mxu0 %v683
    %883 = vmatpush.bf16.msra.mxu0 %v675
    %884 = vmatpush.bf16.msra.mxu0 %v667
    %885 = vmatpush.bf16.msra.mxu0 %v659
    %886 = vmatpush.bf16.msra.mxu0 %v651
    %887 = vmatpush.bf16.msra.mxu0 %v643
    %888 = vmatpush.bf16.msra.mxu0 %v635
    %889 = vmatpush.bf16.msra.mxu0 %v627
    %890 = vmatmul.bf16.gmra.mxu0 %v176
    %v891 = vpop.f32.mrf.mxu0
    %v892 = vadd.f32 %v879, %v891
    %v893 = vpop.f32.mrf.mxu0
    %894 = vdwg.mxu0
    %895 = vmatpush.bf16.msra.mxu0 %v620
    %896 = vmatpush.bf16.msra.mxu0 %v612
    %897 = vmatpush.bf16.msra.mxu0 %v604
    %898 = vmatpush.bf16.msra.mxu0 %v596
    %899 = vmatpush.bf16.msra.mxu0 %v588
    %900 = vmatpush.bf16.msra.mxu0 %v580
    %901 = vmatpush.bf16.msra.mxu0 %v572
    %902 = vmatpush.bf16.msra.mxu0 %v564
    %903 = vmatmul.bf16.gmra.mxu0 %v175
    %v904 = vpop.f32.mrf.mxu0
    %v905 = vadd.f32 0.0, %v904
    %v906 = vpop.f32.mrf.mxu0
    %907 = vdwg.mxu0
    %908 = vmatpush.bf16.msra.mxu0 %v684
    %909 = vmatpush.bf16.msra.mxu0 %v676
    %910 = vmatpush.bf16.msra.mxu0 %v668
    %911 = vmatpush.bf16.msra.mxu0 %v660
    %912 = vmatpush.bf16.msra.mxu0 %v652
    %913 = vmatpush.bf16.msra.mxu0 %v644
    %914 = vmatpush.bf16.msra.mxu0 %v636
    %915 = vmatpush.bf16.msra.mxu0 %v628
    %916 = vmatmul.bf16.gmra.mxu0 %v176
    %v917 = vpop.f32.mrf.mxu0
    %v918 = vadd.f32 %v905, %v917
    %v919 = vpop.f32.mrf.mxu0
    %920 = vdwg.mxu0
    %921 = vmatpush.bf16.msra.mxu0 %v621
    %922 = vmatpush.bf16.msra.mxu0 %v613
    %923 = vmatpush.bf16.msra.mxu0 %v605
    %924 = vmatpush.bf16.msra.mxu0 %v597
    %925 = vmatpush.bf16.msra.mxu0 %v589
    %926 = vmatpush.bf16.msra.mxu0 %v581
    %927 = vmatpush.bf16.msra.mxu0 %v573
    %928 = vmatpush.bf16.msra.mxu0 %v565
    %929 = vmatmul.bf16.gmra.mxu0 %v175
    %v930 = vpop.f32.mrf.mxu0
    %v931 = vadd.f32 0.0, %v930
    %v932 = vpop.f32.mrf.mxu0
    %933 = vdwg.mxu0
    %934 = vmatpush.bf16.msra.mxu0 %v685
    %935 = vmatpush.bf16.msra.mxu0 %v677
    %936 = vmatpush.bf16.msra.mxu0 %v669
    %937 = vmatpush.bf16.msra.mxu0 %v661
    %938 = vmatpush.bf16.msra.mxu0 %v653
    %939 = vmatpush.bf16.msra.mxu0 %v645
    %940 = vmatpush.bf16.msra.mxu0 %v637
    %941 = vmatpush.bf16.msra.mxu0 %v629
    %942 = vmatmul.bf16.gmra.mxu0 %v176
    %v943 = vpop.f32.mrf.mxu0
    %v944 = vadd.f32 %v931, %v943
    %v945 = vpop.f32.mrf.mxu0
    %946 = vdwg.mxu0
    %947 = vmatpush.bf16.msra.mxu0 %v622
    %948 = vmatpush.bf16.msra.mxu0 %v614
    %949 = vmatpush.bf16.msra.mxu0 %v606
    %950 = vmatpush.bf16.msra.mxu0 %v598
    %951 = vmatpush.bf16.msra.mxu0 %v590
    %952 = vmatpush.bf16.msra.mxu0 %v582
    %953 = vmatpush.bf16.msra.mxu0 %v574
    %954 = vmatpush.bf16.msra.mxu0 %v566
    %955 = vmatmul.bf16.gmra.mxu0 %v175
    %v956 = vpop.f32.mrf.mxu0
    %v957 = vadd.f32 0.0, %v956
    %v958 = vpop.f32.mrf.mxu0
    %959 = vdwg.mxu0
    %960 = vmatpush.bf16.msra.mxu0 %v686
    %961 = vmatpush.bf16.msra.mxu0 %v678
    %962 = vmatpush.bf16.msra.mxu0 %v670
    %963 = vmatpush.bf16.msra.mxu0 %v662
    %964 = vmatpush.bf16.msra.mxu0 %v654
    %965 = vmatpush.bf16.msra.mxu0 %v646
    %966 = vmatpush.bf16.msra.mxu0 %v638
    %967 = vmatpush.bf16.msra.mxu0 %v630
    %968 = vmatmul.bf16.gmra.mxu0 %v176
    %v969 = vpop.f32.mrf.mxu0
    %v970 = vadd.f32 %v957, %v969
    %v971 = vpop.f32.mrf.mxu0
    %972 = vdwg.mxu0
    %973 = vmatpush.bf16.msra.mxu0 %v623
    %974 = vmatpush.bf16.msra.mxu0 %v615
    %975 = vmatpush.bf16.msra.mxu0 %v607
    %976 = vmatpush.bf16.msra.mxu0 %v599
    %977 = vmatpush.bf16.msra.mxu0 %v591
    %978 = vmatpush.bf16.msra.mxu0 %v583
    %979 = vmatpush.bf16.msra.mxu0 %v575
    %980 = vmatpush.bf16.msra.mxu0 %v567
    %981 = vmatmul.bf16.gmra.mxu0 %v175
    %v982 = vpop.f32.mrf.mxu0
    %v983 = vadd.f32 0.0, %v982
    %v984 = vpop.f32.mrf.mxu0
    %985 = vdwg.mxu0
    %986 = vmatpush.bf16.msra.mxu0 %v687
    %987 = vmatpush.bf16.msra.mxu0 %v679
    %988 = vmatpush.bf16.msra.mxu0 %v671
    %989 = vmatpush.bf16.msra.mxu0 %v663
    %990 = vmatpush.bf16.msra.mxu0 %v655
    %991 = vmatpush.bf16.msra.mxu0 %v647
    %992 = vmatpush.bf16.msra.mxu0 %v639
    %993 = vmatpush.bf16.msra.mxu0 %v631
    %994 = vmatmul.bf16.gmra.mxu0 %v176
    %v995 = vpop.f32.mrf.mxu0
    %v996 = vadd.f32 %v983, %v995
    %v997 = vpop.f32.mrf.mxu0
    %998 = vdwg.mxu0
    %999 = vmatpush.bf16.msra.mxu0 %v624
    %1000 = vmatpush.bf16.msra.mxu0 %v616
    %1001 = vmatpush.bf16.msra.mxu0 %v608
    %1002 = vmatpush.bf16.msra.mxu0 %v600
    %1003 = vmatpush.bf16.msra.mxu0 %v592
    %1004 = vmatpush.bf16.msra.mxu0 %v584
    %1005 = vmatpush.bf16.msra.mxu0 %v576
    %1006 = vmatpush.bf16.msra.mxu0 %v568
    %1007 = vmatmul.bf16.gmra.mxu0 %v175
    %v1008 = vpop.f32.mrf.mxu0
    %v1009 = vadd.f32 0.0, %v1008
    %v1010 = vpop.f32.mrf.mxu0
    %1011 = vdwg.mxu0
    %1012 = vmatpush.bf16.msra.mxu0 %v688
    %1013 = vmatpush.bf16.msra.mxu0 %v680
    %1014 = vmatpush.bf16.msra.mxu0 %v672
    %1015 = vmatpush.bf16.msra.mxu0 %v664
    %1016 = vmatpush.bf16.msra.mxu0 %v656
    %1017 = vmatpush.bf16.msra.mxu0 %v648
    %1018 = vmatpush.bf16.msra.mxu0 %v640
    %1019 = vmatpush.bf16.msra.mxu0 %v632
    %1020 = vmatmul.bf16.gmra.mxu0 %v176
    %v1021 = vpop.f32.mrf.mxu0
    %v1022 = vadd.f32 %v1009, %v1021
    %v1023 = vpop.f32.mrf.mxu0
    %1024 = vdwg.mxu0
    %v1025 = vadd.f32 %v167, %v840
    %v1026 = vadd.f32 %v168, %v866
    %v1027 = vadd.f32 %v169, %v892
    %v1028 = vadd.f32 %v170, %v918
    %v1029 = vadd.f32 %v171, %v944
    %v1030 = vadd.f32 %v172, %v970
    %v1031 = vadd.f32 %v173, %v996
    %v1032 = vadd.f32 %v174, %v1022
    %v1033 = vxor.u32 %v1025, 2147483648
    %v1034 = vxor.u32 %v1026, 2147483648
    %v1035 = vmul.f32 %v1033, 1.442695
    %v1036 = vpow.pop %v1035
    %v1037 = vmul.f32 %v1034, 1.442695
    %v1038 = vpow.pop %v1037
    %v1039 = vadd.f32 %v1036, 1.0
    %v1040 = vadd.f32 %v1038, 1.0
    %v1041 = vrcp.pop %v1039
    %v1042 = vmul.f32 %v1039, %v1041
    %v1043 = vsub.f32 1.0, %v1042
    %v1044 = vmul.f32 %v1041, %v1043
    %v1045 = vadd.f32 %v1041, %v1044
    %vm1046 = vweird.f32 %v1039
    %vm1047 = vweird.f32 %v1041
    %vm1048 = vmor %vm1046, %vm1047
    %v1049 = vsel %vm1048, %v1041, %v1045
    %v1050 = vand.u32 2147483647, %v1039
    %vm1051 = vcmp.eq.f32.partialorder %v1050, 8.507059e+37
    %v1052 = vand.u32 %v1039, 2147483648
    %v1053 = vor.u32 1.1754944e-38, %v1052
    %v1054 = vsel %vm1051, %v1053, %v1049
    %v1055 = vmul.f32 1.0, %v1054
    %v1056 = vrcp.pop %v1040
    %v1057 = vmul.f32 %v1040, %v1056
    %v1058 = vsub.f32 1.0, %v1057
    %v1059 = vmul.f32 %v1056, %v1058
    %v1060 = vadd.f32 %v1056, %v1059
    %vm1061 = vweird.f32 %v1040
    %vm1062 = vweird.f32 %v1056
    %vm1063 = vmor %vm1061, %vm1062
    %v1064 = vsel %vm1063, %v1056, %v1060
    %v1065 = vand.u32 2147483647, %v1040
    %vm1066 = vcmp.eq.f32.partialorder %v1065, 8.507059e+37
    %v1067 = vand.u32 %v1040, 2147483648
    %v1068 = vor.u32 1.1754944e-38, %v1067
    %v1069 = vsel %vm1066, %v1068, %v1064
    %v1070 = vmul.f32 1.0, %v1069
    %v1071 = vxor.u32 %v1027, 2147483648
    %v1072 = vxor.u32 %v1028, 2147483648
    %v1073 = vmul.f32 %v1071, 1.442695
    %v1074 = vpow.pop %v1073
    %v1075 = vmul.f32 %v1072, 1.442695
    %v1076 = vpow.pop %v1075
    %v1077 = vadd.f32 %v1074, 1.0
    %v1078 = vadd.f32 %v1076, 1.0
    %v1079 = vrcp.pop %v1077
    %v1080 = vmul.f32 %v1077, %v1079
    %v1081 = vsub.f32 1.0, %v1080
    %v1082 = vmul.f32 %v1079, %v1081
    %v1083 = vadd.f32 %v1079, %v1082
    %vm1084 = vweird.f32 %v1077
    %vm1085 = vweird.f32 %v1079
    %vm1086 = vmor %vm1084, %vm1085
    %v1087 = vsel %vm1086, %v1079, %v1083
    %v1088 = vand.u32 2147483647, %v1077
    %vm1089 = vcmp.eq.f32.partialorder %v1088, 8.507059e+37
    %v1090 = vand.u32 %v1077, 2147483648
    %v1091 = vor.u32 1.1754944e-38, %v1090
    %v1092 = vsel %vm1089, %v1091, %v1087
    %v1093 = vmul.f32 1.0, %v1092
    %v1094 = vrcp.pop %v1078
    %v1095 = vmul.f32 %v1078, %v1094
    %v1096 = vsub.f32 1.0, %v1095
    %v1097 = vmul.f32 %v1094, %v1096
    %v1098 = vadd.f32 %v1094, %v1097
    %vm1099 = vweird.f32 %v1078
    %vm1100 = vweird.f32 %v1094
    %vm1101 = vmor %vm1099, %vm1100
    %v1102 = vsel %vm1101, %v1094, %v1098
    %v1103 = vand.u32 2147483647, %v1078
    %vm1104 = vcmp.eq.f32.partialorder %v1103, 8.507059e+37
    %v1105 = vand.u32 %v1078, 2147483648
    %v1106 = vor.u32 1.1754944e-38, %v1105
    %v1107 = vsel %vm1104, %v1106, %v1102
    %v1108 = vmul.f32 1.0, %v1107
    %v1109 = vtanh.pop %v1029
    %v1110 = vtanh.pop %v1030
    %v1111 = vxor.u32 %v1031, 2147483648
    %v1112 = vxor.u32 %v1032, 2147483648
    %v1113 = vmul.f32 %v1111, 1.442695
    %v1114 = vpow.pop %v1113
    %v1115 = vmul.f32 %v1112, 1.442695
    %v1116 = vpow.pop %v1115
    %v1117 = vadd.f32 %v1114, 1.0
    %v1118 = vadd.f32 %v1116, 1.0
    %v1119 = vrcp.pop %v1117
    %v1120 = vmul.f32 %v1117, %v1119
    %v1121 = vsub.f32 1.0, %v1120
    %v1122 = vmul.f32 %v1119, %v1121
    %v1123 = vadd.f32 %v1119, %v1122
    %vm1124 = vweird.f32 %v1117
    %vm1125 = vweird.f32 %v1119
    %vm1126 = vmor %vm1124, %vm1125
    %v1127 = vsel %vm1126, %v1119, %v1123
    %v1128 = vand.u32 2147483647, %v1117
    %vm1129 = vcmp.eq.f32.partialorder %v1128, 8.507059e+37
    %v1130 = vand.u32 %v1117, 2147483648
    %v1131 = vor.u32 1.1754944e-38, %v1130
    %v1132 = vsel %vm1129, %v1131, %v1127
    %v1133 = vmul.f32 1.0, %v1132
    %v1134 = vrcp.pop %v1118
    %v1135 = vmul.f32 %v1118, %v1134
    %v1136 = vsub.f32 1.0, %v1135
    %v1137 = vmul.f32 %v1134, %v1136
    %v1138 = vadd.f32 %v1134, %v1137
    %vm1139 = vweird.f32 %v1118
    %vm1140 = vweird.f32 %v1134
    %vm1141 = vmor %vm1139, %vm1140
    %v1142 = vsel %vm1141, %v1134, %v1138
    %v1143 = vand.u32 2147483647, %v1118
    %vm1144 = vcmp.eq.f32.partialorder %v1143, 8.507059e+37
    %v1145 = vand.u32 %v1118, 2147483648
    %v1146 = vor.u32 1.1754944e-38, %v1145
    %v1147 = vsel %vm1144, %v1146, %v1142
    %v1148 = vmul.f32 1.0, %v1147
    %v1149 = vmul.f32 %v1093, %v165
    %v1150 = vmul.f32 %v1108, %v166
    %v1151 = vmul.f32 %v1055, %v1109
    %v1152 = vmul.f32 %v1070, %v1110
    %v1153 = vadd.f32 %v1149, %v1151
    %v1154 = vadd.f32 %v1150, %v1152
    %v1155 = vtanh.pop %v1153
    %v1156 = vtanh.pop %v1154
    %v1157 = vmul.f32 %v1133, %v1155
    %v1158 = vmul.f32 %v1148, %v1156
    %s1159 = scalar_lea.vmem %s0, 64
    %v1160 = vld [vmem:[%s1159] sm:$0xff]
    %v1161 = vld [vmem:[%s1159 + $0x8] sm:$0xff]
    %v1162 = vld [vmem:[%s1159 + $0x10] sm:$0xff]
    %v1163 = vld [vmem:[%s1159 + $0x18] sm:$0xff]
    %v1164 = vld [vmem:[%s1159 + $0x20] sm:$0xff]
    %v1165 = vld [vmem:[%s1159 + $0x28] sm:$0xff]
    %v1166 = vld [vmem:[%s1159 + $0x30] sm:$0xff]
    %v1167 = vld [vmem:[%s1159 + $0x38] sm:$0xff]
    %v1168 = vpack.c.bf16 %v1157, %v1157
    %v1169 = vpack.c.bf16 %v1158, %v1158
    %1170 = vmatpush.bf16.msra.mxu0 %v617
    %1171 = vmatpush.bf16.msra.mxu0 %v609
    %1172 = vmatpush.bf16.msra.mxu0 %v601
    %1173 = vmatpush.bf16.msra.mxu0 %v593
    %1174 = vmatpush.bf16.msra.mxu0 %v585
    %1175 = vmatpush.bf16.msra.mxu0 %v577
    %1176 = vmatpush.bf16.msra.mxu0 %v569
    %1177 = vmatpush.bf16.msra.mxu0 %v561
    %1178 = vmatmul.bf16.gmra.mxu0 %v1168
    %v1179 = vpop.f32.mrf.mxu0
    %v1180 = vadd.f32 0.0, %v1179
    %v1181 = vpop.f32.mrf.mxu0
    %1182 = vdwg.mxu0
    %1183 = vmatpush.bf16.msra.mxu0 %v681
    %1184 = vmatpush.bf16.msra.mxu0 %v673
    %1185 = vmatpush.bf16.msra.mxu0 %v665
    %1186 = vmatpush.bf16.msra.mxu0 %v657
    %1187 = vmatpush.bf16.msra.mxu0 %v649
    %1188 = vmatpush.bf16.msra.mxu0 %v641
    %1189 = vmatpush.bf16.msra.mxu0 %v633
    %1190 = vmatpush.bf16.msra.mxu0 %v625
    %1191 = vmatmul.bf16.gmra.mxu0 %v1169
    %v1192 = vpop.f32.mrf.mxu0
    %v1193 = vadd.f32 %v1180, %v1192
    %v1194 = vpop.f32.mrf.mxu0
    %1195 = vdwg.mxu0
    %1196 = vmatpush.bf16.msra.mxu0 %v618
    %1197 = vmatpush.bf16.msra.mxu0 %v610
    %1198 = vmatpush.bf16.msra.mxu0 %v602
    %1199 = vmatpush.bf16.msra.mxu0 %v594
    %1200 = vmatpush.bf16.msra.mxu0 %v586
    %1201 = vmatpush.bf16.msra.mxu0 %v578
    %1202 = vmatpush.bf16.msra.mxu0 %v570
    %1203 = vmatpush.bf16.msra.mxu0 %v562
    %1204 = vmatmul.bf16.gmra.mxu0 %v1168
    %v1205 = vpop.f32.mrf.mxu0
    %v1206 = vadd.f32 0.0, %v1205
    %v1207 = vpop.f32.mrf.mxu0
    %1208 = vdwg.mxu0
    %1209 = vmatpush.bf16.msra.mxu0 %v682
    %1210 = vmatpush.bf16.msra.mxu0 %v674
    %1211 = vmatpush.bf16.msra.mxu0 %v666
    %1212 = vmatpush.bf16.msra.mxu0 %v658
    %1213 = vmatpush.bf16.msra.mxu0 %v650
    %1214 = vmatpush.bf16.msra.mxu0 %v642
    %1215 = vmatpush.bf16.msra.mxu0 %v634
    %1216 = vmatpush.bf16.msra.mxu0 %v626
    %1217 = vmatmul.bf16.gmra.mxu0 %v1169
    %v1218 = vpop.f32.mrf.mxu0
    %v1219 = vadd.f32 %v1206, %v1218
    %v1220 = vpop.f32.mrf.mxu0
    %1221 = vdwg.mxu0
    %1222 = vmatpush.bf16.msra.mxu0 %v619
    %1223 = vmatpush.bf16.msra.mxu0 %v611
    %1224 = vmatpush.bf16.msra.mxu0 %v603
    %1225 = vmatpush.bf16.msra.mxu0 %v595
    %1226 = vmatpush.bf16.msra.mxu0 %v587
    %1227 = vmatpush.bf16.msra.mxu0 %v579
    %1228 = vmatpush.bf16.msra.mxu0 %v571
    %1229 = vmatpush.bf16.msra.mxu0 %v563
    %1230 = vmatmul.bf16.gmra.mxu0 %v1168
    %v1231 = vpop.f32.mrf.mxu0
    %v1232 = vadd.f32 0.0, %v1231
    %v1233 = vpop.f32.mrf.mxu0
    %1234 = vdwg.mxu0
    %1235 = vmatpush.bf16.msra.mxu0 %v683
    %1236 = vmatpush.bf16.msra.mxu0 %v675
    %1237 = vmatpush.bf16.msra.mxu0 %v667
    %1238 = vmatpush.bf16.msra.mxu0 %v659
    %1239 = vmatpush.bf16.msra.mxu0 %v651
    %1240 = vmatpush.bf16.msra.mxu0 %v643
    %1241 = vmatpush.bf16.msra.mxu0 %v635
    %1242 = vmatpush.bf16.msra.mxu0 %v627
    %1243 = vmatmul.bf16.gmra.mxu0 %v1169
    %v1244 = vpop.f32.mrf.mxu0
    %v1245 = vadd.f32 %v1232, %v1244
    %v1246 = vpop.f32.mrf.mxu0
    %1247 = vdwg.mxu0
    %1248 = vmatpush.bf16.msra.mxu0 %v620
    %1249 = vmatpush.bf16.msra.mxu0 %v612
    %1250 = vmatpush.bf16.msra.mxu0 %v604
    %1251 = vmatpush.bf16.msra.mxu0 %v596
    %1252 = vmatpush.bf16.msra.mxu0 %v588
    %1253 = vmatpush.bf16.msra.mxu0 %v580
    %1254 = vmatpush.bf16.msra.mxu0 %v572
    %1255 = vmatpush.bf16.msra.mxu0 %v564
    %1256 = vmatmul.bf16.gmra.mxu0 %v1168
    %v1257 = vpop.f32.mrf.mxu0
    %v1258 = vadd.f32 0.0, %v1257
    %v1259 = vpop.f32.mrf.mxu0
    %1260 = vdwg.mxu0
    %1261 = vmatpush.bf16.msra.mxu0 %v684
    %1262 = vmatpush.bf16.msra.mxu0 %v676
    %1263 = vmatpush.bf16.msra.mxu0 %v668
    %1264 = vmatpush.bf16.msra.mxu0 %v660
    %1265 = vmatpush.bf16.msra.mxu0 %v652
    %1266 = vmatpush.bf16.msra.mxu0 %v644
    %1267 = vmatpush.bf16.msra.mxu0 %v636
    %1268 = vmatpush.bf16.msra.mxu0 %v628
    %1269 = vmatmul.bf16.gmra.mxu0 %v1169
    %v1270 = vpop.f32.mrf.mxu0
    %v1271 = vadd.f32 %v1258, %v1270
    %v1272 = vpop.f32.mrf.mxu0
    %1273 = vdwg.mxu0
    %1274 = vmatpush.bf16.msra.mxu0 %v621
    %1275 = vmatpush.bf16.msra.mxu0 %v613
    %1276 = vmatpush.bf16.msra.mxu0 %v605
    %1277 = vmatpush.bf16.msra.mxu0 %v597
    %1278 = vmatpush.bf16.msra.mxu0 %v589
    %1279 = vmatpush.bf16.msra.mxu0 %v581
    %1280 = vmatpush.bf16.msra.mxu0 %v573
    %1281 = vmatpush.bf16.msra.mxu0 %v565
    %1282 = vmatmul.bf16.gmra.mxu0 %v1168
    %v1283 = vpop.f32.mrf.mxu0
    %v1284 = vadd.f32 0.0, %v1283
    %v1285 = vpop.f32.mrf.mxu0
    %1286 = vdwg.mxu0
    %1287 = vmatpush.bf16.msra.mxu0 %v685
    %1288 = vmatpush.bf16.msra.mxu0 %v677
    %1289 = vmatpush.bf16.msra.mxu0 %v669
    %1290 = vmatpush.bf16.msra.mxu0 %v661
    %1291 = vmatpush.bf16.msra.mxu0 %v653
    %1292 = vmatpush.bf16.msra.mxu0 %v645
    %1293 = vmatpush.bf16.msra.mxu0 %v637
    %1294 = vmatpush.bf16.msra.mxu0 %v629
    %1295 = vmatmul.bf16.gmra.mxu0 %v1169
    %v1296 = vpop.f32.mrf.mxu0
    %v1297 = vadd.f32 %v1284, %v1296
    %v1298 = vpop.f32.mrf.mxu0
    %1299 = vdwg.mxu0
    %1300 = vmatpush.bf16.msra.mxu0 %v622
    %1301 = vmatpush.bf16.msra.mxu0 %v614
    %1302 = vmatpush.bf16.msra.mxu0 %v606
    %1303 = vmatpush.bf16.msra.mxu0 %v598
    %1304 = vmatpush.bf16.msra.mxu0 %v590
    %1305 = vmatpush.bf16.msra.mxu0 %v582
    %1306 = vmatpush.bf16.msra.mxu0 %v574
    %1307 = vmatpush.bf16.msra.mxu0 %v566
    %1308 = vmatmul.bf16.gmra.mxu0 %v1168
    %v1309 = vpop.f32.mrf.mxu0
    %v1310 = vadd.f32 0.0, %v1309
    %v1311 = vpop.f32.mrf.mxu0
    %1312 = vdwg.mxu0
    %1313 = vmatpush.bf16.msra.mxu0 %v686
    %1314 = vmatpush.bf16.msra.mxu0 %v678
    %1315 = vmatpush.bf16.msra.mxu0 %v670
    %1316 = vmatpush.bf16.msra.mxu0 %v662
    %1317 = vmatpush.bf16.msra.mxu0 %v654
    %1318 = vmatpush.bf16.msra.mxu0 %v646
    %1319 = vmatpush.bf16.msra.mxu0 %v638
    %1320 = vmatpush.bf16.msra.mxu0 %v630
    %1321 = vmatmul.bf16.gmra.mxu0 %v1169
    %v1322 = vpop.f32.mrf.mxu0
    %v1323 = vadd.f32 %v1310, %v1322
    %v1324 = vpop.f32.mrf.mxu0
    %1325 = vdwg.mxu0
    %1326 = vmatpush.bf16.msra.mxu0 %v623
    %1327 = vmatpush.bf16.msra.mxu0 %v615
    %1328 = vmatpush.bf16.msra.mxu0 %v607
    %1329 = vmatpush.bf16.msra.mxu0 %v599
    %1330 = vmatpush.bf16.msra.mxu0 %v591
    %1331 = vmatpush.bf16.msra.mxu0 %v583
    %1332 = vmatpush.bf16.msra.mxu0 %v575
    %1333 = vmatpush.bf16.msra.mxu0 %v567
    %1334 = vmatmul.bf16.gmra.mxu0 %v1168
    %v1335 = vpop.f32.mrf.mxu0
    %v1336 = vadd.f32 0.0, %v1335
    %v1337 = vpop.f32.mrf.mxu0
    %1338 = vdwg.mxu0
    %1339 = vmatpush.bf16.msra.mxu0 %v687
    %1340 = vmatpush.bf16.msra.mxu0 %v679
    %1341 = vmatpush.bf16.msra.mxu0 %v671
    %1342 = vmatpush.bf16.msra.mxu0 %v663
    %1343 = vmatpush.bf16.msra.mxu0 %v655
    %1344 = vmatpush.bf16.msra.mxu0 %v647
    %1345 = vmatpush.bf16.msra.mxu0 %v639
    %1346 = vmatpush.bf16.msra.mxu0 %v631
    %1347 = vmatmul.bf16.gmra.mxu0 %v1169
    %v1348 = vpop.f32.mrf.mxu0
    %v1349 = vadd.f32 %v1336, %v1348
    %v1350 = vpop.f32.mrf.mxu0
    %1351 = vdwg.mxu0
    %1352 = vmatpush.bf16.msra.mxu0 %v624
    %1353 = vmatpush.bf16.msra.mxu0 %v616
    %1354 = vmatpush.bf16.msra.mxu0 %v608
    %1355 = vmatpush.bf16.msra.mxu0 %v600
    %1356 = vmatpush.bf16.msra.mxu0 %v592
    %1357 = vmatpush.bf16.msra.mxu0 %v584
    %1358 = vmatpush.bf16.msra.mxu0 %v576
    %1359 = vmatpush.bf16.msra.mxu0 %v568
    %1360 = vmatmul.bf16.gmra.mxu0 %v1168
    %v1361 = vpop.f32.mrf.mxu0
    %v1362 = vadd.f32 0.0, %v1361
    %v1363 = vpop.f32.mrf.mxu0
    %1364 = vdwg.mxu0
    %1365 = vmatpush.bf16.msra.mxu0 %v688
    %1366 = vmatpush.bf16.msra.mxu0 %v680
    %1367 = vmatpush.bf16.msra.mxu0 %v672
    %1368 = vmatpush.bf16.msra.mxu0 %v664
    %1369 = vmatpush.bf16.msra.mxu0 %v656
    %1370 = vmatpush.bf16.msra.mxu0 %v648
    %1371 = vmatpush.bf16.msra.mxu0 %v640
    %1372 = vmatpush.bf16.msra.mxu0 %v632
    %1373 = vmatmul.bf16.gmra.mxu0 %v1169
    %v1374 = vpop.f32.mrf.mxu0
    %v1375 = vadd.f32 %v1362, %v1374
    %v1376 = vpop.f32.mrf.mxu0
    %1377 = vdwg.mxu0
    %v1378 = vadd.f32 %v1160, %v1193
    %v1379 = vadd.f32 %v1161, %v1219
    %v1380 = vadd.f32 %v1162, %v1245
    %v1381 = vadd.f32 %v1163, %v1271
    %v1382 = vadd.f32 %v1164, %v1297
    %v1383 = vadd.f32 %v1165, %v1323
    %v1384 = vadd.f32 %v1166, %v1349
    %v1385 = vadd.f32 %v1167, %v1375
    %v1386 = vxor.u32 %v1378, 2147483648
    %v1387 = vxor.u32 %v1379, 2147483648
    %v1388 = vmul.f32 %v1386, 1.442695
    %v1389 = vpow.pop %v1388
    %v1390 = vmul.f32 %v1387, 1.442695
    %v1391 = vpow.pop %v1390
    %v1392 = vadd.f32 %v1389, 1.0
    %v1393 = vadd.f32 %v1391, 1.0
    %v1394 = vrcp.pop %v1392
    %v1395 = vmul.f32 %v1392, %v1394
    %v1396 = vsub.f32 1.0, %v1395
    %v1397 = vmul.f32 %v1394, %v1396
    %v1398 = vadd.f32 %v1394, %v1397
    %vm1399 = vweird.f32 %v1392
    %vm1400 = vweird.f32 %v1394
    %vm1401 = vmor %vm1399, %vm1400
    %v1402 = vsel %vm1401, %v1394, %v1398
    %v1403 = vand.u32 2147483647, %v1392
    %vm1404 = vcmp.eq.f32.partialorder %v1403, 8.507059e+37
    %v1405 = vand.u32 %v1392, 2147483648
    %v1406 = vor.u32 1.1754944e-38, %v1405
    %v1407 = vsel %vm1404, %v1406, %v1402
    %v1408 = vmul.f32 1.0, %v1407
    %v1409 = vrcp.pop %v1393
    %v1410 = vmul.f32 %v1393, %v1409
    %v1411 = vsub.f32 1.0, %v1410
    %v1412 = vmul.f32 %v1409, %v1411
    %v1413 = vadd.f32 %v1409, %v1412
    %vm1414 = vweird.f32 %v1393
    %vm1415 = vweird.f32 %v1409
    %vm1416 = vmor %vm1414, %vm1415
    %v1417 = vsel %vm1416, %v1409, %v1413
    %v1418 = vand.u32 2147483647, %v1393
    %vm1419 = vcmp.eq.f32.partialorder %v1418, 8.507059e+37
    %v1420 = vand.u32 %v1393, 2147483648
    %v1421 = vor.u32 1.1754944e-38, %v1420
    %v1422 = vsel %vm1419, %v1421, %v1417
    %v1423 = vmul.f32 1.0, %v1422
    %v1424 = vxor.u32 %v1380, 2147483648
    %v1425 = vxor.u32 %v1381, 2147483648
    %v1426 = vmul.f32 %v1424, 1.442695
    %v1427 = vpow.pop %v1426
    %v1428 = vmul.f32 %v1425, 1.442695
    %v1429 = vpow.pop %v1428
    %v1430 = vadd.f32 %v1427, 1.0
    %v1431 = vadd.f32 %v1429, 1.0
    %v1432 = vrcp.pop %v1430
    %v1433 = vmul.f32 %v1430, %v1432
    %v1434 = vsub.f32 1.0, %v1433
    %v1435 = vmul.f32 %v1432, %v1434
    %v1436 = vadd.f32 %v1432, %v1435
    %vm1437 = vweird.f32 %v1430
    %vm1438 = vweird.f32 %v1432
    %vm1439 = vmor %vm1437, %vm1438
    %v1440 = vsel %vm1439, %v1432, %v1436
    %v1441 = vand.u32 2147483647, %v1430
    %vm1442 = vcmp.eq.f32.partialorder %v1441, 8.507059e+37
    %v1443 = vand.u32 %v1430, 2147483648
    %v1444 = vor.u32 1.1754944e-38, %v1443
    %v1445 = vsel %vm1442, %v1444, %v1440
    %v1446 = vmul.f32 1.0, %v1445
    %v1447 = vrcp.pop %v1431
    %v1448 = vmul.f32 %v1431, %v1447
    %v1449 = vsub.f32 1.0, %v1448
    %v1450 = vmul.f32 %v1447, %v1449
    %v1451 = vadd.f32 %v1447, %v1450
    %vm1452 = vweird.f32 %v1431
    %vm1453 = vweird.f32 %v1447
    %vm1454 = vmor %vm1452, %vm1453
    %v1455 = vsel %vm1454, %v1447, %v1451
    %v1456 = vand.u32 2147483647, %v1431
    %vm1457 = vcmp.eq.f32.partialorder %v1456, 8.507059e+37
    %v1458 = vand.u32 %v1431, 2147483648
    %v1459 = vor.u32 1.1754944e-38, %v1458
    %v1460 = vsel %vm1457, %v1459, %v1455
    %v1461 = vmul.f32 1.0, %v1460
    %v1462 = vtanh.pop %v1382
    %v1463 = vtanh.pop %v1383
    %v1464 = vxor.u32 %v1384, 2147483648
    %v1465 = vxor.u32 %v1385, 2147483648
    %v1466 = vmul.f32 %v1464, 1.442695
    %v1467 = vpow.pop %v1466
    %v1468 = vmul.f32 %v1465, 1.442695
    %v1469 = vpow.pop %v1468
    %v1470 = vadd.f32 %v1467, 1.0
    %v1471 = vadd.f32 %v1469, 1.0
    %v1472 = vrcp.pop %v1470
    %v1473 = vmul.f32 %v1470, %v1472
    %v1474 = vsub.f32 1.0, %v1473
    %v1475 = vmul.f32 %v1472, %v1474
    %v1476 = vadd.f32 %v1472, %v1475
    %vm1477 = vweird.f32 %v1470
    %vm1478 = vweird.f32 %v1472
    %vm1479 = vmor %vm1477, %vm1478
    %v1480 = vsel %vm1479, %v1472, %v1476
    %v1481 = vand.u32 2147483647, %v1470
    %vm1482 = vcmp.eq.f32.partialorder %v1481, 8.507059e+37
    %v1483 = vand.u32 %v1470, 2147483648
    %v1484 = vor.u32 1.1754944e-38, %v1483
    %v1485 = vsel %vm1482, %v1484, %v1480
    %v1486 = vmul.f32 1.0, %v1485
    %v1487 = vrcp.pop %v1471
    %v1488 = vmul.f32 %v1471, %v1487
    %v1489 = vsub.f32 1.0, %v1488
    %v1490 = vmul.f32 %v1487, %v1489
    %v1491 = vadd.f32 %v1487, %v1490
    %vm1492 = vweird.f32 %v1471
    %vm1493 = vweird.f32 %v1487
    %vm1494 = vmor %vm1492, %vm1493
    %v1495 = vsel %vm1494, %v1487, %v1491
    %v1496 = vand.u32 2147483647, %v1471
    %vm1497 = vcmp.eq.f32.partialorder %v1496, 8.507059e+37
    %v1498 = vand.u32 %v1471, 2147483648
    %v1499 = vor.u32 1.1754944e-38, %v1498
    %v1500 = vsel %vm1497, %v1499, %v1495
    %v1501 = vmul.f32 1.0, %v1500
    %v1502 = vmul.f32 %v1446, %v1153
    %v1503 = vmul.f32 %v1461, %v1154
    %v1504 = vmul.f32 %v1408, %v1462
    %v1505 = vmul.f32 %v1423, %v1463
    %v1506 = vadd.f32 %v1502, %v1504
    %v1507 = vadd.f32 %v1503, %v1505
    %v1508 = vtanh.pop %v1506
    %v1509 = vtanh.pop %v1507
    %v1510 = vmul.f32 %v1486, %v1508
    %v1511 = vmul.f32 %v1501, %v1509
    %s1512 = scalar_lea.vmem %s0, 128
    %v1513 = vld [vmem:[%s1512] sm:$0xff]
    %v1514 = vld [vmem:[%s1512 + $0x8] sm:$0xff]
    %v1515 = vld [vmem:[%s1512 + $0x10] sm:$0xff]
    %v1516 = vld [vmem:[%s1512 + $0x18] sm:$0xff]
    %v1517 = vld [vmem:[%s1512 + $0x20] sm:$0xff]
    %v1518 = vld [vmem:[%s1512 + $0x28] sm:$0xff]
    %v1519 = vld [vmem:[%s1512 + $0x30] sm:$0xff]
    %v1520 = vld [vmem:[%s1512 + $0x38] sm:$0xff]
    %v1521 = vpack.c.bf16 %v1510, %v1510
    %v1522 = vpack.c.bf16 %v1511, %v1511
    %1523 = vmatpush.bf16.msra.mxu0 %v617
    %1524 = vmatpush.bf16.msra.mxu0 %v609
    %1525 = vmatpush.bf16.msra.mxu0 %v601
    %1526 = vmatpush.bf16.msra.mxu0 %v593
    %1527 = vmatpush.bf16.msra.mxu0 %v585
    %1528 = vmatpush.bf16.msra.mxu0 %v577
    %1529 = vmatpush.bf16.msra.mxu0 %v569
    %1530 = vmatpush.bf16.msra.mxu0 %v561
    %1531 = vmatmul.bf16.gmra.mxu0 %v1521
    %v1532 = vpop.f32.mrf.mxu0
    %v1533 = vadd.f32 0.0, %v1532
    %v1534 = vpop.f32.mrf.mxu0
    %1535 = vdwg.mxu0
    %1536 = vmatpush.bf16.msra.mxu0 %v681
    %1537 = vmatpush.bf16.msra.mxu0 %v673
    %1538 = vmatpush.bf16.msra.mxu0 %v665
    %1539 = vmatpush.bf16.msra.mxu0 %v657
    %1540 = vmatpush.bf16.msra.mxu0 %v649
    %1541 = vmatpush.bf16.msra.mxu0 %v641
    %1542 = vmatpush.bf16.msra.mxu0 %v633
    %1543 = vmatpush.bf16.msra.mxu0 %v625
    %1544 = vmatmul.bf16.gmra.mxu0 %v1522
    %v1545 = vpop.f32.mrf.mxu0
    %v1546 = vadd.f32 %v1533, %v1545
    %v1547 = vpop.f32.mrf.mxu0
    %1548 = vdwg.mxu0
    %1549 = vmatpush.bf16.msra.mxu0 %v618
    %1550 = vmatpush.bf16.msra.mxu0 %v610
    %1551 = vmatpush.bf16.msra.mxu0 %v602
    %1552 = vmatpush.bf16.msra.mxu0 %v594
    %1553 = vmatpush.bf16.msra.mxu0 %v586
    %1554 = vmatpush.bf16.msra.mxu0 %v578
    %1555 = vmatpush.bf16.msra.mxu0 %v570
    %1556 = vmatpush.bf16.msra.mxu0 %v562
    %1557 = vmatmul.bf16.gmra.mxu0 %v1521
    %v1558 = vpop.f32.mrf.mxu0
    %v1559 = vadd.f32 0.0, %v1558
    %v1560 = vpop.f32.mrf.mxu0
    %1561 = vdwg.mxu0
    %1562 = vmatpush.bf16.msra.mxu0 %v682
    %1563 = vmatpush.bf16.msra.mxu0 %v674
    %1564 = vmatpush.bf16.msra.mxu0 %v666
    %1565 = vmatpush.bf16.msra.mxu0 %v658
    %1566 = vmatpush.bf16.msra.mxu0 %v650
    %1567 = vmatpush.bf16.msra.mxu0 %v642
    %1568 = vmatpush.bf16.msra.mxu0 %v634
    %1569 = vmatpush.bf16.msra.mxu0 %v626
    %1570 = vmatmul.bf16.gmra.mxu0 %v1522
    %v1571 = vpop.f32.mrf.mxu0
    %v1572 = vadd.f32 %v1559, %v1571
    %v1573 = vpop.f32.mrf.mxu0
    %1574 = vdwg.mxu0
    %1575 = vmatpush.bf16.msra.mxu0 %v619
    %1576 = vmatpush.bf16.msra.mxu0 %v611
    %1577 = vmatpush.bf16.msra.mxu0 %v603
    %1578 = vmatpush.bf16.msra.mxu0 %v595
    %1579 = vmatpush.bf16.msra.mxu0 %v587
    %1580 = vmatpush.bf16.msra.mxu0 %v579
    %1581 = vmatpush.bf16.msra.mxu0 %v571
    %1582 = vmatpush.bf16.msra.mxu0 %v563
    %1583 = vmatmul.bf16.gmra.mxu0 %v1521
    %v1584 = vpop.f32.mrf.mxu0
    %v1585 = vadd.f32 0.0, %v1584
    %v1586 = vpop.f32.mrf.mxu0
    %1587 = vdwg.mxu0
    %1588 = vmatpush.bf16.msra.mxu0 %v683
    %1589 = vmatpush.bf16.msra.mxu0 %v675
    %1590 = vmatpush.bf16.msra.mxu0 %v667
    %1591 = vmatpush.bf16.msra.mxu0 %v659
    %1592 = vmatpush.bf16.msra.mxu0 %v651
    %1593 = vmatpush.bf16.msra.mxu0 %v643
    %1594 = vmatpush.bf16.msra.mxu0 %v635
    %1595 = vmatpush.bf16.msra.mxu0 %v627
    %1596 = vmatmul.bf16.gmra.mxu0 %v1522
    %v1597 = vpop.f32.mrf.mxu0
    %v1598 = vadd.f32 %v1585, %v1597
    %v1599 = vpop.f32.mrf.mxu0
    %1600 = vdwg.mxu0
    %1601 = vmatpush.bf16.msra.mxu0 %v620
    %1602 = vmatpush.bf16.msra.mxu0 %v612
    %1603 = vmatpush.bf16.msra.mxu0 %v604
    %1604 = vmatpush.bf16.msra.mxu0 %v596
    %1605 = vmatpush.bf16.msra.mxu0 %v588
    %1606 = vmatpush.bf16.msra.mxu0 %v580
    %1607 = vmatpush.bf16.msra.mxu0 %v572
    %1608 = vmatpush.bf16.msra.mxu0 %v564
    %1609 = vmatmul.bf16.gmra.mxu0 %v1521
    %v1610 = vpop.f32.mrf.mxu0
    %v1611 = vadd.f32 0.0, %v1610
    %v1612 = vpop.f32.mrf.mxu0
    %1613 = vdwg.mxu0
    %1614 = vmatpush.bf16.msra.mxu0 %v684
    %1615 = vmatpush.bf16.msra.mxu0 %v676
    %1616 = vmatpush.bf16.msra.mxu0 %v668
    %1617 = vmatpush.bf16.msra.mxu0 %v660
    %1618 = vmatpush.bf16.msra.mxu0 %v652
    %1619 = vmatpush.bf16.msra.mxu0 %v644
    %1620 = vmatpush.bf16.msra.mxu0 %v636
    %1621 = vmatpush.bf16.msra.mxu0 %v628
    %1622 = vmatmul.bf16.gmra.mxu0 %v1522
    %v1623 = vpop.f32.mrf.mxu0
    %v1624 = vadd.f32 %v1611, %v1623
    %v1625 = vpop.f32.mrf.mxu0
    %1626 = vdwg.mxu0
    %1627 = vmatpush.bf16.msra.mxu0 %v621
    %1628 = vmatpush.bf16.msra.mxu0 %v613
    %1629 = vmatpush.bf16.msra.mxu0 %v605
    %1630 = vmatpush.bf16.msra.mxu0 %v597
    %1631 = vmatpush.bf16.msra.mxu0 %v589
    %1632 = vmatpush.bf16.msra.mxu0 %v581
    %1633 = vmatpush.bf16.msra.mxu0 %v573
    %1634 = vmatpush.bf16.msra.mxu0 %v565
    %1635 = vmatmul.bf16.gmra.mxu0 %v1521
    %v1636 = vpop.f32.mrf.mxu0
    %v1637 = vadd.f32 0.0, %v1636
    %v1638 = vpop.f32.mrf.mxu0
    %1639 = vdwg.mxu0
    %1640 = vmatpush.bf16.msra.mxu0 %v685
    %1641 = vmatpush.bf16.msra.mxu0 %v677
    %1642 = vmatpush.bf16.msra.mxu0 %v669
    %1643 = vmatpush.bf16.msra.mxu0 %v661
    %1644 = vmatpush.bf16.msra.mxu0 %v653
    %1645 = vmatpush.bf16.msra.mxu0 %v645
    %1646 = vmatpush.bf16.msra.mxu0 %v637
    %1647 = vmatpush.bf16.msra.mxu0 %v629
    %1648 = vmatmul.bf16.gmra.mxu0 %v1522
    %v1649 = vpop.f32.mrf.mxu0
    %v1650 = vadd.f32 %v1637, %v1649
    %v1651 = vpop.f32.mrf.mxu0
    %1652 = vdwg.mxu0
    %1653 = vmatpush.bf16.msra.mxu0 %v622
    %1654 = vmatpush.bf16.msra.mxu0 %v614
    %1655 = vmatpush.bf16.msra.mxu0 %v606
    %1656 = vmatpush.bf16.msra.mxu0 %v598
    %1657 = vmatpush.bf16.msra.mxu0 %v590
    %1658 = vmatpush.bf16.msra.mxu0 %v582
    %1659 = vmatpush.bf16.msra.mxu0 %v574
    %1660 = vmatpush.bf16.msra.mxu0 %v566
    %1661 = vmatmul.bf16.gmra.mxu0 %v1521
    %v1662 = vpop.f32.mrf.mxu0
    %v1663 = vadd.f32 0.0, %v1662
    %v1664 = vpop.f32.mrf.mxu0
    %1665 = vdwg.mxu0
    %1666 = vmatpush.bf16.msra.mxu0 %v686
    %1667 = vmatpush.bf16.msra.mxu0 %v678
    %1668 = vmatpush.bf16.msra.mxu0 %v670
    %1669 = vmatpush.bf16.msra.mxu0 %v662
    %1670 = vmatpush.bf16.msra.mxu0 %v654
    %1671 = vmatpush.bf16.msra.mxu0 %v646
    %1672 = vmatpush.bf16.msra.mxu0 %v638
    %1673 = vmatpush.bf16.msra.mxu0 %v630
    %1674 = vmatmul.bf16.gmra.mxu0 %v1522
    %v1675 = vpop.f32.mrf.mxu0
    %v1676 = vadd.f32 %v1663, %v1675
    %v1677 = vpop.f32.mrf.mxu0
    %1678 = vdwg.mxu0
    %1679 = vmatpush.bf16.msra.mxu0 %v623
    %1680 = vmatpush.bf16.msra.mxu0 %v615
    %1681 = vmatpush.bf16.msra.mxu0 %v607
    %1682 = vmatpush.bf16.msra.mxu0 %v599
    %1683 = vmatpush.bf16.msra.mxu0 %v591
    %1684 = vmatpush.bf16.msra.mxu0 %v583
    %1685 = vmatpush.bf16.msra.mxu0 %v575
    %1686 = vmatpush.bf16.msra.mxu0 %v567
    %1687 = vmatmul.bf16.gmra.mxu0 %v1521
    %v1688 = vpop.f32.mrf.mxu0
    %v1689 = vadd.f32 0.0, %v1688
    %v1690 = vpop.f32.mrf.mxu0
    %1691 = vdwg.mxu0
    %1692 = vmatpush.bf16.msra.mxu0 %v687
    %1693 = vmatpush.bf16.msra.mxu0 %v679
    %1694 = vmatpush.bf16.msra.mxu0 %v671
    %1695 = vmatpush.bf16.msra.mxu0 %v663
    %1696 = vmatpush.bf16.msra.mxu0 %v655
    %1697 = vmatpush.bf16.msra.mxu0 %v647
    %1698 = vmatpush.bf16.msra.mxu0 %v639
    %1699 = vmatpush.bf16.msra.mxu0 %v631
    %1700 = vmatmul.bf16.gmra.mxu0 %v1522
    %v1701 = vpop.f32.mrf.mxu0
    %v1702 = vadd.f32 %v1689, %v1701
    %v1703 = vpop.f32.mrf.mxu0
    %1704 = vdwg.mxu0
    %1705 = vmatpush.bf16.msra.mxu0 %v624
    %1706 = vmatpush.bf16.msra.mxu0 %v616
    %1707 = vmatpush.bf16.msra.mxu0 %v608
    %1708 = vmatpush.bf16.msra.mxu0 %v600
    %1709 = vmatpush.bf16.msra.mxu0 %v592
    %1710 = vmatpush.bf16.msra.mxu0 %v584
    %1711 = vmatpush.bf16.msra.mxu0 %v576
    %1712 = vmatpush.bf16.msra.mxu0 %v568
    %1713 = vmatmul.bf16.gmra.mxu0 %v1521
    %v1714 = vpop.f32.mrf.mxu0
    %v1715 = vadd.f32 0.0, %v1714
    %v1716 = vpop.f32.mrf.mxu0
    %1717 = vdwg.mxu0
    %1718 = vmatpush.bf16.msra.mxu0 %v688
    %1719 = vmatpush.bf16.msra.mxu0 %v680
    %1720 = vmatpush.bf16.msra.mxu0 %v672
    %1721 = vmatpush.bf16.msra.mxu0 %v664
    %1722 = vmatpush.bf16.msra.mxu0 %v656
    %1723 = vmatpush.bf16.msra.mxu0 %v648
    %1724 = vmatpush.bf16.msra.mxu0 %v640
    %1725 = vmatpush.bf16.msra.mxu0 %v632
    %1726 = vmatmul.bf16.gmra.mxu0 %v1522
    %v1727 = vpop.f32.mrf.mxu0
    %v1728 = vadd.f32 %v1715, %v1727
    %v1729 = vpop.f32.mrf.mxu0
    %1730 = vdwg.mxu0
    %v1731 = vadd.f32 %v1513, %v1546
    %v1732 = vadd.f32 %v1514, %v1572
    %v1733 = vadd.f32 %v1515, %v1598
    %v1734 = vadd.f32 %v1516, %v1624
    %v1735 = vadd.f32 %v1517, %v1650
    %v1736 = vadd.f32 %v1518, %v1676
    %v1737 = vadd.f32 %v1519, %v1702
    %v1738 = vadd.f32 %v1520, %v1728
    %v1739 = vxor.u32 %v1731, 2147483648
    %v1740 = vxor.u32 %v1732, 2147483648
    %v1741 = vmul.f32 %v1739, 1.442695
    %v1742 = vpow.pop %v1741
    %v1743 = vmul.f32 %v1740, 1.442695
    %v1744 = vpow.pop %v1743
    %v1745 = vadd.f32 %v1742, 1.0
    %v1746 = vadd.f32 %v1744, 1.0
    %v1747 = vrcp.pop %v1745
    %v1748 = vmul.f32 %v1745, %v1747
    %v1749 = vsub.f32 1.0, %v1748
    %v1750 = vmul.f32 %v1747, %v1749
    %v1751 = vadd.f32 %v1747, %v1750
    %vm1752 = vweird.f32 %v1745
    %vm1753 = vweird.f32 %v1747
    %vm1754 = vmor %vm1752, %vm1753
    %v1755 = vsel %vm1754, %v1747, %v1751
    %v1756 = vand.u32 2147483647, %v1745
    %vm1757 = vcmp.eq.f32.partialorder %v1756, 8.507059e+37
    %v1758 = vand.u32 %v1745, 2147483648
    %v1759 = vor.u32 1.1754944e-38, %v1758
    %v1760 = vsel %vm1757, %v1759, %v1755
    %v1761 = vmul.f32 1.0, %v1760
    %v1762 = vrcp.pop %v1746
    %v1763 = vmul.f32 %v1746, %v1762
    %v1764 = vsub.f32 1.0, %v1763
    %v1765 = vmul.f32 %v1762, %v1764
    %v1766 = vadd.f32 %v1762, %v1765
    %vm1767 = vweird.f32 %v1746
    %vm1768 = vweird.f32 %v1762
    %vm1769 = vmor %vm1767, %vm1768
    %v1770 = vsel %vm1769, %v1762, %v1766
    %v1771 = vand.u32 2147483647, %v1746
    %vm1772 = vcmp.eq.f32.partialorder %v1771, 8.507059e+37
    %v1773 = vand.u32 %v1746, 2147483648
    %v1774 = vor.u32 1.1754944e-38, %v1773
    %v1775 = vsel %vm1772, %v1774, %v1770
    %v1776 = vmul.f32 1.0, %v1775
    %v1777 = vxor.u32 %v1733, 2147483648
    %v1778 = vxor.u32 %v1734, 2147483648
    %v1779 = vmul.f32 %v1777, 1.442695
    %v1780 = vpow.pop %v1779
    %v1781 = vmul.f32 %v1778, 1.442695
    %v1782 = vpow.pop %v1781
    %v1783 = vadd.f32 %v1780, 1.0
    %v1784 = vadd.f32 %v1782, 1.0
    %v1785 = vrcp.pop %v1783
    %v1786 = vmul.f32 %v1783, %v1785
    %v1787 = vsub.f32 1.0, %v1786
    %v1788 = vmul.f32 %v1785, %v1787
    %v1789 = vadd.f32 %v1785, %v1788
    %vm1790 = vweird.f32 %v1783
    %vm1791 = vweird.f32 %v1785
    %vm1792 = vmor %vm1790, %vm1791
    %v1793 = vsel %vm1792, %v1785, %v1789
    %v1794 = vand.u32 2147483647, %v1783
    %vm1795 = vcmp.eq.f32.partialorder %v1794, 8.507059e+37
    %v1796 = vand.u32 %v1783, 2147483648
    %v1797 = vor.u32 1.1754944e-38, %v1796
    %v1798 = vsel %vm1795, %v1797, %v1793
    %v1799 = vmul.f32 1.0, %v1798
    %v1800 = vrcp.pop %v1784
    %v1801 = vmul.f32 %v1784, %v1800
    %v1802 = vsub.f32 1.0, %v1801
    %v1803 = vmul.f32 %v1800, %v1802
    %v1804 = vadd.f32 %v1800, %v1803
    %vm1805 = vweird.f32 %v1784
    %vm1806 = vweird.f32 %v1800
    %vm1807 = vmor %vm1805, %vm1806
    %v1808 = vsel %vm1807, %v1800, %v1804
    %v1809 = vand.u32 2147483647, %v1784
    %vm1810 = vcmp.eq.f32.partialorder %v1809, 8.507059e+37
    %v1811 = vand.u32 %v1784, 2147483648
    %v1812 = vor.u32 1.1754944e-38, %v1811
    %v1813 = vsel %vm1810, %v1812, %v1808
    %v1814 = vmul.f32 1.0, %v1813
    %v1815 = vtanh.pop %v1735
    %v1816 = vtanh.pop %v1736
    %v1817 = vxor.u32 %v1737, 2147483648
    %v1818 = vxor.u32 %v1738, 2147483648
    %v1819 = vmul.f32 %v1817, 1.442695
    %v1820 = vpow.pop %v1819
    %v1821 = vmul.f32 %v1818, 1.442695
    %v1822 = vpow.pop %v1821
    %v1823 = vadd.f32 %v1820, 1.0
    %v1824 = vadd.f32 %v1822, 1.0
    %v1825 = vrcp.pop %v1823
    %v1826 = vmul.f32 %v1823, %v1825
    %v1827 = vsub.f32 1.0, %v1826
    %v1828 = vmul.f32 %v1825, %v1827
    %v1829 = vadd.f32 %v1825, %v1828
    %vm1830 = vweird.f32 %v1823
    %vm1831 = vweird.f32 %v1825
    %vm1832 = vmor %vm1830, %vm1831
    %v1833 = vsel %vm1832, %v1825, %v1829
    %v1834 = vand.u32 2147483647, %v1823
    %vm1835 = vcmp.eq.f32.partialorder %v1834, 8.507059e+37
    %v1836 = vand.u32 %v1823, 2147483648
    %v1837 = vor.u32 1.1754944e-38, %v1836
    %v1838 = vsel %vm1835, %v1837, %v1833
    %v1839 = vmul.f32 1.0, %v1838
    %v1840 = vrcp.pop %v1824
    %v1841 = vmul.f32 %v1824, %v1840
    %v1842 = vsub.f32 1.0, %v1841
    %v1843 = vmul.f32 %v1840, %v1842
    %v1844 = vadd.f32 %v1840, %v1843
    %vm1845 = vweird.f32 %v1824
    %vm1846 = vweird.f32 %v1840
    %vm1847 = vmor %vm1845, %vm1846
    %v1848 = vsel %vm1847, %v1840, %v1844
    %v1849 = vand.u32 2147483647, %v1824
    %vm1850 = vcmp.eq.f32.partialorder %v1849, 8.507059e+37
    %v1851 = vand.u32 %v1824, 2147483648
    %v1852 = vor.u32 1.1754944e-38, %v1851
    %v1853 = vsel %vm1850, %v1852, %v1848
    %v1854 = vmul.f32 1.0, %v1853
    %v1855 = vmul.f32 %v1799, %v1506
    %v1856 = vmul.f32 %v1814, %v1507
    %v1857 = vmul.f32 %v1761, %v1815
    %v1858 = vmul.f32 %v1776, %v1816
    %v1859 = vadd.f32 %v1855, %v1857
    %v1860 = vadd.f32 %v1856, %v1858
    %v1861 = vtanh.pop %v1859
    %v1862 = vtanh.pop %v1860
    %v1863 = vmul.f32 %v1839, %v1861
    %v1864 = vmul.f32 %v1854, %v1862
    %s1865 = scalar_lea.vmem %s0, 192
    %v1866 = vld [vmem:[%s1865] sm:$0xff]
    %v1867 = vld [vmem:[%s1865 + $0x8] sm:$0xff]
    %v1868 = vld [vmem:[%s1865 + $0x10] sm:$0xff]
    %v1869 = vld [vmem:[%s1865 + $0x18] sm:$0xff]
    %v1870 = vld [vmem:[%s1865 + $0x20] sm:$0xff]
    %v1871 = vld [vmem:[%s1865 + $0x28] sm:$0xff]
    %v1872 = vld [vmem:[%s1865 + $0x30] sm:$0xff]
    %v1873 = vld [vmem:[%s1865 + $0x38] sm:$0xff]
    %v1874 = vpack.c.bf16 %v1863, %v1863
    %v1875 = vpack.c.bf16 %v1864, %v1864
    %1876 = vmatpush.bf16.msra.mxu0 %v617
    %1877 = vmatpush.bf16.msra.mxu0 %v609
    %1878 = vmatpush.bf16.msra.mxu0 %v601
    %1879 = vmatpush.bf16.msra.mxu0 %v593
    %1880 = vmatpush.bf16.msra.mxu0 %v585
    %1881 = vmatpush.bf16.msra.mxu0 %v577
    %1882 = vmatpush.bf16.msra.mxu0 %v569
    %1883 = vmatpush.bf16.msra.mxu0 %v561
    %1884 = vmatmul.bf16.gmra.mxu0 %v1874
    %v1885 = vpop.f32.mrf.mxu0
    %v1886 = vadd.f32 0.0, %v1885
    %v1887 = vpop.f32.mrf.mxu0
    %1888 = vdwg.mxu0
    %1889 = vmatpush.bf16.msra.mxu0 %v681
    %1890 = vmatpush.bf16.msra.mxu0 %v673
    %1891 = vmatpush.bf16.msra.mxu0 %v665
    %1892 = vmatpush.bf16.msra.mxu0 %v657
    %1893 = vmatpush.bf16.msra.mxu0 %v649
    %1894 = vmatpush.bf16.msra.mxu0 %v641
    %1895 = vmatpush.bf16.msra.mxu0 %v633
    %1896 = vmatpush.bf16.msra.mxu0 %v625
    %1897 = vmatmul.bf16.gmra.mxu0 %v1875
    %v1898 = vpop.f32.mrf.mxu0
    %v1899 = vadd.f32 %v1886, %v1898
    %v1900 = vpop.f32.mrf.mxu0
    %1901 = vdwg.mxu0
    %1902 = vmatpush.bf16.msra.mxu0 %v618
    %1903 = vmatpush.bf16.msra.mxu0 %v610
    %1904 = vmatpush.bf16.msra.mxu0 %v602
    %1905 = vmatpush.bf16.msra.mxu0 %v594
    %1906 = vmatpush.bf16.msra.mxu0 %v586
    %1907 = vmatpush.bf16.msra.mxu0 %v578
    %1908 = vmatpush.bf16.msra.mxu0 %v570
    %1909 = vmatpush.bf16.msra.mxu0 %v562
    %1910 = vmatmul.bf16.gmra.mxu0 %v1874
    %v1911 = vpop.f32.mrf.mxu0
    %v1912 = vadd.f32 0.0, %v1911
    %v1913 = vpop.f32.mrf.mxu0
    %1914 = vdwg.mxu0
    %1915 = vmatpush.bf16.msra.mxu0 %v682
    %1916 = vmatpush.bf16.msra.mxu0 %v674
    %1917 = vmatpush.bf16.msra.mxu0 %v666
    %1918 = vmatpush.bf16.msra.mxu0 %v658
    %1919 = vmatpush.bf16.msra.mxu0 %v650
    %1920 = vmatpush.bf16.msra.mxu0 %v642
    %1921 = vmatpush.bf16.msra.mxu0 %v634
    %1922 = vmatpush.bf16.msra.mxu0 %v626
    %1923 = vmatmul.bf16.gmra.mxu0 %v1875
    %v1924 = vpop.f32.mrf.mxu0
    %v1925 = vadd.f32 %v1912, %v1924
    %v1926 = vpop.f32.mrf.mxu0
    %1927 = vdwg.mxu0
    %1928 = vmatpush.bf16.msra.mxu0 %v619
    %1929 = vmatpush.bf16.msra.mxu0 %v611
    %1930 = vmatpush.bf16.msra.mxu0 %v603
    %1931 = vmatpush.bf16.msra.mxu0 %v595
    %1932 = vmatpush.bf16.msra.mxu0 %v587
    %1933 = vmatpush.bf16.msra.mxu0 %v579
    %1934 = vmatpush.bf16.msra.mxu0 %v571
    %1935 = vmatpush.bf16.msra.mxu0 %v563
    %1936 = vmatmul.bf16.gmra.mxu0 %v1874
    %v1937 = vpop.f32.mrf.mxu0
    %v1938 = vadd.f32 0.0, %v1937
    %v1939 = vpop.f32.mrf.mxu0
    %1940 = vdwg.mxu0
    %1941 = vmatpush.bf16.msra.mxu0 %v683
    %1942 = vmatpush.bf16.msra.mxu0 %v675
    %1943 = vmatpush.bf16.msra.mxu0 %v667
    %1944 = vmatpush.bf16.msra.mxu0 %v659
    %1945 = vmatpush.bf16.msra.mxu0 %v651
    %1946 = vmatpush.bf16.msra.mxu0 %v643
    %1947 = vmatpush.bf16.msra.mxu0 %v635
    %1948 = vmatpush.bf16.msra.mxu0 %v627
    %1949 = vmatmul.bf16.gmra.mxu0 %v1875
    %v1950 = vpop.f32.mrf.mxu0
    %v1951 = vadd.f32 %v1938, %v1950
    %v1952 = vpop.f32.mrf.mxu0
    %1953 = vdwg.mxu0
    %1954 = vmatpush.bf16.msra.mxu0 %v620
    %1955 = vmatpush.bf16.msra.mxu0 %v612
    %1956 = vmatpush.bf16.msra.mxu0 %v604
    %1957 = vmatpush.bf16.msra.mxu0 %v596
    %1958 = vmatpush.bf16.msra.mxu0 %v588
    %1959 = vmatpush.bf16.msra.mxu0 %v580
    %1960 = vmatpush.bf16.msra.mxu0 %v572
    %1961 = vmatpush.bf16.msra.mxu0 %v564
    %1962 = vmatmul.bf16.gmra.mxu0 %v1874
    %v1963 = vpop.f32.mrf.mxu0
    %v1964 = vadd.f32 0.0, %v1963
    %v1965 = vpop.f32.mrf.mxu0
    %1966 = vdwg.mxu0
    %1967 = vmatpush.bf16.msra.mxu0 %v684
    %1968 = vmatpush.bf16.msra.mxu0 %v676
    %1969 = vmatpush.bf16.msra.mxu0 %v668
    %1970 = vmatpush.bf16.msra.mxu0 %v660
    %1971 = vmatpush.bf16.msra.mxu0 %v652
    %1972 = vmatpush.bf16.msra.mxu0 %v644
    %1973 = vmatpush.bf16.msra.mxu0 %v636
    %1974 = vmatpush.bf16.msra.mxu0 %v628
    %1975 = vmatmul.bf16.gmra.mxu0 %v1875
    %v1976 = vpop.f32.mrf.mxu0
    %v1977 = vadd.f32 %v1964, %v1976
    %v1978 = vpop.f32.mrf.mxu0
    %1979 = vdwg.mxu0
    %1980 = vmatpush.bf16.msra.mxu0 %v621
    %1981 = vmatpush.bf16.msra.mxu0 %v613
    %1982 = vmatpush.bf16.msra.mxu0 %v605
    %1983 = vmatpush.bf16.msra.mxu0 %v597
    %1984 = vmatpush.bf16.msra.mxu0 %v589
    %1985 = vmatpush.bf16.msra.mxu0 %v581
    %1986 = vmatpush.bf16.msra.mxu0 %v573
    %1987 = vmatpush.bf16.msra.mxu0 %v565
    %1988 = vmatmul.bf16.gmra.mxu0 %v1874
    %v1989 = vpop.f32.mrf.mxu0
    %v1990 = vadd.f32 0.0, %v1989
    %v1991 = vpop.f32.mrf.mxu0
    %1992 = vdwg.mxu0
    %1993 = vmatpush.bf16.msra.mxu0 %v685
    %1994 = vmatpush.bf16.msra.mxu0 %v677
    %1995 = vmatpush.bf16.msra.mxu0 %v669
    %1996 = vmatpush.bf16.msra.mxu0 %v661
    %1997 = vmatpush.bf16.msra.mxu0 %v653
    %1998 = vmatpush.bf16.msra.mxu0 %v645
    %1999 = vmatpush.bf16.msra.mxu0 %v637
    %2000 = vmatpush.bf16.msra.mxu0 %v629
    %2001 = vmatmul.bf16.gmra.mxu0 %v1875
    %v2002 = vpop.f32.mrf.mxu0
    %v2003 = vadd.f32 %v1990, %v2002
    %v2004 = vpop.f32.mrf.mxu0
    %2005 = vdwg.mxu0
    %2006 = vmatpush.bf16.msra.mxu0 %v622
    %2007 = vmatpush.bf16.msra.mxu0 %v614
    %2008 = vmatpush.bf16.msra.mxu0 %v606
    %2009 = vmatpush.bf16.msra.mxu0 %v598
    %2010 = vmatpush.bf16.msra.mxu0 %v590
    %2011 = vmatpush.bf16.msra.mxu0 %v582
    %2012 = vmatpush.bf16.msra.mxu0 %v574
    %2013 = vmatpush.bf16.msra.mxu0 %v566
    %2014 = vmatmul.bf16.gmra.mxu0 %v1874
    %v2015 = vpop.f32.mrf.mxu0
    %v2016 = vadd.f32 0.0, %v2015
    %v2017 = vpop.f32.mrf.mxu0
    %2018 = vdwg.mxu0
    %2019 = vmatpush.bf16.msra.mxu0 %v686
    %2020 = vmatpush.bf16.msra.mxu0 %v678
    %2021 = vmatpush.bf16.msra.mxu0 %v670
    %2022 = vmatpush.bf16.msra.mxu0 %v662
    %2023 = vmatpush.bf16.msra.mxu0 %v654
    %2024 = vmatpush.bf16.msra.mxu0 %v646
    %2025 = vmatpush.bf16.msra.mxu0 %v638
    %2026 = vmatpush.bf16.msra.mxu0 %v630
    %2027 = vmatmul.bf16.gmra.mxu0 %v1875
    %v2028 = vpop.f32.mrf.mxu0
    %v2029 = vadd.f32 %v2016, %v2028
    %v2030 = vpop.f32.mrf.mxu0
    %2031 = vdwg.mxu0
    %2032 = vmatpush.bf16.msra.mxu0 %v623
    %2033 = vmatpush.bf16.msra.mxu0 %v615
    %2034 = vmatpush.bf16.msra.mxu0 %v607
    %2035 = vmatpush.bf16.msra.mxu0 %v599
    %2036 = vmatpush.bf16.msra.mxu0 %v591
    %2037 = vmatpush.bf16.msra.mxu0 %v583
    %2038 = vmatpush.bf16.msra.mxu0 %v575
    %2039 = vmatpush.bf16.msra.mxu0 %v567
    %2040 = vmatmul.bf16.gmra.mxu0 %v1874
    %v2041 = vpop.f32.mrf.mxu0
    %v2042 = vadd.f32 0.0, %v2041
    %v2043 = vpop.f32.mrf.mxu0
    %2044 = vdwg.mxu0
    %2045 = vmatpush.bf16.msra.mxu0 %v687
    %2046 = vmatpush.bf16.msra.mxu0 %v679
    %2047 = vmatpush.bf16.msra.mxu0 %v671
    %2048 = vmatpush.bf16.msra.mxu0 %v663
    %2049 = vmatpush.bf16.msra.mxu0 %v655
    %2050 = vmatpush.bf16.msra.mxu0 %v647
    %2051 = vmatpush.bf16.msra.mxu0 %v639
    %2052 = vmatpush.bf16.msra.mxu0 %v631
    %2053 = vmatmul.bf16.gmra.mxu0 %v1875
    %v2054 = vpop.f32.mrf.mxu0
    %v2055 = vadd.f32 %v2042, %v2054
    %v2056 = vpop.f32.mrf.mxu0
    %2057 = vdwg.mxu0
    %2058 = vmatpush.bf16.msra.mxu0 %v624
    %2059 = vmatpush.bf16.msra.mxu0 %v616
    %2060 = vmatpush.bf16.msra.mxu0 %v608
    %2061 = vmatpush.bf16.msra.mxu0 %v600
    %2062 = vmatpush.bf16.msra.mxu0 %v592
    %2063 = vmatpush.bf16.msra.mxu0 %v584
    %2064 = vmatpush.bf16.msra.mxu0 %v576
    %2065 = vmatpush.bf16.msra.mxu0 %v568
    %2066 = vmatmul.bf16.gmra.mxu0 %v1874
    %v2067 = vpop.f32.mrf.mxu0
    %v2068 = vadd.f32 0.0, %v2067
    %v2069 = vpop.f32.mrf.mxu0
    %2070 = vdwg.mxu0
    %2071 = vmatpush.bf16.msra.mxu0 %v688
    %2072 = vmatpush.bf16.msra.mxu0 %v680
    %2073 = vmatpush.bf16.msra.mxu0 %v672
    %2074 = vmatpush.bf16.msra.mxu0 %v664
    %2075 = vmatpush.bf16.msra.mxu0 %v656
    %2076 = vmatpush.bf16.msra.mxu0 %v648
    %2077 = vmatpush.bf16.msra.mxu0 %v640
    %2078 = vmatpush.bf16.msra.mxu0 %v632
    %2079 = vmatmul.bf16.gmra.mxu0 %v1875
    %v2080 = vpop.f32.mrf.mxu0
    %v2081 = vadd.f32 %v2068, %v2080
    %v2082 = vpop.f32.mrf.mxu0
    %2083 = vdwg.mxu0
    %v2084 = vadd.f32 %v1866, %v1899
    %v2085 = vadd.f32 %v1867, %v1925
    %v2086 = vadd.f32 %v1868, %v1951
    %v2087 = vadd.f32 %v1869, %v1977
    %v2088 = vadd.f32 %v1870, %v2003
    %v2089 = vadd.f32 %v1871, %v2029
    %v2090 = vadd.f32 %v1872, %v2055
    %v2091 = vadd.f32 %v1873, %v2081
    %v2092 = vxor.u32 %v2084, 2147483648
    %v2093 = vxor.u32 %v2085, 2147483648
    %v2094 = vmul.f32 %v2092, 1.442695
    %v2095 = vpow.pop %v2094
    %v2096 = vmul.f32 %v2093, 1.442695
    %v2097 = vpow.pop %v2096
    %v2098 = vadd.f32 %v2095, 1.0
    %v2099 = vadd.f32 %v2097, 1.0
    %v2100 = vrcp.pop %v2098
    %v2101 = vmul.f32 %v2098, %v2100
    %v2102 = vsub.f32 1.0, %v2101
    %v2103 = vmul.f32 %v2100, %v2102
    %v2104 = vadd.f32 %v2100, %v2103
    %vm2105 = vweird.f32 %v2098
    %vm2106 = vweird.f32 %v2100
    %vm2107 = vmor %vm2105, %vm2106
    %v2108 = vsel %vm2107, %v2100, %v2104
    %v2109 = vand.u32 2147483647, %v2098
    %vm2110 = vcmp.eq.f32.partialorder %v2109, 8.507059e+37
    %v2111 = vand.u32 %v2098, 2147483648
    %v2112 = vor.u32 1.1754944e-38, %v2111
    %v2113 = vsel %vm2110, %v2112, %v2108
    %v2114 = vmul.f32 1.0, %v2113
    %v2115 = vrcp.pop %v2099
    %v2116 = vmul.f32 %v2099, %v2115
    %v2117 = vsub.f32 1.0, %v2116
    %v2118 = vmul.f32 %v2115, %v2117
    %v2119 = vadd.f32 %v2115, %v2118
    %vm2120 = vweird.f32 %v2099
    %vm2121 = vweird.f32 %v2115
    %vm2122 = vmor %vm2120, %vm2121
    %v2123 = vsel %vm2122, %v2115, %v2119
    %v2124 = vand.u32 2147483647, %v2099
    %vm2125 = vcmp.eq.f32.partialorder %v2124, 8.507059e+37
    %v2126 = vand.u32 %v2099, 2147483648
    %v2127 = vor.u32 1.1754944e-38, %v2126
    %v2128 = vsel %vm2125, %v2127, %v2123
    %v2129 = vmul.f32 1.0, %v2128
    %v2130 = vxor.u32 %v2086, 2147483648
    %v2131 = vxor.u32 %v2087, 2147483648
    %v2132 = vmul.f32 %v2130, 1.442695
    %v2133 = vpow.pop %v2132
    %v2134 = vmul.f32 %v2131, 1.442695
    %v2135 = vpow.pop %v2134
    %v2136 = vadd.f32 %v2133, 1.0
    %v2137 = vadd.f32 %v2135, 1.0
    %v2138 = vrcp.pop %v2136
    %v2139 = vmul.f32 %v2136, %v2138
    %v2140 = vsub.f32 1.0, %v2139
    %v2141 = vmul.f32 %v2138, %v2140
    %v2142 = vadd.f32 %v2138, %v2141
    %vm2143 = vweird.f32 %v2136
    %vm2144 = vweird.f32 %v2138
    %vm2145 = vmor %vm2143, %vm2144
    %v2146 = vsel %vm2145, %v2138, %v2142
    %v2147 = vand.u32 2147483647, %v2136
    %vm2148 = vcmp.eq.f32.partialorder %v2147, 8.507059e+37
    %v2149 = vand.u32 %v2136, 2147483648
    %v2150 = vor.u32 1.1754944e-38, %v2149
    %v2151 = vsel %vm2148, %v2150, %v2146
    %v2152 = vmul.f32 1.0, %v2151
    %v2153 = vrcp.pop %v2137
    %v2154 = vmul.f32 %v2137, %v2153
    %v2155 = vsub.f32 1.0, %v2154
    %v2156 = vmul.f32 %v2153, %v2155
    %v2157 = vadd.f32 %v2153, %v2156
    %vm2158 = vweird.f32 %v2137
    %vm2159 = vweird.f32 %v2153
    %vm2160 = vmor %vm2158, %vm2159
    %v2161 = vsel %vm2160, %v2153, %v2157
    %v2162 = vand.u32 2147483647, %v2137
    %vm2163 = vcmp.eq.f32.partialorder %v2162, 8.507059e+37
    %v2164 = vand.u32 %v2137, 2147483648
    %v2165 = vor.u32 1.1754944e-38, %v2164
    %v2166 = vsel %vm2163, %v2165, %v2161
    %v2167 = vmul.f32 1.0, %v2166
    %v2168 = vtanh.pop %v2088
    %v2169 = vtanh.pop %v2089
    %v2170 = vxor.u32 %v2090, 2147483648
    %v2171 = vxor.u32 %v2091, 2147483648
    %v2172 = vmul.f32 %v2170, 1.442695
    %v2173 = vpow.pop %v2172
    %v2174 = vmul.f32 %v2171, 1.442695
    %v2175 = vpow.pop %v2174
    %v2176 = vadd.f32 %v2173, 1.0
    %v2177 = vadd.f32 %v2175, 1.0
    %v2178 = vrcp.pop %v2176
    %v2179 = vmul.f32 %v2176, %v2178
    %v2180 = vsub.f32 1.0, %v2179
    %v2181 = vmul.f32 %v2178, %v2180
    %v2182 = vadd.f32 %v2178, %v2181
    %vm2183 = vweird.f32 %v2176
    %vm2184 = vweird.f32 %v2178
    %vm2185 = vmor %vm2183, %vm2184
    %v2186 = vsel %vm2185, %v2178, %v2182
    %v2187 = vand.u32 2147483647, %v2176
    %vm2188 = vcmp.eq.f32.partialorder %v2187, 8.507059e+37
    %v2189 = vand.u32 %v2176, 2147483648
    %v2190 = vor.u32 1.1754944e-38, %v2189
    %v2191 = vsel %vm2188, %v2190, %v2186
    %v2192 = vmul.f32 1.0, %v2191
    %v2193 = vrcp.pop %v2177
    %v2194 = vmul.f32 %v2177, %v2193
    %v2195 = vsub.f32 1.0, %v2194
    %v2196 = vmul.f32 %v2193, %v2195
    %v2197 = vadd.f32 %v2193, %v2196
    %vm2198 = vweird.f32 %v2177
    %vm2199 = vweird.f32 %v2193
    %vm2200 = vmor %vm2198, %vm2199
    %v2201 = vsel %vm2200, %v2193, %v2197
    %v2202 = vand.u32 2147483647, %v2177
    %vm2203 = vcmp.eq.f32.partialorder %v2202, 8.507059e+37
    %v2204 = vand.u32 %v2177, 2147483648
    %v2205 = vor.u32 1.1754944e-38, %v2204
    %v2206 = vsel %vm2203, %v2205, %v2201
    %v2207 = vmul.f32 1.0, %v2206
    %v2208 = vmul.f32 %v2152, %v1859
    %v2209 = vmul.f32 %v2167, %v1860
    %v2210 = vmul.f32 %v2114, %v2168
    %v2211 = vmul.f32 %v2129, %v2169
    %v2212 = vadd.f32 %v2208, %v2210
    %v2213 = vadd.f32 %v2209, %v2211
    %v2214 = vtanh.pop %v2212
    %v2215 = vtanh.pop %v2213
    %v2216 = vmul.f32 %v2192, %v2214
    %v2217 = vmul.f32 %v2207, %v2215
    %s2218 = scalar_lea.vmem %s0, 256
    %v2219 = vld [vmem:[%s2218] sm:$0xff]
    %v2220 = vld [vmem:[%s2218 + $0x8] sm:$0xff]
    %v2221 = vld [vmem:[%s2218 + $0x10] sm:$0xff]
    %v2222 = vld [vmem:[%s2218 + $0x18] sm:$0xff]
    %v2223 = vld [vmem:[%s2218 + $0x20] sm:$0xff]
    %v2224 = vld [vmem:[%s2218 + $0x28] sm:$0xff]
    %v2225 = vld [vmem:[%s2218 + $0x30] sm:$0xff]
    %v2226 = vld [vmem:[%s2218 + $0x38] sm:$0xff]
    %v2227 = vpack.c.bf16 %v2216, %v2216
    %v2228 = vpack.c.bf16 %v2217, %v2217
    %2229 = vmatpush.bf16.msra.mxu0 %v617
    %2230 = vmatpush.bf16.msra.mxu0 %v609
    %2231 = vmatpush.bf16.msra.mxu0 %v601
    %2232 = vmatpush.bf16.msra.mxu0 %v593
    %2233 = vmatpush.bf16.msra.mxu0 %v585
    %2234 = vmatpush.bf16.msra.mxu0 %v577
    %2235 = vmatpush.bf16.msra.mxu0 %v569
    %2236 = vmatpush.bf16.msra.mxu0 %v561
    %2237 = vmatmul.bf16.gmra.mxu0 %v2227
    %v2238 = vpop.f32.mrf.mxu0
    %v2239 = vadd.f32 0.0, %v2238
    %v2240 = vpop.f32.mrf.mxu0
    %2241 = vdwg.mxu0
    %2242 = vmatpush.bf16.msra.mxu0 %v681
    %2243 = vmatpush.bf16.msra.mxu0 %v673
    %2244 = vmatpush.bf16.msra.mxu0 %v665
    %2245 = vmatpush.bf16.msra.mxu0 %v657
    %2246 = vmatpush.bf16.msra.mxu0 %v649
    %2247 = vmatpush.bf16.msra.mxu0 %v641
    %2248 = vmatpush.bf16.msra.mxu0 %v633
    %2249 = vmatpush.bf16.msra.mxu0 %v625
    %2250 = vmatmul.bf16.gmra.mxu0 %v2228
    %v2251 = vpop.f32.mrf.mxu0
    %v2252 = vadd.f32 %v2239, %v2251
    %v2253 = vpop.f32.mrf.mxu0
    %2254 = vdwg.mxu0
    %2255 = vmatpush.bf16.msra.mxu0 %v618
    %2256 = vmatpush.bf16.msra.mxu0 %v610
    %2257 = vmatpush.bf16.msra.mxu0 %v602
    %2258 = vmatpush.bf16.msra.mxu0 %v594
    %2259 = vmatpush.bf16.msra.mxu0 %v586
    %2260 = vmatpush.bf16.msra.mxu0 %v578
    %2261 = vmatpush.bf16.msra.mxu0 %v570
    %2262 = vmatpush.bf16.msra.mxu0 %v562
    %2263 = vmatmul.bf16.gmra.mxu0 %v2227
    %v2264 = vpop.f32.mrf.mxu0
    %v2265 = vadd.f32 0.0, %v2264
    %v2266 = vpop.f32.mrf.mxu0
    %2267 = vdwg.mxu0
    %2268 = vmatpush.bf16.msra.mxu0 %v682
    %2269 = vmatpush.bf16.msra.mxu0 %v674
    %2270 = vmatpush.bf16.msra.mxu0 %v666
    %2271 = vmatpush.bf16.msra.mxu0 %v658
    %2272 = vmatpush.bf16.msra.mxu0 %v650
    %2273 = vmatpush.bf16.msra.mxu0 %v642
    %2274 = vmatpush.bf16.msra.mxu0 %v634
    %2275 = vmatpush.bf16.msra.mxu0 %v626
    %2276 = vmatmul.bf16.gmra.mxu0 %v2228
    %v2277 = vpop.f32.mrf.mxu0
    %v2278 = vadd.f32 %v2265, %v2277
    %v2279 = vpop.f32.mrf.mxu0
    %2280 = vdwg.mxu0
    %2281 = vmatpush.bf16.msra.mxu0 %v619
    %2282 = vmatpush.bf16.msra.mxu0 %v611
    %2283 = vmatpush.bf16.msra.mxu0 %v603
    %2284 = vmatpush.bf16.msra.mxu0 %v595
    %2285 = vmatpush.bf16.msra.mxu0 %v587
    %2286 = vmatpush.bf16.msra.mxu0 %v579
    %2287 = vmatpush.bf16.msra.mxu0 %v571
    %2288 = vmatpush.bf16.msra.mxu0 %v563
    %2289 = vmatmul.bf16.gmra.mxu0 %v2227
    %v2290 = vpop.f32.mrf.mxu0
    %v2291 = vadd.f32 0.0, %v2290
    %v2292 = vpop.f32.mrf.mxu0
    %2293 = vdwg.mxu0
    %2294 = vmatpush.bf16.msra.mxu0 %v683
    %2295 = vmatpush.bf16.msra.mxu0 %v675
    %2296 = vmatpush.bf16.msra.mxu0 %v667
    %2297 = vmatpush.bf16.msra.mxu0 %v659
    %2298 = vmatpush.bf16.msra.mxu0 %v651
    %2299 = vmatpush.bf16.msra.mxu0 %v643
    %2300 = vmatpush.bf16.msra.mxu0 %v635
    %2301 = vmatpush.bf16.msra.mxu0 %v627
    %2302 = vmatmul.bf16.gmra.mxu0 %v2228
    %v2303 = vpop.f32.mrf.mxu0
    %v2304 = vadd.f32 %v2291, %v2303
    %v2305 = vpop.f32.mrf.mxu0
    %2306 = vdwg.mxu0
    %2307 = vmatpush.bf16.msra.mxu0 %v620
    %2308 = vmatpush.bf16.msra.mxu0 %v612
    %2309 = vmatpush.bf16.msra.mxu0 %v604
    %2310 = vmatpush.bf16.msra.mxu0 %v596
    %2311 = vmatpush.bf16.msra.mxu0 %v588
    %2312 = vmatpush.bf16.msra.mxu0 %v580
    %2313 = vmatpush.bf16.msra.mxu0 %v572
    %2314 = vmatpush.bf16.msra.mxu0 %v564
    %2315 = vmatmul.bf16.gmra.mxu0 %v2227
    %v2316 = vpop.f32.mrf.mxu0
    %v2317 = vadd.f32 0.0, %v2316
    %v2318 = vpop.f32.mrf.mxu0
    %2319 = vdwg.mxu0
    %2320 = vmatpush.bf16.msra.mxu0 %v684
    %2321 = vmatpush.bf16.msra.mxu0 %v676
    %2322 = vmatpush.bf16.msra.mxu0 %v668
    %2323 = vmatpush.bf16.msra.mxu0 %v660
    %2324 = vmatpush.bf16.msra.mxu0 %v652
    %2325 = vmatpush.bf16.msra.mxu0 %v644
    %2326 = vmatpush.bf16.msra.mxu0 %v636
    %2327 = vmatpush.bf16.msra.mxu0 %v628
    %2328 = vmatmul.bf16.gmra.mxu0 %v2228
    %v2329 = vpop.f32.mrf.mxu0
    %v2330 = vadd.f32 %v2317, %v2329
    %v2331 = vpop.f32.mrf.mxu0
    %2332 = vdwg.mxu0
    %2333 = vmatpush.bf16.msra.mxu0 %v621
    %2334 = vmatpush.bf16.msra.mxu0 %v613
    %2335 = vmatpush.bf16.msra.mxu0 %v605
    %2336 = vmatpush.bf16.msra.mxu0 %v597
    %2337 = vmatpush.bf16.msra.mxu0 %v589
    %2338 = vmatpush.bf16.msra.mxu0 %v581
    %2339 = vmatpush.bf16.msra.mxu0 %v573
    %2340 = vmatpush.bf16.msra.mxu0 %v565
    %2341 = vmatmul.bf16.gmra.mxu0 %v2227
    %v2342 = vpop.f32.mrf.mxu0
    %v2343 = vadd.f32 0.0, %v2342
    %v2344 = vpop.f32.mrf.mxu0
    %2345 = vdwg.mxu0
    %2346 = vmatpush.bf16.msra.mxu0 %v685
    %2347 = vmatpush.bf16.msra.mxu0 %v677
    %2348 = vmatpush.bf16.msra.mxu0 %v669
    %2349 = vmatpush.bf16.msra.mxu0 %v661
    %2350 = vmatpush.bf16.msra.mxu0 %v653
    %2351 = vmatpush.bf16.msra.mxu0 %v645
    %2352 = vmatpush.bf16.msra.mxu0 %v637
    %2353 = vmatpush.bf16.msra.mxu0 %v629
    %2354 = vmatmul.bf16.gmra.mxu0 %v2228
    %v2355 = vpop.f32.mrf.mxu0
    %v2356 = vadd.f32 %v2343, %v2355
    %v2357 = vpop.f32.mrf.mxu0
    %2358 = vdwg.mxu0
    %2359 = vmatpush.bf16.msra.mxu0 %v622
    %2360 = vmatpush.bf16.msra.mxu0 %v614
    %2361 = vmatpush.bf16.msra.mxu0 %v606
    %2362 = vmatpush.bf16.msra.mxu0 %v598
    %2363 = vmatpush.bf16.msra.mxu0 %v590
    %2364 = vmatpush.bf16.msra.mxu0 %v582
    %2365 = vmatpush.bf16.msra.mxu0 %v574
    %2366 = vmatpush.bf16.msra.mxu0 %v566
    %2367 = vmatmul.bf16.gmra.mxu0 %v2227
    %v2368 = vpop.f32.mrf.mxu0
    %v2369 = vadd.f32 0.0, %v2368
    %v2370 = vpop.f32.mrf.mxu0
    %2371 = vdwg.mxu0
    %2372 = vmatpush.bf16.msra.mxu0 %v686
    %2373 = vmatpush.bf16.msra.mxu0 %v678
    %2374 = vmatpush.bf16.msra.mxu0 %v670
    %2375 = vmatpush.bf16.msra.mxu0 %v662
    %2376 = vmatpush.bf16.msra.mxu0 %v654
    %2377 = vmatpush.bf16.msra.mxu0 %v646
    %2378 = vmatpush.bf16.msra.mxu0 %v638
    %2379 = vmatpush.bf16.msra.mxu0 %v630
    %2380 = vmatmul.bf16.gmra.mxu0 %v2228
    %v2381 = vpop.f32.mrf.mxu0
    %v2382 = vadd.f32 %v2369, %v2381
    %v2383 = vpop.f32.mrf.mxu0
    %2384 = vdwg.mxu0
    %2385 = vmatpush.bf16.msra.mxu0 %v623
    %2386 = vmatpush.bf16.msra.mxu0 %v615
    %2387 = vmatpush.bf16.msra.mxu0 %v607
    %2388 = vmatpush.bf16.msra.mxu0 %v599
    %2389 = vmatpush.bf16.msra.mxu0 %v591
    %2390 = vmatpush.bf16.msra.mxu0 %v583
    %2391 = vmatpush.bf16.msra.mxu0 %v575
    %2392 = vmatpush.bf16.msra.mxu0 %v567
    %2393 = vmatmul.bf16.gmra.mxu0 %v2227
    %v2394 = vpop.f32.mrf.mxu0
    %v2395 = vadd.f32 0.0, %v2394
    %v2396 = vpop.f32.mrf.mxu0
    %2397 = vdwg.mxu0
    %2398 = vmatpush.bf16.msra.mxu0 %v687
    %2399 = vmatpush.bf16.msra.mxu0 %v679
    %2400 = vmatpush.bf16.msra.mxu0 %v671
    %2401 = vmatpush.bf16.msra.mxu0 %v663
    %2402 = vmatpush.bf16.msra.mxu0 %v655
    %2403 = vmatpush.bf16.msra.mxu0 %v647
    %2404 = vmatpush.bf16.msra.mxu0 %v639
    %2405 = vmatpush.bf16.msra.mxu0 %v631
    %2406 = vmatmul.bf16.gmra.mxu0 %v2228
    %v2407 = vpop.f32.mrf.mxu0
    %v2408 = vadd.f32 %v2395, %v2407
    %v2409 = vpop.f32.mrf.mxu0
    %2410 = vdwg.mxu0
    %2411 = vmatpush.bf16.msra.mxu0 %v624
    %2412 = vmatpush.bf16.msra.mxu0 %v616
    %2413 = vmatpush.bf16.msra.mxu0 %v608
    %2414 = vmatpush.bf16.msra.mxu0 %v600
    %2415 = vmatpush.bf16.msra.mxu0 %v592
    %2416 = vmatpush.bf16.msra.mxu0 %v584
    %2417 = vmatpush.bf16.msra.mxu0 %v576
    %2418 = vmatpush.bf16.msra.mxu0 %v568
    %2419 = vmatmul.bf16.gmra.mxu0 %v2227
    %v2420 = vpop.f32.mrf.mxu0
    %v2421 = vadd.f32 0.0, %v2420
    %v2422 = vpop.f32.mrf.mxu0
    %2423 = vdwg.mxu0
    %2424 = vmatpush.bf16.msra.mxu0 %v688
    %2425 = vmatpush.bf16.msra.mxu0 %v680
    %2426 = vmatpush.bf16.msra.mxu0 %v672
    %2427 = vmatpush.bf16.msra.mxu0 %v664
    %2428 = vmatpush.bf16.msra.mxu0 %v656
    %2429 = vmatpush.bf16.msra.mxu0 %v648
    %2430 = vmatpush.bf16.msra.mxu0 %v640
    %2431 = vmatpush.bf16.msra.mxu0 %v632
    %2432 = vmatmul.bf16.gmra.mxu0 %v2228
    %v2433 = vpop.f32.mrf.mxu0
    %v2434 = vadd.f32 %v2421, %v2433
    %v2435 = vpop.f32.mrf.mxu0
    %2436 = vdwg.mxu0
    %v2437 = vadd.f32 %v2219, %v2252
    %v2438 = vadd.f32 %v2220, %v2278
    %v2439 = vadd.f32 %v2221, %v2304
    %v2440 = vadd.f32 %v2222, %v2330
    %v2441 = vadd.f32 %v2223, %v2356
    %v2442 = vadd.f32 %v2224, %v2382
    %v2443 = vadd.f32 %v2225, %v2408
    %v2444 = vadd.f32 %v2226, %v2434
    %v2445 = vxor.u32 %v2437, 2147483648
    %v2446 = vxor.u32 %v2438, 2147483648
    %v2447 = vmul.f32 %v2445, 1.442695
    %v2448 = vpow.pop %v2447
    %v2449 = vmul.f32 %v2446, 1.442695
    %v2450 = vpow.pop %v2449
    %v2451 = vadd.f32 %v2448, 1.0
    %v2452 = vadd.f32 %v2450, 1.0
    %v2453 = vrcp.pop %v2451
    %v2454 = vmul.f32 %v2451, %v2453
    %v2455 = vsub.f32 1.0, %v2454
    %v2456 = vmul.f32 %v2453, %v2455
    %v2457 = vadd.f32 %v2453, %v2456
    %vm2458 = vweird.f32 %v2451
    %vm2459 = vweird.f32 %v2453
    %vm2460 = vmor %vm2458, %vm2459
    %v2461 = vsel %vm2460, %v2453, %v2457
    %v2462 = vand.u32 2147483647, %v2451
    %vm2463 = vcmp.eq.f32.partialorder %v2462, 8.507059e+37
    %v2464 = vand.u32 %v2451, 2147483648
    %v2465 = vor.u32 1.1754944e-38, %v2464
    %v2466 = vsel %vm2463, %v2465, %v2461
    %v2467 = vmul.f32 1.0, %v2466
    %v2468 = vrcp.pop %v2452
    %v2469 = vmul.f32 %v2452, %v2468
    %v2470 = vsub.f32 1.0, %v2469
    %v2471 = vmul.f32 %v2468, %v2470
    %v2472 = vadd.f32 %v2468, %v2471
    %vm2473 = vweird.f32 %v2452
    %vm2474 = vweird.f32 %v2468
    %vm2475 = vmor %vm2473, %vm2474
    %v2476 = vsel %vm2475, %v2468, %v2472
    %v2477 = vand.u32 2147483647, %v2452
    %vm2478 = vcmp.eq.f32.partialorder %v2477, 8.507059e+37
    %v2479 = vand.u32 %v2452, 2147483648
    %v2480 = vor.u32 1.1754944e-38, %v2479
    %v2481 = vsel %vm2478, %v2480, %v2476
    %v2482 = vmul.f32 1.0, %v2481
    %v2483 = vxor.u32 %v2439, 2147483648
    %v2484 = vxor.u32 %v2440, 2147483648
    %v2485 = vmul.f32 %v2483, 1.442695
    %v2486 = vpow.pop %v2485
    %v2487 = vmul.f32 %v2484, 1.442695
    %v2488 = vpow.pop %v2487
    %v2489 = vadd.f32 %v2486, 1.0
    %v2490 = vadd.f32 %v2488, 1.0
    %v2491 = vrcp.pop %v2489
    %v2492 = vmul.f32 %v2489, %v2491
    %v2493 = vsub.f32 1.0, %v2492
    %v2494 = vmul.f32 %v2491, %v2493
    %v2495 = vadd.f32 %v2491, %v2494
    %vm2496 = vweird.f32 %v2489
    %vm2497 = vweird.f32 %v2491
    %vm2498 = vmor %vm2496, %vm2497
    %v2499 = vsel %vm2498, %v2491, %v2495
    %v2500 = vand.u32 2147483647, %v2489
    %vm2501 = vcmp.eq.f32.partialorder %v2500, 8.507059e+37
    %v2502 = vand.u32 %v2489, 2147483648
    %v2503 = vor.u32 1.1754944e-38, %v2502
    %v2504 = vsel %vm2501, %v2503, %v2499
    %v2505 = vmul.f32 1.0, %v2504
    %v2506 = vrcp.pop %v2490
    %v2507 = vmul.f32 %v2490, %v2506
    %v2508 = vsub.f32 1.0, %v2507
    %v2509 = vmul.f32 %v2506, %v2508
    %v2510 = vadd.f32 %v2506, %v2509
    %vm2511 = vweird.f32 %v2490
    %vm2512 = vweird.f32 %v2506
    %vm2513 = vmor %vm2511, %vm2512
    %v2514 = vsel %vm2513, %v2506, %v2510
    %v2515 = vand.u32 2147483647, %v2490
    %vm2516 = vcmp.eq.f32.partialorder %v2515, 8.507059e+37
    %v2517 = vand.u32 %v2490, 2147483648
    %v2518 = vor.u32 1.1754944e-38, %v2517
    %v2519 = vsel %vm2516, %v2518, %v2514
    %v2520 = vmul.f32 1.0, %v2519
    %v2521 = vtanh.pop %v2441
    %v2522 = vtanh.pop %v2442
    %v2523 = vxor.u32 %v2443, 2147483648
    %v2524 = vxor.u32 %v2444, 2147483648
    %v2525 = vmul.f32 %v2523, 1.442695
    %v2526 = vpow.pop %v2525
    %v2527 = vmul.f32 %v2524, 1.442695
    %v2528 = vpow.pop %v2527
    %v2529 = vadd.f32 %v2526, 1.0
    %v2530 = vadd.f32 %v2528, 1.0
    %v2531 = vrcp.pop %v2529
    %v2532 = vmul.f32 %v2529, %v2531
    %v2533 = vsub.f32 1.0, %v2532
    %v2534 = vmul.f32 %v2531, %v2533
    %v2535 = vadd.f32 %v2531, %v2534
    %vm2536 = vweird.f32 %v2529
    %vm2537 = vweird.f32 %v2531
    %vm2538 = vmor %vm2536, %vm2537
    %v2539 = vsel %vm2538, %v2531, %v2535
    %v2540 = vand.u32 2147483647, %v2529
    %vm2541 = vcmp.eq.f32.partialorder %v2540, 8.507059e+37
    %v2542 = vand.u32 %v2529, 2147483648
    %v2543 = vor.u32 1.1754944e-38, %v2542
    %v2544 = vsel %vm2541, %v2543, %v2539
    %v2545 = vmul.f32 1.0, %v2544
    %v2546 = vrcp.pop %v2530
    %v2547 = vmul.f32 %v2530, %v2546
    %v2548 = vsub.f32 1.0, %v2547
    %v2549 = vmul.f32 %v2546, %v2548
    %v2550 = vadd.f32 %v2546, %v2549
    %vm2551 = vweird.f32 %v2530
    %vm2552 = vweird.f32 %v2546
    %vm2553 = vmor %vm2551, %vm2552
    %v2554 = vsel %vm2553, %v2546, %v2550
    %v2555 = vand.u32 2147483647, %v2530
    %vm2556 = vcmp.eq.f32.partialorder %v2555, 8.507059e+37
    %v2557 = vand.u32 %v2530, 2147483648
    %v2558 = vor.u32 1.1754944e-38, %v2557
    %v2559 = vsel %vm2556, %v2558, %v2554
    %v2560 = vmul.f32 1.0, %v2559
    %v2561 = vmul.f32 %v2505, %v2212
    %v2562 = vmul.f32 %v2520, %v2213
    %v2563 = vmul.f32 %v2467, %v2521
    %v2564 = vmul.f32 %v2482, %v2522
    %v2565 = vadd.f32 %v2561, %v2563
    %v2566 = vadd.f32 %v2562, %v2564
    %v2567 = vtanh.pop %v2565
    %v2568 = vtanh.pop %v2566
    %v2569 = vmul.f32 %v2545, %v2567
    %v2570 = vmul.f32 %v2560, %v2568
    %s2571 = scalar_lea.vmem %s0, 320
    %v2572 = vld [vmem:[%s2571] sm:$0xff]
    %v2573 = vld [vmem:[%s2571 + $0x8] sm:$0xff]
    %v2574 = vld [vmem:[%s2571 + $0x10] sm:$0xff]
    %v2575 = vld [vmem:[%s2571 + $0x18] sm:$0xff]
    %v2576 = vld [vmem:[%s2571 + $0x20] sm:$0xff]
    %v2577 = vld [vmem:[%s2571 + $0x28] sm:$0xff]
    %v2578 = vld [vmem:[%s2571 + $0x30] sm:$0xff]
    %v2579 = vld [vmem:[%s2571 + $0x38] sm:$0xff]
    %v2580 = vpack.c.bf16 %v2569, %v2569
    %v2581 = vpack.c.bf16 %v2570, %v2570
    %2582 = vmatpush.bf16.msra.mxu0 %v617
    %2583 = vmatpush.bf16.msra.mxu0 %v609
    %2584 = vmatpush.bf16.msra.mxu0 %v601
    %2585 = vmatpush.bf16.msra.mxu0 %v593
    %2586 = vmatpush.bf16.msra.mxu0 %v585
    %2587 = vmatpush.bf16.msra.mxu0 %v577
    %2588 = vmatpush.bf16.msra.mxu0 %v569
    %2589 = vmatpush.bf16.msra.mxu0 %v561
    %2590 = vmatmul.bf16.gmra.mxu0 %v2580
    %v2591 = vpop.f32.mrf.mxu0
    %v2592 = vadd.f32 0.0, %v2591
    %v2593 = vpop.f32.mrf.mxu0
    %2594 = vdwg.mxu0
    %2595 = vmatpush.bf16.msra.mxu0 %v681
    %2596 = vmatpush.bf16.msra.mxu0 %v673
    %2597 = vmatpush.bf16.msra.mxu0 %v665
    %2598 = vmatpush.bf16.msra.mxu0 %v657
    %2599 = vmatpush.bf16.msra.mxu0 %v649
    %2600 = vmatpush.bf16.msra.mxu0 %v641
    %2601 = vmatpush.bf16.msra.mxu0 %v633
    %2602 = vmatpush.bf16.msra.mxu0 %v625
    %2603 = vmatmul.bf16.gmra.mxu0 %v2581
    %v2604 = vpop.f32.mrf.mxu0
    %v2605 = vadd.f32 %v2592, %v2604
    %v2606 = vpop.f32.mrf.mxu0
    %2607 = vdwg.mxu0
    %2608 = vmatpush.bf16.msra.mxu0 %v618
    %2609 = vmatpush.bf16.msra.mxu0 %v610
    %2610 = vmatpush.bf16.msra.mxu0 %v602
    %2611 = vmatpush.bf16.msra.mxu0 %v594
    %2612 = vmatpush.bf16.msra.mxu0 %v586
    %2613 = vmatpush.bf16.msra.mxu0 %v578
    %2614 = vmatpush.bf16.msra.mxu0 %v570
    %2615 = vmatpush.bf16.msra.mxu0 %v562
    %2616 = vmatmul.bf16.gmra.mxu0 %v2580
    %v2617 = vpop.f32.mrf.mxu0
    %v2618 = vadd.f32 0.0, %v2617
    %v2619 = vpop.f32.mrf.mxu0
    %2620 = vdwg.mxu0
    %2621 = vmatpush.bf16.msra.mxu0 %v682
    %2622 = vmatpush.bf16.msra.mxu0 %v674
    %2623 = vmatpush.bf16.msra.mxu0 %v666
    %2624 = vmatpush.bf16.msra.mxu0 %v658
    %2625 = vmatpush.bf16.msra.mxu0 %v650
    %2626 = vmatpush.bf16.msra.mxu0 %v642
    %2627 = vmatpush.bf16.msra.mxu0 %v634
    %2628 = vmatpush.bf16.msra.mxu0 %v626
    %2629 = vmatmul.bf16.gmra.mxu0 %v2581
    %v2630 = vpop.f32.mrf.mxu0
    %v2631 = vadd.f32 %v2618, %v2630
    %v2632 = vpop.f32.mrf.mxu0
    %2633 = vdwg.mxu0
    %2634 = vmatpush.bf16.msra.mxu0 %v619
    %2635 = vmatpush.bf16.msra.mxu0 %v611
    %2636 = vmatpush.bf16.msra.mxu0 %v603
    %2637 = vmatpush.bf16.msra.mxu0 %v595
    %2638 = vmatpush.bf16.msra.mxu0 %v587
    %2639 = vmatpush.bf16.msra.mxu0 %v579
    %2640 = vmatpush.bf16.msra.mxu0 %v571
    %2641 = vmatpush.bf16.msra.mxu0 %v563
    %2642 = vmatmul.bf16.gmra.mxu0 %v2580
    %v2643 = vpop.f32.mrf.mxu0
    %v2644 = vadd.f32 0.0, %v2643
    %v2645 = vpop.f32.mrf.mxu0
    %2646 = vdwg.mxu0
    %2647 = vmatpush.bf16.msra.mxu0 %v683
    %2648 = vmatpush.bf16.msra.mxu0 %v675
    %2649 = vmatpush.bf16.msra.mxu0 %v667
    %2650 = vmatpush.bf16.msra.mxu0 %v659
    %2651 = vmatpush.bf16.msra.mxu0 %v651
    %2652 = vmatpush.bf16.msra.mxu0 %v643
    %2653 = vmatpush.bf16.msra.mxu0 %v635
    %2654 = vmatpush.bf16.msra.mxu0 %v627
    %2655 = vmatmul.bf16.gmra.mxu0 %v2581
    %v2656 = vpop.f32.mrf.mxu0
    %v2657 = vadd.f32 %v2644, %v2656
    %v2658 = vpop.f32.mrf.mxu0
    %2659 = vdwg.mxu0
    %2660 = vmatpush.bf16.msra.mxu0 %v620
    %2661 = vmatpush.bf16.msra.mxu0 %v612
    %2662 = vmatpush.bf16.msra.mxu0 %v604
    %2663 = vmatpush.bf16.msra.mxu0 %v596
    %2664 = vmatpush.bf16.msra.mxu0 %v588
    %2665 = vmatpush.bf16.msra.mxu0 %v580
    %2666 = vmatpush.bf16.msra.mxu0 %v572
    %2667 = vmatpush.bf16.msra.mxu0 %v564
    %2668 = vmatmul.bf16.gmra.mxu0 %v2580
    %v2669 = vpop.f32.mrf.mxu0
    %v2670 = vadd.f32 0.0, %v2669
    %v2671 = vpop.f32.mrf.mxu0
    %2672 = vdwg.mxu0
    %2673 = vmatpush.bf16.msra.mxu0 %v684
    %2674 = vmatpush.bf16.msra.mxu0 %v676
    %2675 = vmatpush.bf16.msra.mxu0 %v668
    %2676 = vmatpush.bf16.msra.mxu0 %v660
    %2677 = vmatpush.bf16.msra.mxu0 %v652
    %2678 = vmatpush.bf16.msra.mxu0 %v644
    %2679 = vmatpush.bf16.msra.mxu0 %v636
    %2680 = vmatpush.bf16.msra.mxu0 %v628
    %2681 = vmatmul.bf16.gmra.mxu0 %v2581
    %v2682 = vpop.f32.mrf.mxu0
    %v2683 = vadd.f32 %v2670, %v2682
    %v2684 = vpop.f32.mrf.mxu0
    %2685 = vdwg.mxu0
    %2686 = vmatpush.bf16.msra.mxu0 %v621
    %2687 = vmatpush.bf16.msra.mxu0 %v613
    %2688 = vmatpush.bf16.msra.mxu0 %v605
    %2689 = vmatpush.bf16.msra.mxu0 %v597
    %2690 = vmatpush.bf16.msra.mxu0 %v589
    %2691 = vmatpush.bf16.msra.mxu0 %v581
    %2692 = vmatpush.bf16.msra.mxu0 %v573
    %2693 = vmatpush.bf16.msra.mxu0 %v565
    %2694 = vmatmul.bf16.gmra.mxu0 %v2580
    %v2695 = vpop.f32.mrf.mxu0
    %v2696 = vadd.f32 0.0, %v2695
    %v2697 = vpop.f32.mrf.mxu0
    %2698 = vdwg.mxu0
    %2699 = vmatpush.bf16.msra.mxu0 %v685
    %2700 = vmatpush.bf16.msra.mxu0 %v677
    %2701 = vmatpush.bf16.msra.mxu0 %v669
    %2702 = vmatpush.bf16.msra.mxu0 %v661
    %2703 = vmatpush.bf16.msra.mxu0 %v653
    %2704 = vmatpush.bf16.msra.mxu0 %v645
    %2705 = vmatpush.bf16.msra.mxu0 %v637
    %2706 = vmatpush.bf16.msra.mxu0 %v629
    %2707 = vmatmul.bf16.gmra.mxu0 %v2581
    %v2708 = vpop.f32.mrf.mxu0
    %v2709 = vadd.f32 %v2696, %v2708
    %v2710 = vpop.f32.mrf.mxu0
    %2711 = vdwg.mxu0
    %2712 = vmatpush.bf16.msra.mxu0 %v622
    %2713 = vmatpush.bf16.msra.mxu0 %v614
    %2714 = vmatpush.bf16.msra.mxu0 %v606
    %2715 = vmatpush.bf16.msra.mxu0 %v598
    %2716 = vmatpush.bf16.msra.mxu0 %v590
    %2717 = vmatpush.bf16.msra.mxu0 %v582
    %2718 = vmatpush.bf16.msra.mxu0 %v574
    %2719 = vmatpush.bf16.msra.mxu0 %v566
    %2720 = vmatmul.bf16.gmra.mxu0 %v2580
    %v2721 = vpop.f32.mrf.mxu0
    %v2722 = vadd.f32 0.0, %v2721
    %v2723 = vpop.f32.mrf.mxu0
    %2724 = vdwg.mxu0
    %2725 = vmatpush.bf16.msra.mxu0 %v686
    %2726 = vmatpush.bf16.msra.mxu0 %v678
    %2727 = vmatpush.bf16.msra.mxu0 %v670
    %2728 = vmatpush.bf16.msra.mxu0 %v662
    %2729 = vmatpush.bf16.msra.mxu0 %v654
    %2730 = vmatpush.bf16.msra.mxu0 %v646
    %2731 = vmatpush.bf16.msra.mxu0 %v638
    %2732 = vmatpush.bf16.msra.mxu0 %v630
    %2733 = vmatmul.bf16.gmra.mxu0 %v2581
    %v2734 = vpop.f32.mrf.mxu0
    %v2735 = vadd.f32 %v2722, %v2734
    %v2736 = vpop.f32.mrf.mxu0
    %2737 = vdwg.mxu0
    %2738 = vmatpush.bf16.msra.mxu0 %v623
    %2739 = vmatpush.bf16.msra.mxu0 %v615
    %2740 = vmatpush.bf16.msra.mxu0 %v607
    %2741 = vmatpush.bf16.msra.mxu0 %v599
    %2742 = vmatpush.bf16.msra.mxu0 %v591
    %2743 = vmatpush.bf16.msra.mxu0 %v583
    %2744 = vmatpush.bf16.msra.mxu0 %v575
    %2745 = vmatpush.bf16.msra.mxu0 %v567
    %2746 = vmatmul.bf16.gmra.mxu0 %v2580
    %v2747 = vpop.f32.mrf.mxu0
    %v2748 = vadd.f32 0.0, %v2747
    %v2749 = vpop.f32.mrf.mxu0
    %2750 = vdwg.mxu0
    %2751 = vmatpush.bf16.msra.mxu0 %v687
    %2752 = vmatpush.bf16.msra.mxu0 %v679
    %2753 = vmatpush.bf16.msra.mxu0 %v671
    %2754 = vmatpush.bf16.msra.mxu0 %v663
    %2755 = vmatpush.bf16.msra.mxu0 %v655
    %2756 = vmatpush.bf16.msra.mxu0 %v647
    %2757 = vmatpush.bf16.msra.mxu0 %v639
    %2758 = vmatpush.bf16.msra.mxu0 %v631
    %2759 = vmatmul.bf16.gmra.mxu0 %v2581
    %v2760 = vpop.f32.mrf.mxu0
    %v2761 = vadd.f32 %v2748, %v2760
    %v2762 = vpop.f32.mrf.mxu0
    %2763 = vdwg.mxu0
    %2764 = vmatpush.bf16.msra.mxu0 %v624
    %2765 = vmatpush.bf16.msra.mxu0 %v616
    %2766 = vmatpush.bf16.msra.mxu0 %v608
    %2767 = vmatpush.bf16.msra.mxu0 %v600
    %2768 = vmatpush.bf16.msra.mxu0 %v592
    %2769 = vmatpush.bf16.msra.mxu0 %v584
    %2770 = vmatpush.bf16.msra.mxu0 %v576
    %2771 = vmatpush.bf16.msra.mxu0 %v568
    %2772 = vmatmul.bf16.gmra.mxu0 %v2580
    %v2773 = vpop.f32.mrf.mxu0
    %v2774 = vadd.f32 0.0, %v2773
    %v2775 = vpop.f32.mrf.mxu0
    %2776 = vdwg.mxu0
    %2777 = vmatpush.bf16.msra.mxu0 %v688
    %2778 = vmatpush.bf16.msra.mxu0 %v680
    %2779 = vmatpush.bf16.msra.mxu0 %v672
    %2780 = vmatpush.bf16.msra.mxu0 %v664
    %2781 = vmatpush.bf16.msra.mxu0 %v656
    %2782 = vmatpush.bf16.msra.mxu0 %v648
    %2783 = vmatpush.bf16.msra.mxu0 %v640
    %2784 = vmatpush.bf16.msra.mxu0 %v632
    %2785 = vmatmul.bf16.gmra.mxu0 %v2581
    %v2786 = vpop.f32.mrf.mxu0
    %v2787 = vadd.f32 %v2774, %v2786
    %v2788 = vpop.f32.mrf.mxu0
    %2789 = vdwg.mxu0
    %v2790 = vadd.f32 %v2572, %v2605
    %v2791 = vadd.f32 %v2573, %v2631
    %v2792 = vadd.f32 %v2574, %v2657
    %v2793 = vadd.f32 %v2575, %v2683
    %v2794 = vadd.f32 %v2576, %v2709
    %v2795 = vadd.f32 %v2577, %v2735
    %v2796 = vadd.f32 %v2578, %v2761
    %v2797 = vadd.f32 %v2579, %v2787
    %v2798 = vxor.u32 %v2790, 2147483648
    %v2799 = vxor.u32 %v2791, 2147483648
    %v2800 = vmul.f32 %v2798, 1.442695
    %v2801 = vpow.pop %v2800
    %v2802 = vmul.f32 %v2799, 1.442695
    %v2803 = vpow.pop %v2802
    %v2804 = vadd.f32 %v2801, 1.0
    %v2805 = vadd.f32 %v2803, 1.0
    %v2806 = vrcp.pop %v2804
    %v2807 = vmul.f32 %v2804, %v2806
    %v2808 = vsub.f32 1.0, %v2807
    %v2809 = vmul.f32 %v2806, %v2808
    %v2810 = vadd.f32 %v2806, %v2809
    %vm2811 = vweird.f32 %v2804
    %vm2812 = vweird.f32 %v2806
    %vm2813 = vmor %vm2811, %vm2812
    %v2814 = vsel %vm2813, %v2806, %v2810
    %v2815 = vand.u32 2147483647, %v2804
    %vm2816 = vcmp.eq.f32.partialorder %v2815, 8.507059e+37
    %v2817 = vand.u32 %v2804, 2147483648
    %v2818 = vor.u32 1.1754944e-38, %v2817
    %v2819 = vsel %vm2816, %v2818, %v2814
    %v2820 = vmul.f32 1.0, %v2819
    %v2821 = vrcp.pop %v2805
    %v2822 = vmul.f32 %v2805, %v2821
    %v2823 = vsub.f32 1.0, %v2822
    %v2824 = vmul.f32 %v2821, %v2823
    %v2825 = vadd.f32 %v2821, %v2824
    %vm2826 = vweird.f32 %v2805
    %vm2827 = vweird.f32 %v2821
    %vm2828 = vmor %vm2826, %vm2827
    %v2829 = vsel %vm2828, %v2821, %v2825
    %v2830 = vand.u32 2147483647, %v2805
    %vm2831 = vcmp.eq.f32.partialorder %v2830, 8.507059e+37
    %v2832 = vand.u32 %v2805, 2147483648
    %v2833 = vor.u32 1.1754944e-38, %v2832
    %v2834 = vsel %vm2831, %v2833, %v2829
    %v2835 = vmul.f32 1.0, %v2834
    %v2836 = vxor.u32 %v2792, 2147483648
    %v2837 = vxor.u32 %v2793, 2147483648
    %v2838 = vmul.f32 %v2836, 1.442695
    %v2839 = vpow.pop %v2838
    %v2840 = vmul.f32 %v2837, 1.442695
    %v2841 = vpow.pop %v2840
    %v2842 = vadd.f32 %v2839, 1.0
    %v2843 = vadd.f32 %v2841, 1.0
    %v2844 = vrcp.pop %v2842
    %v2845 = vmul.f32 %v2842, %v2844
    %v2846 = vsub.f32 1.0, %v2845
    %v2847 = vmul.f32 %v2844, %v2846
    %v2848 = vadd.f32 %v2844, %v2847
    %vm2849 = vweird.f32 %v2842
    %vm2850 = vweird.f32 %v2844
    %vm2851 = vmor %vm2849, %vm2850
    %v2852 = vsel %vm2851, %v2844, %v2848
    %v2853 = vand.u32 2147483647, %v2842
    %vm2854 = vcmp.eq.f32.partialorder %v2853, 8.507059e+37
    %v2855 = vand.u32 %v2842, 2147483648
    %v2856 = vor.u32 1.1754944e-38, %v2855
    %v2857 = vsel %vm2854, %v2856, %v2852
    %v2858 = vmul.f32 1.0, %v2857
    %v2859 = vrcp.pop %v2843
    %v2860 = vmul.f32 %v2843, %v2859
    %v2861 = vsub.f32 1.0, %v2860
    %v2862 = vmul.f32 %v2859, %v2861
    %v2863 = vadd.f32 %v2859, %v2862
    %vm2864 = vweird.f32 %v2843
    %vm2865 = vweird.f32 %v2859
    %vm2866 = vmor %vm2864, %vm2865
    %v2867 = vsel %vm2866, %v2859, %v2863
    %v2868 = vand.u32 2147483647, %v2843
    %vm2869 = vcmp.eq.f32.partialorder %v2868, 8.507059e+37
    %v2870 = vand.u32 %v2843, 2147483648
    %v2871 = vor.u32 1.1754944e-38, %v2870
    %v2872 = vsel %vm2869, %v2871, %v2867
    %v2873 = vmul.f32 1.0, %v2872
    %v2874 = vtanh.pop %v2794
    %v2875 = vtanh.pop %v2795
    %v2876 = vxor.u32 %v2796, 2147483648
    %v2877 = vxor.u32 %v2797, 2147483648
    %v2878 = vmul.f32 %v2876, 1.442695
    %v2879 = vpow.pop %v2878
    %v2880 = vmul.f32 %v2877, 1.442695
    %v2881 = vpow.pop %v2880
    %v2882 = vadd.f32 %v2879, 1.0
    %v2883 = vadd.f32 %v2881, 1.0
    %v2884 = vrcp.pop %v2882
    %v2885 = vmul.f32 %v2882, %v2884
    %v2886 = vsub.f32 1.0, %v2885
    %v2887 = vmul.f32 %v2884, %v2886
    %v2888 = vadd.f32 %v2884, %v2887
    %vm2889 = vweird.f32 %v2882
    %vm2890 = vweird.f32 %v2884
    %vm2891 = vmor %vm2889, %vm2890
    %v2892 = vsel %vm2891, %v2884, %v2888
    %v2893 = vand.u32 2147483647, %v2882
    %vm2894 = vcmp.eq.f32.partialorder %v2893, 8.507059e+37
    %v2895 = vand.u32 %v2882, 2147483648
    %v2896 = vor.u32 1.1754944e-38, %v2895
    %v2897 = vsel %vm2894, %v2896, %v2892
    %v2898 = vmul.f32 1.0, %v2897
    %v2899 = vrcp.pop %v2883
    %v2900 = vmul.f32 %v2883, %v2899
    %v2901 = vsub.f32 1.0, %v2900
    %v2902 = vmul.f32 %v2899, %v2901
    %v2903 = vadd.f32 %v2899, %v2902
    %vm2904 = vweird.f32 %v2883
    %vm2905 = vweird.f32 %v2899
    %vm2906 = vmor %vm2904, %vm2905
    %v2907 = vsel %vm2906, %v2899, %v2903
    %v2908 = vand.u32 2147483647, %v2883
    %vm2909 = vcmp.eq.f32.partialorder %v2908, 8.507059e+37
    %v2910 = vand.u32 %v2883, 2147483648
    %v2911 = vor.u32 1.1754944e-38, %v2910
    %v2912 = vsel %vm2909, %v2911, %v2907
    %v2913 = vmul.f32 1.0, %v2912
    %v2914 = vmul.f32 %v2858, %v2565
    %v2915 = vmul.f32 %v2873, %v2566
    %v2916 = vmul.f32 %v2820, %v2874
    %v2917 = vmul.f32 %v2835, %v2875
    %v2918 = vadd.f32 %v2914, %v2916
    %v2919 = vadd.f32 %v2915, %v2917
    %v2920 = vtanh.pop %v2918
    %v2921 = vtanh.pop %v2919
    %v2922 = vmul.f32 %v2898, %v2920
    %v2923 = vmul.f32 %v2913, %v2921
    %s2924 = scalar_lea.vmem %s0, 384
    %v2925 = vld [vmem:[%s2924] sm:$0xff]
    %v2926 = vld [vmem:[%s2924 + $0x8] sm:$0xff]
    %v2927 = vld [vmem:[%s2924 + $0x10] sm:$0xff]
    %v2928 = vld [vmem:[%s2924 + $0x18] sm:$0xff]
    %v2929 = vld [vmem:[%s2924 + $0x20] sm:$0xff]
    %v2930 = vld [vmem:[%s2924 + $0x28] sm:$0xff]
    %v2931 = vld [vmem:[%s2924 + $0x30] sm:$0xff]
    %v2932 = vld [vmem:[%s2924 + $0x38] sm:$0xff]
    %v2933 = vpack.c.bf16 %v2922, %v2922
    %v2934 = vpack.c.bf16 %v2923, %v2923
    %2935 = vmatpush.bf16.msra.mxu0 %v617
    %2936 = vmatpush.bf16.msra.mxu0 %v609
    %2937 = vmatpush.bf16.msra.mxu0 %v601
    %2938 = vmatpush.bf16.msra.mxu0 %v593
    %2939 = vmatpush.bf16.msra.mxu0 %v585
    %2940 = vmatpush.bf16.msra.mxu0 %v577
    %2941 = vmatpush.bf16.msra.mxu0 %v569
    %2942 = vmatpush.bf16.msra.mxu0 %v561
    %2943 = vmatmul.bf16.gmra.mxu0 %v2933
    %v2944 = vpop.f32.mrf.mxu0
    %v2945 = vadd.f32 0.0, %v2944
    %v2946 = vpop.f32.mrf.mxu0
    %2947 = vdwg.mxu0
    %2948 = vmatpush.bf16.msra.mxu0 %v681
    %2949 = vmatpush.bf16.msra.mxu0 %v673
    %2950 = vmatpush.bf16.msra.mxu0 %v665
    %2951 = vmatpush.bf16.msra.mxu0 %v657
    %2952 = vmatpush.bf16.msra.mxu0 %v649
    %2953 = vmatpush.bf16.msra.mxu0 %v641
    %2954 = vmatpush.bf16.msra.mxu0 %v633
    %2955 = vmatpush.bf16.msra.mxu0 %v625
    %2956 = vmatmul.bf16.gmra.mxu0 %v2934
    %v2957 = vpop.f32.mrf.mxu0
    %v2958 = vadd.f32 %v2945, %v2957
    %v2959 = vpop.f32.mrf.mxu0
    %2960 = vdwg.mxu0
    %2961 = vmatpush.bf16.msra.mxu0 %v618
    %2962 = vmatpush.bf16.msra.mxu0 %v610
    %2963 = vmatpush.bf16.msra.mxu0 %v602
    %2964 = vmatpush.bf16.msra.mxu0 %v594
    %2965 = vmatpush.bf16.msra.mxu0 %v586
    %2966 = vmatpush.bf16.msra.mxu0 %v578
    %2967 = vmatpush.bf16.msra.mxu0 %v570
    %2968 = vmatpush.bf16.msra.mxu0 %v562
    %2969 = vmatmul.bf16.gmra.mxu0 %v2933
    %v2970 = vpop.f32.mrf.mxu0
    %v2971 = vadd.f32 0.0, %v2970
    %v2972 = vpop.f32.mrf.mxu0
    %2973 = vdwg.mxu0
    %2974 = vmatpush.bf16.msra.mxu0 %v682
    %2975 = vmatpush.bf16.msra.mxu0 %v674
    %2976 = vmatpush.bf16.msra.mxu0 %v666
    %2977 = vmatpush.bf16.msra.mxu0 %v658
    %2978 = vmatpush.bf16.msra.mxu0 %v650
    %2979 = vmatpush.bf16.msra.mxu0 %v642
    %2980 = vmatpush.bf16.msra.mxu0 %v634
    %2981 = vmatpush.bf16.msra.mxu0 %v626
    %2982 = vmatmul.bf16.gmra.mxu0 %v2934
    %v2983 = vpop.f32.mrf.mxu0
    %v2984 = vadd.f32 %v2971, %v2983
    %v2985 = vpop.f32.mrf.mxu0
    %2986 = vdwg.mxu0
    %2987 = vmatpush.bf16.msra.mxu0 %v619
    %2988 = vmatpush.bf16.msra.mxu0 %v611
    %2989 = vmatpush.bf16.msra.mxu0 %v603
    %2990 = vmatpush.bf16.msra.mxu0 %v595
    %2991 = vmatpush.bf16.msra.mxu0 %v587
    %2992 = vmatpush.bf16.msra.mxu0 %v579
    %2993 = vmatpush.bf16.msra.mxu0 %v571
    %2994 = vmatpush.bf16.msra.mxu0 %v563
    %2995 = vmatmul.bf16.gmra.mxu0 %v2933
    %v2996 = vpop.f32.mrf.mxu0
    %v2997 = vadd.f32 0.0, %v2996
    %v2998 = vpop.f32.mrf.mxu0
    %2999 = vdwg.mxu0
    %3000 = vmatpush.bf16.msra.mxu0 %v683
    %3001 = vmatpush.bf16.msra.mxu0 %v675
    %3002 = vmatpush.bf16.msra.mxu0 %v667
    %3003 = vmatpush.bf16.msra.mxu0 %v659
    %3004 = vmatpush.bf16.msra.mxu0 %v651
    %3005 = vmatpush.bf16.msra.mxu0 %v643
    %3006 = vmatpush.bf16.msra.mxu0 %v635
    %3007 = vmatpush.bf16.msra.mxu0 %v627
    %3008 = vmatmul.bf16.gmra.mxu0 %v2934
    %v3009 = vpop.f32.mrf.mxu0
    %v3010 = vadd.f32 %v2997, %v3009
    %v3011 = vpop.f32.mrf.mxu0
    %3012 = vdwg.mxu0
    %3013 = vmatpush.bf16.msra.mxu0 %v620
    %3014 = vmatpush.bf16.msra.mxu0 %v612
    %3015 = vmatpush.bf16.msra.mxu0 %v604
    %3016 = vmatpush.bf16.msra.mxu0 %v596
    %3017 = vmatpush.bf16.msra.mxu0 %v588
    %3018 = vmatpush.bf16.msra.mxu0 %v580
    %3019 = vmatpush.bf16.msra.mxu0 %v572
    %3020 = vmatpush.bf16.msra.mxu0 %v564
    %3021 = vmatmul.bf16.gmra.mxu0 %v2933
    %v3022 = vpop.f32.mrf.mxu0
    %v3023 = vadd.f32 0.0, %v3022
    %v3024 = vpop.f32.mrf.mxu0
    %3025 = vdwg.mxu0
    %3026 = vmatpush.bf16.msra.mxu0 %v684
    %3027 = vmatpush.bf16.msra.mxu0 %v676
    %3028 = vmatpush.bf16.msra.mxu0 %v668
    %3029 = vmatpush.bf16.msra.mxu0 %v660
    %3030 = vmatpush.bf16.msra.mxu0 %v652
    %3031 = vmatpush.bf16.msra.mxu0 %v644
    %3032 = vmatpush.bf16.msra.mxu0 %v636
    %3033 = vmatpush.bf16.msra.mxu0 %v628
    %3034 = vmatmul.bf16.gmra.mxu0 %v2934
    %v3035 = vpop.f32.mrf.mxu0
    %v3036 = vadd.f32 %v3023, %v3035
    %v3037 = vpop.f32.mrf.mxu0
    %3038 = vdwg.mxu0
    %3039 = vmatpush.bf16.msra.mxu0 %v621
    %3040 = vmatpush.bf16.msra.mxu0 %v613
    %3041 = vmatpush.bf16.msra.mxu0 %v605
    %3042 = vmatpush.bf16.msra.mxu0 %v597
    %3043 = vmatpush.bf16.msra.mxu0 %v589
    %3044 = vmatpush.bf16.msra.mxu0 %v581
    %3045 = vmatpush.bf16.msra.mxu0 %v573
    %3046 = vmatpush.bf16.msra.mxu0 %v565
    %3047 = vmatmul.bf16.gmra.mxu0 %v2933
    %v3048 = vpop.f32.mrf.mxu0
    %v3049 = vadd.f32 0.0, %v3048
    %v3050 = vpop.f32.mrf.mxu0
    %3051 = vdwg.mxu0
    %3052 = vmatpush.bf16.msra.mxu0 %v685
    %3053 = vmatpush.bf16.msra.mxu0 %v677
    %3054 = vmatpush.bf16.msra.mxu0 %v669
    %3055 = vmatpush.bf16.msra.mxu0 %v661
    %3056 = vmatpush.bf16.msra.mxu0 %v653
    %3057 = vmatpush.bf16.msra.mxu0 %v645
    %3058 = vmatpush.bf16.msra.mxu0 %v637
    %3059 = vmatpush.bf16.msra.mxu0 %v629
    %3060 = vmatmul.bf16.gmra.mxu0 %v2934
    %v3061 = vpop.f32.mrf.mxu0
    %v3062 = vadd.f32 %v3049, %v3061
    %v3063 = vpop.f32.mrf.mxu0
    %3064 = vdwg.mxu0
    %3065 = vmatpush.bf16.msra.mxu0 %v622
    %3066 = vmatpush.bf16.msra.mxu0 %v614
    %3067 = vmatpush.bf16.msra.mxu0 %v606
    %3068 = vmatpush.bf16.msra.mxu0 %v598
    %3069 = vmatpush.bf16.msra.mxu0 %v590
    %3070 = vmatpush.bf16.msra.mxu0 %v582
    %3071 = vmatpush.bf16.msra.mxu0 %v574
    %3072 = vmatpush.bf16.msra.mxu0 %v566
    %3073 = vmatmul.bf16.gmra.mxu0 %v2933
    %v3074 = vpop.f32.mrf.mxu0
    %v3075 = vadd.f32 0.0, %v3074
    %v3076 = vpop.f32.mrf.mxu0
    %3077 = vdwg.mxu0
    %3078 = vmatpush.bf16.msra.mxu0 %v686
    %3079 = vmatpush.bf16.msra.mxu0 %v678
    %3080 = vmatpush.bf16.msra.mxu0 %v670
    %3081 = vmatpush.bf16.msra.mxu0 %v662
    %3082 = vmatpush.bf16.msra.mxu0 %v654
    %3083 = vmatpush.bf16.msra.mxu0 %v646
    %3084 = vmatpush.bf16.msra.mxu0 %v638
    %3085 = vmatpush.bf16.msra.mxu0 %v630
    %3086 = vmatmul.bf16.gmra.mxu0 %v2934
    %v3087 = vpop.f32.mrf.mxu0
    %v3088 = vadd.f32 %v3075, %v3087
    %v3089 = vpop.f32.mrf.mxu0
    %3090 = vdwg.mxu0
    %3091 = vmatpush.bf16.msra.mxu0 %v623
    %3092 = vmatpush.bf16.msra.mxu0 %v615
    %3093 = vmatpush.bf16.msra.mxu0 %v607
    %3094 = vmatpush.bf16.msra.mxu0 %v599
    %3095 = vmatpush.bf16.msra.mxu0 %v591
    %3096 = vmatpush.bf16.msra.mxu0 %v583
    %3097 = vmatpush.bf16.msra.mxu0 %v575
    %3098 = vmatpush.bf16.msra.mxu0 %v567
    %3099 = vmatmul.bf16.gmra.mxu0 %v2933
    %v3100 = vpop.f32.mrf.mxu0
    %v3101 = vadd.f32 0.0, %v3100
    %v3102 = vpop.f32.mrf.mxu0
    %3103 = vdwg.mxu0
    %3104 = vmatpush.bf16.msra.mxu0 %v687
    %3105 = vmatpush.bf16.msra.mxu0 %v679
    %3106 = vmatpush.bf16.msra.mxu0 %v671
    %3107 = vmatpush.bf16.msra.mxu0 %v663
    %3108 = vmatpush.bf16.msra.mxu0 %v655
    %3109 = vmatpush.bf16.msra.mxu0 %v647
    %3110 = vmatpush.bf16.msra.mxu0 %v639
    %3111 = vmatpush.bf16.msra.mxu0 %v631
    %3112 = vmatmul.bf16.gmra.mxu0 %v2934
    %v3113 = vpop.f32.mrf.mxu0
    %v3114 = vadd.f32 %v3101, %v3113
    %v3115 = vpop.f32.mrf.mxu0
    %3116 = vdwg.mxu0
    %3117 = vmatpush.bf16.msra.mxu0 %v624
    %3118 = vmatpush.bf16.msra.mxu0 %v616
    %3119 = vmatpush.bf16.msra.mxu0 %v608
    %3120 = vmatpush.bf16.msra.mxu0 %v600
    %3121 = vmatpush.bf16.msra.mxu0 %v592
    %3122 = vmatpush.bf16.msra.mxu0 %v584
    %3123 = vmatpush.bf16.msra.mxu0 %v576
    %3124 = vmatpush.bf16.msra.mxu0 %v568
    %3125 = vmatmul.bf16.gmra.mxu0 %v2933
    %v3126 = vpop.f32.mrf.mxu0
    %v3127 = vadd.f32 0.0, %v3126
    %v3128 = vpop.f32.mrf.mxu0
    %3129 = vdwg.mxu0
    %3130 = vmatpush.bf16.msra.mxu0 %v688
    %3131 = vmatpush.bf16.msra.mxu0 %v680
    %3132 = vmatpush.bf16.msra.mxu0 %v672
    %3133 = vmatpush.bf16.msra.mxu0 %v664
    %3134 = vmatpush.bf16.msra.mxu0 %v656
    %3135 = vmatpush.bf16.msra.mxu0 %v648
    %3136 = vmatpush.bf16.msra.mxu0 %v640
    %3137 = vmatpush.bf16.msra.mxu0 %v632
    %3138 = vmatmul.bf16.gmra.mxu0 %v2934
    %v3139 = vpop.f32.mrf.mxu0
    %v3140 = vadd.f32 %v3127, %v3139
    %v3141 = vpop.f32.mrf.mxu0
    %3142 = vdwg.mxu0
    %v3143 = vadd.f32 %v2925, %v2958
    %v3144 = vadd.f32 %v2926, %v2984
    %v3145 = vadd.f32 %v2927, %v3010
    %v3146 = vadd.f32 %v2928, %v3036
    %v3147 = vadd.f32 %v2929, %v3062
    %v3148 = vadd.f32 %v2930, %v3088
    %v3149 = vadd.f32 %v2931, %v3114
    %v3150 = vadd.f32 %v2932, %v3140
    %v3151 = vxor.u32 %v3143, 2147483648
    %v3152 = vxor.u32 %v3144, 2147483648
    %v3153 = vmul.f32 %v3151, 1.442695
    %v3154 = vpow.pop %v3153
    %v3155 = vmul.f32 %v3152, 1.442695
    %v3156 = vpow.pop %v3155
    %v3157 = vadd.f32 %v3154, 1.0
    %v3158 = vadd.f32 %v3156, 1.0
    %v3159 = vrcp.pop %v3157
    %v3160 = vmul.f32 %v3157, %v3159
    %v3161 = vsub.f32 1.0, %v3160
    %v3162 = vmul.f32 %v3159, %v3161
    %v3163 = vadd.f32 %v3159, %v3162
    %vm3164 = vweird.f32 %v3157
    %vm3165 = vweird.f32 %v3159
    %vm3166 = vmor %vm3164, %vm3165
    %v3167 = vsel %vm3166, %v3159, %v3163
    %v3168 = vand.u32 2147483647, %v3157
    %vm3169 = vcmp.eq.f32.partialorder %v3168, 8.507059e+37
    %v3170 = vand.u32 %v3157, 2147483648
    %v3171 = vor.u32 1.1754944e-38, %v3170
    %v3172 = vsel %vm3169, %v3171, %v3167
    %v3173 = vmul.f32 1.0, %v3172
    %v3174 = vrcp.pop %v3158
    %v3175 = vmul.f32 %v3158, %v3174
    %v3176 = vsub.f32 1.0, %v3175
    %v3177 = vmul.f32 %v3174, %v3176
    %v3178 = vadd.f32 %v3174, %v3177
    %vm3179 = vweird.f32 %v3158
    %vm3180 = vweird.f32 %v3174
    %vm3181 = vmor %vm3179, %vm3180
    %v3182 = vsel %vm3181, %v3174, %v3178
    %v3183 = vand.u32 2147483647, %v3158
    %vm3184 = vcmp.eq.f32.partialorder %v3183, 8.507059e+37
    %v3185 = vand.u32 %v3158, 2147483648
    %v3186 = vor.u32 1.1754944e-38, %v3185
    %v3187 = vsel %vm3184, %v3186, %v3182
    %v3188 = vmul.f32 1.0, %v3187
    %v3189 = vxor.u32 %v3145, 2147483648
    %v3190 = vxor.u32 %v3146, 2147483648
    %v3191 = vmul.f32 %v3189, 1.442695
    %v3192 = vpow.pop %v3191
    %v3193 = vmul.f32 %v3190, 1.442695
    %v3194 = vpow.pop %v3193
    %v3195 = vadd.f32 %v3192, 1.0
    %v3196 = vadd.f32 %v3194, 1.0
    %v3197 = vrcp.pop %v3195
    %v3198 = vmul.f32 %v3195, %v3197
    %v3199 = vsub.f32 1.0, %v3198
    %v3200 = vmul.f32 %v3197, %v3199
    %v3201 = vadd.f32 %v3197, %v3200
    %vm3202 = vweird.f32 %v3195
    %vm3203 = vweird.f32 %v3197
    %vm3204 = vmor %vm3202, %vm3203
    %v3205 = vsel %vm3204, %v3197, %v3201
    %v3206 = vand.u32 2147483647, %v3195
    %vm3207 = vcmp.eq.f32.partialorder %v3206, 8.507059e+37
    %v3208 = vand.u32 %v3195, 2147483648
    %v3209 = vor.u32 1.1754944e-38, %v3208
    %v3210 = vsel %vm3207, %v3209, %v3205
    %v3211 = vmul.f32 1.0, %v3210
    %v3212 = vrcp.pop %v3196
    %v3213 = vmul.f32 %v3196, %v3212
    %v3214 = vsub.f32 1.0, %v3213
    %v3215 = vmul.f32 %v3212, %v3214
    %v3216 = vadd.f32 %v3212, %v3215
    %vm3217 = vweird.f32 %v3196
    %vm3218 = vweird.f32 %v3212
    %vm3219 = vmor %vm3217, %vm3218
    %v3220 = vsel %vm3219, %v3212, %v3216
    %v3221 = vand.u32 2147483647, %v3196
    %vm3222 = vcmp.eq.f32.partialorder %v3221, 8.507059e+37
    %v3223 = vand.u32 %v3196, 2147483648
    %v3224 = vor.u32 1.1754944e-38, %v3223
    %v3225 = vsel %vm3222, %v3224, %v3220
    %v3226 = vmul.f32 1.0, %v3225
    %v3227 = vtanh.pop %v3147
    %v3228 = vtanh.pop %v3148
    %v3229 = vxor.u32 %v3149, 2147483648
    %v3230 = vxor.u32 %v3150, 2147483648
    %v3231 = vmul.f32 %v3229, 1.442695
    %v3232 = vpow.pop %v3231
    %v3233 = vmul.f32 %v3230, 1.442695
    %v3234 = vpow.pop %v3233
    %v3235 = vadd.f32 %v3232, 1.0
    %v3236 = vadd.f32 %v3234, 1.0
    %v3237 = vrcp.pop %v3235
    %v3238 = vmul.f32 %v3235, %v3237
    %v3239 = vsub.f32 1.0, %v3238
    %v3240 = vmul.f32 %v3237, %v3239
    %v3241 = vadd.f32 %v3237, %v3240
    %vm3242 = vweird.f32 %v3235
    %vm3243 = vweird.f32 %v3237
    %vm3244 = vmor %vm3242, %vm3243
    %v3245 = vsel %vm3244, %v3237, %v3241
    %v3246 = vand.u32 2147483647, %v3235
    %vm3247 = vcmp.eq.f32.partialorder %v3246, 8.507059e+37
    %v3248 = vand.u32 %v3235, 2147483648
    %v3249 = vor.u32 1.1754944e-38, %v3248
    %v3250 = vsel %vm3247, %v3249, %v3245
    %v3251 = vmul.f32 1.0, %v3250
    %v3252 = vrcp.pop %v3236
    %v3253 = vmul.f32 %v3236, %v3252
    %v3254 = vsub.f32 1.0, %v3253
    %v3255 = vmul.f32 %v3252, %v3254
    %v3256 = vadd.f32 %v3252, %v3255
    %vm3257 = vweird.f32 %v3236
    %vm3258 = vweird.f32 %v3252
    %vm3259 = vmor %vm3257, %vm3258
    %v3260 = vsel %vm3259, %v3252, %v3256
    %v3261 = vand.u32 2147483647, %v3236
    %vm3262 = vcmp.eq.f32.partialorder %v3261, 8.507059e+37
    %v3263 = vand.u32 %v3236, 2147483648
    %v3264 = vor.u32 1.1754944e-38, %v3263
    %v3265 = vsel %vm3262, %v3264, %v3260
    %v3266 = vmul.f32 1.0, %v3265
    %v3267 = vmul.f32 %v3211, %v2918
    %v3268 = vmul.f32 %v3226, %v2919
    %v3269 = vmul.f32 %v3173, %v3227
    %v3270 = vmul.f32 %v3188, %v3228
    %v3271 = vadd.f32 %v3267, %v3269
    %v3272 = vadd.f32 %v3268, %v3270
    %v3273 = vtanh.pop %v3271
    %v3274 = vtanh.pop %v3272
    %v3275 = vmul.f32 %v3251, %v3273
    %v3276 = vmul.f32 %v3266, %v3274
    %s3277 = scalar_lea.vmem %s0, 448
    %v3278 = vld [vmem:[%s3277] sm:$0xff]
    %v3279 = vld [vmem:[%s3277 + $0x8] sm:$0xff]
    %v3280 = vld [vmem:[%s3277 + $0x10] sm:$0xff]
    %v3281 = vld [vmem:[%s3277 + $0x18] sm:$0xff]
    %v3282 = vld [vmem:[%s3277 + $0x20] sm:$0xff]
    %v3283 = vld [vmem:[%s3277 + $0x28] sm:$0xff]
    %v3284 = vld [vmem:[%s3277 + $0x30] sm:$0xff]
    %v3285 = vld [vmem:[%s3277 + $0x38] sm:$0xff]
    %v3286 = vpack.c.bf16 %v3275, %v3275
    %v3287 = vpack.c.bf16 %v3276, %v3276
    %3288 = vmatpush.bf16.msra.mxu0 %v617
    %3289 = vmatpush.bf16.msra.mxu0 %v609
    %3290 = vmatpush.bf16.msra.mxu0 %v601
    %3291 = vmatpush.bf16.msra.mxu0 %v593
    %3292 = vmatpush.bf16.msra.mxu0 %v585
    %3293 = vmatpush.bf16.msra.mxu0 %v577
    %3294 = vmatpush.bf16.msra.mxu0 %v569
    %3295 = vmatpush.bf16.msra.mxu0 %v561
    %3296 = vmatmul.bf16.gmra.mxu0 %v3286
    %v3297 = vpop.f32.mrf.mxu0
    %v3298 = vadd.f32 0.0, %v3297
    %v3299 = vpop.f32.mrf.mxu0
    %3300 = vdwg.mxu0
    %3301 = vmatpush.bf16.msra.mxu0 %v681
    %3302 = vmatpush.bf16.msra.mxu0 %v673
    %3303 = vmatpush.bf16.msra.mxu0 %v665
    %3304 = vmatpush.bf16.msra.mxu0 %v657
    %3305 = vmatpush.bf16.msra.mxu0 %v649
    %3306 = vmatpush.bf16.msra.mxu0 %v641
    %3307 = vmatpush.bf16.msra.mxu0 %v633
    %3308 = vmatpush.bf16.msra.mxu0 %v625
    %3309 = vmatmul.bf16.gmra.mxu0 %v3287
    %v3310 = vpop.f32.mrf.mxu0
    %v3311 = vadd.f32 %v3298, %v3310
    %v3312 = vpop.f32.mrf.mxu0
    %3313 = vdwg.mxu0
    %3314 = vmatpush.bf16.msra.mxu0 %v618
    %3315 = vmatpush.bf16.msra.mxu0 %v610
    %3316 = vmatpush.bf16.msra.mxu0 %v602
    %3317 = vmatpush.bf16.msra.mxu0 %v594
    %3318 = vmatpush.bf16.msra.mxu0 %v586
    %3319 = vmatpush.bf16.msra.mxu0 %v578
    %3320 = vmatpush.bf16.msra.mxu0 %v570
    %3321 = vmatpush.bf16.msra.mxu0 %v562
    %3322 = vmatmul.bf16.gmra.mxu0 %v3286
    %v3323 = vpop.f32.mrf.mxu0
    %v3324 = vadd.f32 0.0, %v3323
    %v3325 = vpop.f32.mrf.mxu0
    %3326 = vdwg.mxu0
    %3327 = vmatpush.bf16.msra.mxu0 %v682
    %3328 = vmatpush.bf16.msra.mxu0 %v674
    %3329 = vmatpush.bf16.msra.mxu0 %v666
    %3330 = vmatpush.bf16.msra.mxu0 %v658
    %3331 = vmatpush.bf16.msra.mxu0 %v650
    %3332 = vmatpush.bf16.msra.mxu0 %v642
    %3333 = vmatpush.bf16.msra.mxu0 %v634
    %3334 = vmatpush.bf16.msra.mxu0 %v626
    %3335 = vmatmul.bf16.gmra.mxu0 %v3287
    %v3336 = vpop.f32.mrf.mxu0
    %v3337 = vadd.f32 %v3324, %v3336
    %v3338 = vpop.f32.mrf.mxu0
    %3339 = vdwg.mxu0
    %3340 = vmatpush.bf16.msra.mxu0 %v619
    %3341 = vmatpush.bf16.msra.mxu0 %v611
    %3342 = vmatpush.bf16.msra.mxu0 %v603
    %3343 = vmatpush.bf16.msra.mxu0 %v595
    %3344 = vmatpush.bf16.msra.mxu0 %v587
    %3345 = vmatpush.bf16.msra.mxu0 %v579
    %3346 = vmatpush.bf16.msra.mxu0 %v571
    %3347 = vmatpush.bf16.msra.mxu0 %v563
    %3348 = vmatmul.bf16.gmra.mxu0 %v3286
    %v3349 = vpop.f32.mrf.mxu0
    %v3350 = vadd.f32 0.0, %v3349
    %v3351 = vpop.f32.mrf.mxu0
    %3352 = vdwg.mxu0
    %3353 = vmatpush.bf16.msra.mxu0 %v683
    %3354 = vmatpush.bf16.msra.mxu0 %v675
    %3355 = vmatpush.bf16.msra.mxu0 %v667
    %3356 = vmatpush.bf16.msra.mxu0 %v659
    %3357 = vmatpush.bf16.msra.mxu0 %v651
    %3358 = vmatpush.bf16.msra.mxu0 %v643
    %3359 = vmatpush.bf16.msra.mxu0 %v635
    %3360 = vmatpush.bf16.msra.mxu0 %v627
    %3361 = vmatmul.bf16.gmra.mxu0 %v3287
    %v3362 = vpop.f32.mrf.mxu0
    %v3363 = vadd.f32 %v3350, %v3362
    %v3364 = vpop.f32.mrf.mxu0
    %3365 = vdwg.mxu0
    %3366 = vmatpush.bf16.msra.mxu0 %v620
    %3367 = vmatpush.bf16.msra.mxu0 %v612
    %3368 = vmatpush.bf16.msra.mxu0 %v604
    %3369 = vmatpush.bf16.msra.mxu0 %v596
    %3370 = vmatpush.bf16.msra.mxu0 %v588
    %3371 = vmatpush.bf16.msra.mxu0 %v580
    %3372 = vmatpush.bf16.msra.mxu0 %v572
    %3373 = vmatpush.bf16.msra.mxu0 %v564
    %3374 = vmatmul.bf16.gmra.mxu0 %v3286
    %v3375 = vpop.f32.mrf.mxu0
    %v3376 = vadd.f32 0.0, %v3375
    %v3377 = vpop.f32.mrf.mxu0
    %3378 = vdwg.mxu0
    %3379 = vmatpush.bf16.msra.mxu0 %v684
    %3380 = vmatpush.bf16.msra.mxu0 %v676
    %3381 = vmatpush.bf16.msra.mxu0 %v668
    %3382 = vmatpush.bf16.msra.mxu0 %v660
    %3383 = vmatpush.bf16.msra.mxu0 %v652
    %3384 = vmatpush.bf16.msra.mxu0 %v644
    %3385 = vmatpush.bf16.msra.mxu0 %v636
    %3386 = vmatpush.bf16.msra.mxu0 %v628
    %3387 = vmatmul.bf16.gmra.mxu0 %v3287
    %v3388 = vpop.f32.mrf.mxu0
    %v3389 = vadd.f32 %v3376, %v3388
    %v3390 = vpop.f32.mrf.mxu0
    %3391 = vdwg.mxu0
    %3392 = vmatpush.bf16.msra.mxu0 %v621
    %3393 = vmatpush.bf16.msra.mxu0 %v613
    %3394 = vmatpush.bf16.msra.mxu0 %v605
    %3395 = vmatpush.bf16.msra.mxu0 %v597
    %3396 = vmatpush.bf16.msra.mxu0 %v589
    %3397 = vmatpush.bf16.msra.mxu0 %v581
    %3398 = vmatpush.bf16.msra.mxu0 %v573
    %3399 = vmatpush.bf16.msra.mxu0 %v565
    %3400 = vmatmul.bf16.gmra.mxu0 %v3286
    %v3401 = vpop.f32.mrf.mxu0
    %v3402 = vadd.f32 0.0, %v3401
    %v3403 = vpop.f32.mrf.mxu0
    %3404 = vdwg.mxu0
    %3405 = vmatpush.bf16.msra.mxu0 %v685
    %3406 = vmatpush.bf16.msra.mxu0 %v677
    %3407 = vmatpush.bf16.msra.mxu0 %v669
    %3408 = vmatpush.bf16.msra.mxu0 %v661
    %3409 = vmatpush.bf16.msra.mxu0 %v653
    %3410 = vmatpush.bf16.msra.mxu0 %v645
    %3411 = vmatpush.bf16.msra.mxu0 %v637
    %3412 = vmatpush.bf16.msra.mxu0 %v629
    %3413 = vmatmul.bf16.gmra.mxu0 %v3287
    %v3414 = vpop.f32.mrf.mxu0
    %v3415 = vadd.f32 %v3402, %v3414
    %v3416 = vpop.f32.mrf.mxu0
    %3417 = vdwg.mxu0
    %3418 = vmatpush.bf16.msra.mxu0 %v622
    %3419 = vmatpush.bf16.msra.mxu0 %v614
    %3420 = vmatpush.bf16.msra.mxu0 %v606
    %3421 = vmatpush.bf16.msra.mxu0 %v598
    %3422 = vmatpush.bf16.msra.mxu0 %v590
    %3423 = vmatpush.bf16.msra.mxu0 %v582
    %3424 = vmatpush.bf16.msra.mxu0 %v574
    %3425 = vmatpush.bf16.msra.mxu0 %v566
    %3426 = vmatmul.bf16.gmra.mxu0 %v3286
    %v3427 = vpop.f32.mrf.mxu0
    %v3428 = vadd.f32 0.0, %v3427
    %v3429 = vpop.f32.mrf.mxu0
    %3430 = vdwg.mxu0
    %3431 = vmatpush.bf16.msra.mxu0 %v686
    %3432 = vmatpush.bf16.msra.mxu0 %v678
    %3433 = vmatpush.bf16.msra.mxu0 %v670
    %3434 = vmatpush.bf16.msra.mxu0 %v662
    %3435 = vmatpush.bf16.msra.mxu0 %v654
    %3436 = vmatpush.bf16.msra.mxu0 %v646
    %3437 = vmatpush.bf16.msra.mxu0 %v638
    %3438 = vmatpush.bf16.msra.mxu0 %v630
    %3439 = vmatmul.bf16.gmra.mxu0 %v3287
    %v3440 = vpop.f32.mrf.mxu0
    %v3441 = vadd.f32 %v3428, %v3440
    %v3442 = vpop.f32.mrf.mxu0
    %3443 = vdwg.mxu0
    %3444 = vmatpush.bf16.msra.mxu0 %v623
    %3445 = vmatpush.bf16.msra.mxu0 %v615
    %3446 = vmatpush.bf16.msra.mxu0 %v607
    %3447 = vmatpush.bf16.msra.mxu0 %v599
    %3448 = vmatpush.bf16.msra.mxu0 %v591
    %3449 = vmatpush.bf16.msra.mxu0 %v583
    %3450 = vmatpush.bf16.msra.mxu0 %v575
    %3451 = vmatpush.bf16.msra.mxu0 %v567
    %3452 = vmatmul.bf16.gmra.mxu0 %v3286
    %v3453 = vpop.f32.mrf.mxu0
    %v3454 = vadd.f32 0.0, %v3453
    %v3455 = vpop.f32.mrf.mxu0
    %3456 = vdwg.mxu0
    %3457 = vmatpush.bf16.msra.mxu0 %v687
    %3458 = vmatpush.bf16.msra.mxu0 %v679
    %3459 = vmatpush.bf16.msra.mxu0 %v671
    %3460 = vmatpush.bf16.msra.mxu0 %v663
    %3461 = vmatpush.bf16.msra.mxu0 %v655
    %3462 = vmatpush.bf16.msra.mxu0 %v647
    %3463 = vmatpush.bf16.msra.mxu0 %v639
    %3464 = vmatpush.bf16.msra.mxu0 %v631
    %3465 = vmatmul.bf16.gmra.mxu0 %v3287
    %v3466 = vpop.f32.mrf.mxu0
    %v3467 = vadd.f32 %v3454, %v3466
    %v3468 = vpop.f32.mrf.mxu0
    %3469 = vdwg.mxu0
    %3470 = vmatpush.bf16.msra.mxu0 %v624
    %3471 = vmatpush.bf16.msra.mxu0 %v616
    %3472 = vmatpush.bf16.msra.mxu0 %v608
    %3473 = vmatpush.bf16.msra.mxu0 %v600
    %3474 = vmatpush.bf16.msra.mxu0 %v592
    %3475 = vmatpush.bf16.msra.mxu0 %v584
    %3476 = vmatpush.bf16.msra.mxu0 %v576
    %3477 = vmatpush.bf16.msra.mxu0 %v568
    %3478 = vmatmul.bf16.gmra.mxu0 %v3286
    %v3479 = vpop.f32.mrf.mxu0
    %v3480 = vadd.f32 0.0, %v3479
    %v3481 = vpop.f32.mrf.mxu0
    %3482 = vdwg.mxu0
    %3483 = vmatpush.bf16.msra.mxu0 %v688
    %3484 = vmatpush.bf16.msra.mxu0 %v680
    %3485 = vmatpush.bf16.msra.mxu0 %v672
    %3486 = vmatpush.bf16.msra.mxu0 %v664
    %3487 = vmatpush.bf16.msra.mxu0 %v656
    %3488 = vmatpush.bf16.msra.mxu0 %v648
    %3489 = vmatpush.bf16.msra.mxu0 %v640
    %3490 = vmatpush.bf16.msra.mxu0 %v632
    %3491 = vmatmul.bf16.gmra.mxu0 %v3287
    %v3492 = vpop.f32.mrf.mxu0
    %v3493 = vadd.f32 %v3480, %v3492
    %v3494 = vpop.f32.mrf.mxu0
    %3495 = vdwg.mxu0
    %v3496 = vadd.f32 %v3278, %v3311
    %v3497 = vadd.f32 %v3279, %v3337
    %v3498 = vadd.f32 %v3280, %v3363
    %v3499 = vadd.f32 %v3281, %v3389
    %v3500 = vadd.f32 %v3282, %v3415
    %v3501 = vadd.f32 %v3283, %v3441
    %v3502 = vadd.f32 %v3284, %v3467
    %v3503 = vadd.f32 %v3285, %v3493
    %v3504 = vxor.u32 %v3496, 2147483648
    %v3505 = vxor.u32 %v3497, 2147483648
    %v3506 = vmul.f32 %v3504, 1.442695
    %v3507 = vpow.pop %v3506
    %v3508 = vmul.f32 %v3505, 1.442695
    %v3509 = vpow.pop %v3508
    %v3510 = vadd.f32 %v3507, 1.0
    %v3511 = vadd.f32 %v3509, 1.0
    %v3512 = vrcp.pop %v3510
    %v3513 = vmul.f32 %v3510, %v3512
    %v3514 = vsub.f32 1.0, %v3513
    %v3515 = vmul.f32 %v3512, %v3514
    %v3516 = vadd.f32 %v3512, %v3515
    %vm3517 = vweird.f32 %v3510
    %vm3518 = vweird.f32 %v3512
    %vm3519 = vmor %vm3517, %vm3518
    %v3520 = vsel %vm3519, %v3512, %v3516
    %v3521 = vand.u32 2147483647, %v3510
    %vm3522 = vcmp.eq.f32.partialorder %v3521, 8.507059e+37
    %v3523 = vand.u32 %v3510, 2147483648
    %v3524 = vor.u32 1.1754944e-38, %v3523
    %v3525 = vsel %vm3522, %v3524, %v3520
    %v3526 = vmul.f32 1.0, %v3525
    %v3527 = vrcp.pop %v3511
    %v3528 = vmul.f32 %v3511, %v3527
    %v3529 = vsub.f32 1.0, %v3528
    %v3530 = vmul.f32 %v3527, %v3529
    %v3531 = vadd.f32 %v3527, %v3530
    %vm3532 = vweird.f32 %v3511
    %vm3533 = vweird.f32 %v3527
    %vm3534 = vmor %vm3532, %vm3533
    %v3535 = vsel %vm3534, %v3527, %v3531
    %v3536 = vand.u32 2147483647, %v3511
    %vm3537 = vcmp.eq.f32.partialorder %v3536, 8.507059e+37
    %v3538 = vand.u32 %v3511, 2147483648
    %v3539 = vor.u32 1.1754944e-38, %v3538
    %v3540 = vsel %vm3537, %v3539, %v3535
    %v3541 = vmul.f32 1.0, %v3540
    %v3542 = vxor.u32 %v3498, 2147483648
    %v3543 = vxor.u32 %v3499, 2147483648
    %v3544 = vmul.f32 %v3542, 1.442695
    %v3545 = vpow.pop %v3544
    %v3546 = vmul.f32 %v3543, 1.442695
    %v3547 = vpow.pop %v3546
    %v3548 = vadd.f32 %v3545, 1.0
    %v3549 = vadd.f32 %v3547, 1.0
    %v3550 = vrcp.pop %v3548
    %v3551 = vmul.f32 %v3548, %v3550
    %v3552 = vsub.f32 1.0, %v3551
    %v3553 = vmul.f32 %v3550, %v3552
    %v3554 = vadd.f32 %v3550, %v3553
    %vm3555 = vweird.f32 %v3548
    %vm3556 = vweird.f32 %v3550
    %vm3557 = vmor %vm3555, %vm3556
    %v3558 = vsel %vm3557, %v3550, %v3554
    %v3559 = vand.u32 2147483647, %v3548
    %vm3560 = vcmp.eq.f32.partialorder %v3559, 8.507059e+37
    %v3561 = vand.u32 %v3548, 2147483648
    %v3562 = vor.u32 1.1754944e-38, %v3561
    %v3563 = vsel %vm3560, %v3562, %v3558
    %v3564 = vmul.f32 1.0, %v3563
    %v3565 = vrcp.pop %v3549
    %v3566 = vmul.f32 %v3549, %v3565
    %v3567 = vsub.f32 1.0, %v3566
    %v3568 = vmul.f32 %v3565, %v3567
    %v3569 = vadd.f32 %v3565, %v3568
    %vm3570 = vweird.f32 %v3549
    %vm3571 = vweird.f32 %v3565
    %vm3572 = vmor %vm3570, %vm3571
    %v3573 = vsel %vm3572, %v3565, %v3569
    %v3574 = vand.u32 2147483647, %v3549
    %vm3575 = vcmp.eq.f32.partialorder %v3574, 8.507059e+37
    %v3576 = vand.u32 %v3549, 2147483648
    %v3577 = vor.u32 1.1754944e-38, %v3576
    %v3578 = vsel %vm3575, %v3577, %v3573
    %v3579 = vmul.f32 1.0, %v3578
    %v3580 = vtanh.pop %v3500
    %v3581 = vtanh.pop %v3501
    %v3582 = vxor.u32 %v3502, 2147483648
    %v3583 = vxor.u32 %v3503, 2147483648
    %v3584 = vmul.f32 %v3582, 1.442695
    %v3585 = vpow.pop %v3584
    %v3586 = vmul.f32 %v3583, 1.442695
    %v3587 = vpow.pop %v3586
    %v3588 = vadd.f32 %v3585, 1.0
    %v3589 = vadd.f32 %v3587, 1.0
    %v3590 = vrcp.pop %v3588
    %v3591 = vmul.f32 %v3588, %v3590
    %v3592 = vsub.f32 1.0, %v3591
    %v3593 = vmul.f32 %v3590, %v3592
    %v3594 = vadd.f32 %v3590, %v3593
    %vm3595 = vweird.f32 %v3588
    %vm3596 = vweird.f32 %v3590
    %vm3597 = vmor %vm3595, %vm3596
    %v3598 = vsel %vm3597, %v3590, %v3594
    %v3599 = vand.u32 2147483647, %v3588
    %vm3600 = vcmp.eq.f32.partialorder %v3599, 8.507059e+37
    %v3601 = vand.u32 %v3588, 2147483648
    %v3602 = vor.u32 1.1754944e-38, %v3601
    %v3603 = vsel %vm3600, %v3602, %v3598
    %v3604 = vmul.f32 1.0, %v3603
    %v3605 = vrcp.pop %v3589
    %v3606 = vmul.f32 %v3589, %v3605
    %v3607 = vsub.f32 1.0, %v3606
    %v3608 = vmul.f32 %v3605, %v3607
    %v3609 = vadd.f32 %v3605, %v3608
    %vm3610 = vweird.f32 %v3589
    %vm3611 = vweird.f32 %v3605
    %vm3612 = vmor %vm3610, %vm3611
    %v3613 = vsel %vm3612, %v3605, %v3609
    %v3614 = vand.u32 2147483647, %v3589
    %vm3615 = vcmp.eq.f32.partialorder %v3614, 8.507059e+37
    %v3616 = vand.u32 %v3589, 2147483648
    %v3617 = vor.u32 1.1754944e-38, %v3616
    %v3618 = vsel %vm3615, %v3617, %v3613
    %v3619 = vmul.f32 1.0, %v3618
    %v3620 = vmul.f32 %v3564, %v3271
    %v3621 = vmul.f32 %v3579, %v3272
    %v3622 = vmul.f32 %v3526, %v3580
    %v3623 = vmul.f32 %v3541, %v3581
    %v3624 = vadd.f32 %v3620, %v3622
    %v3625 = vadd.f32 %v3621, %v3623
    %v3626 = vtanh.pop %v3624
    %v3627 = vtanh.pop %v3625
    %v3628 = vmul.f32 %v3604, %v3626
    %v3629 = vmul.f32 %v3619, %v3627
    %3630 = vst [vmem:[#allocation2] sm:$0xff] %v3628
    %3631 = vst [vmem:[#allocation2 + $0x8] sm:$0xff] %v3629
    %3632 = vst [vmem:[#allocation3] sm:$0xff] %v3624
    %3633 = vst [vmem:[#allocation3 + $0x8] sm:$0xff] %v3625
    // Predicated region
    $region18: #{rnn_forward.1} parent=1 // pred_check
      %p3634 = pneg %p27
    $region19: #{rnn_forward.1} parent=1 // pred_check_branch
      %3636 = sbr.rel (%p3634) target = $region21
    $region20: #{rnn_forward.1} parent=1 // pred_region
      %v3637 = vld [vmem:[#allocation2] sm:$0xff]
      %v3638 = vld [vmem:[#allocation2 + $0x8] sm:$0xff]
      %3639 = vst [vmem:[%s2] sm:$0xff] %v3637
      %3640 = vst [vmem:[%s2 + $0x8] sm:$0xff] %v3638
    $region21: #{rnn_forward.1} parent=1 // pred_fallthru
      _
    // Predicated region
    $region22: #{rnn_forward.1} parent=1 // pred_check
      _
    $region23: #{rnn_forward.1} parent=1 // pred_check_branch
      %3642 = sbr.rel (0) target = $region25
    $region24: #{rnn_forward.1} parent=1 // pred_region
      _
    $region25: #{rnn_forward.1} parent=1 // pred_fallthru
      _
    // Predicated region
    $region26: #{rnn_forward.1} parent=1 // pred_check
      _
    $region27: #{rnn_forward.1} parent=1 // pred_check_branch
      %3644 = sbr.rel (0) target = $region29
    $region28: #{rnn_forward.1} parent=1 // pred_region
      _
    $region29: #{rnn_forward.1} parent=1 // pred_fallthru
      _
    %3645 = vsyncpa [#allocation5], 1

</llo_original>
